<compile_context>
chip_gen: v7x
topology: tpu7x:2x2x1
jax: 0.10.0
libtpu: 0.0.40
codegen_flags: <defaults>
</compile_context>

<pallas_src>
import functools

import jax
import jax.numpy as jnp
from jax.experimental import pallas as pl
from jax.experimental.pallas import tpu as pltpu

# ----------------------------- config ---------------------------------------
VOCAB = 128
MAX_POS = 32
TYPE_VOCAB = 2
HIDDEN = 32
NUM_HEADS = 2
HEAD_DIM = HIDDEN // NUM_HEADS
INTERMEDIATE = 64
NUM_LAYERS = 2
NUM_CLASSES = 2
LN_EPS = 1e-12  # BERT default
LANE = 128      # lane-dense output width


# ----------------------------- in-kernel helpers ----------------------------
def _gelu_tanh(x):
    # TODO(synk): HF BERT uses exact erf-gelu; tanh approximation used here for
    # robust Mosaic lowering (numerically very close).
    c = jnp.sqrt(2.0 / jnp.pi).astype(x.dtype)
    return 0.5 * x * (1.0 + jnp.tanh(c * (x + 0.044715 * x * x * x)))


def _layernorm(x, g, b, eps=LN_EPS):
    # f32 VPU/EUP math (v5e has no bf16 vector path).
    mean = jnp.mean(x, axis=-1, keepdims=True)
    var = jnp.mean(jnp.square(x - mean), axis=-1, keepdims=True)
    return (x - mean) * jax.lax.rsqrt(var + eps) * g + b


def _dot(a, b):
    # bf16 MXU operands, f32 accumulation.
    return jnp.dot(a.astype(jnp.bfloat16), b.astype(jnp.bfloat16),
                   preferred_element_type=jnp.float32)


# ----------------------------- fused kernel ----------------------------------
def bert_fused_kernel(bpg, seq,
                      emb_ref, mask_ref, eg_ref, eb_ref,
                      wq_ref, bq_ref, wk_ref, bk_ref, wv_ref, bv_ref,
                      wo_ref, bo_ref, g1_ref, b1_ref,
                      wi_ref, bi_ref, wout_ref, bout_ref, g2_ref, b2_ref,
                      pw_ref, pb_ref, fw_ref, fb_ref, out_ref):
    # One grid step == `bpg` sequences laid out contiguously as (bpg*seq, H).
    # Everything below stays in VMEM/vregs.
    m = bpg * seq
    h = _layernorm(emb_ref[0], eg_ref[...], eb_ref[...])        # (M, H), f32
    mask = mask_ref[0]                                           # (bpg, 1, S)

    for l in range(NUM_LAYERS):
        # ---- self-attention: per-head GEMMs (no lane slicing/concat) ----
        attn = None
        for hd in range(NUM_HEADS):
            # 1/sqrt(head_dim) is already folded into wq/bq.
            q = _dot(h, wq_ref[l, hd]) + bq_ref[l, hd]           # (M, dH)
            k = _dot(h, wk_ref[l, hd]) + bk_ref[l, hd]
            v = _dot(h, wv_ref[l, hd]) + bv_ref[l, hd]
            q3 = q.reshape(bpg, seq, HEAD_DIM)                   # sublane-tile aligned
            k3 = k.reshape(bpg, seq, HEAD_DIM)
            v3 = v.reshape(bpg, seq, HEAD_DIM)
            s = jnp.einsum('bqd,bkd->bqk',
                           q3.astype(jnp.bfloat16), k3.astype(jnp.bfloat16),
                           preferred_element_type=jnp.float32)   # (bpg, S, S)
            # Scores are O(1); -1e9 key mask flushes to exactly 0 under exp,
            # so the per-row max subtraction is dropped (pure slot relief).
            p = jnp.exp(s + mask)
            p = p * pl.reciprocal(jnp.sum(p, axis=-1, keepdims=True),
                                  approx=True)
            ctx = jnp.einsum('bqk,bkd->bqd',
                             p.astype(jnp.bfloat16), v3.astype(jnp.bfloat16),
                             preferred_element_type=jnp.float32)  # (bpg, S, dH)
            part = _dot(ctx.reshape(m, HEAD_DIM), wo_ref[l, hd])  # (M, H)
            attn = part if attn is None else attn + part

        # ---- attention output bias + residual + LN (fused epilogue) ----
        attn = attn + bo_ref[l]
        h = _layernorm(attn + h, g1_ref[l], b1_ref[l])

        # ---- feed-forward + residual + LN (fused epilogue) ----
        inter = _gelu_tanh(_dot(h, wi_ref[l]) + bi_ref[l])        # (M, I)
        ffn = _dot(inter, wout_ref[l]) + bout_ref[l]              # (M, H)
        h = _layernorm(ffn + h, g2_ref[l], b2_ref[l])

    # ---- pooler (CLS token of each sequence) + classifier ----
    cls_rows = [h[b * seq:b * seq + 1, :] for b in range(bpg)]    # static slices
    cls = cls_rows[0] if bpg == 1 else jnp.concatenate(cls_rows, axis=0)
    pooled = jnp.tanh(_dot(cls, pw_ref[...]) + pb_ref[...])       # (bpg, H)
    logits = _dot(pooled, fw_ref[...]) + fb_ref[...]              # (bpg, 128) lane-dense
    out_ref[0] = logits.astype(out_ref.dtype)


def _rep_spec(shape):
    """Broadcast (grid-invariant) full-array block."""
    ndim = len(shape)
    return pl.BlockSpec(shape, lambda g, _n=ndim: (0,) * _n)


def _num_tensorcores():
    """2 TensorCores on v7x; v5e/v6e have 1 TC per chip."""
    try:
        kind = jax.devices()[0].device_kind.lower()
    except Exception:
        return 1
    return 2 if ("v7" in kind or "7x" in kind) else 1


# ----------------------------- forward pass ----------------------------------
@jax.jit
def bert_classifier_forward(params, input_ids, attention_mask):
    B, S = input_ids.shape
    H, I, C, L = HIDDEN, INTERMEDIATE, NUM_CLASSES, NUM_LAYERS

    # Collapse batch onto one grid step on single-TC chips; keep one sequence
    # per grid step on v7x so both TensorCores get work (megacore).
    n_tc = _num_tensorcores()
    G = n_tc if (n_tc > 1 and B % n_tc == 0) else 1
    BPG = B // G

    # Embedding gather stays in JAX (data-dependent lookup).
    pos_ids = jnp.arange(S, dtype=jnp.int32)
    emb = (jnp.take(params["word_emb"], input_ids, axis=0)
           + params["pos_emb"][pos_ids][None, :, :]
           + params["type_emb"][0][None, None, :]).astype(jnp.float32)
    # TODO(synk): token_type ids fixed to segment 0 (matches reference usage).
    emb = emb.reshape(G, BPG * S, H)

    add_mask = ((1.0 - attention_mask.astype(jnp.float32))
                * jnp.float32(-1e9)).reshape(G, BPG, 1, S)

    # Lane-dense classifier head: pad C -> 128 lanes, slice back afterwards.
    fw_p = jnp.zeros((H, LANE), params["fc_w"].dtype).at[:, :C].set(params["fc_w"])
    fb_p = jnp.zeros((1, LANE), jnp.float32).at[:, :C].set(params["fc_b"])

    kernel = functools.partial(bert_fused_kernel, BPG, S)

    in_specs = [
        pl.BlockSpec((1, BPG * S, H), lambda g: (g, 0, 0)),        # emb
        pl.BlockSpec((1, BPG, 1, S), lambda g: (g, 0, 0, 0)),      # additive mask
        _rep_spec((1, H)), _rep_spec((1, H)),                      # emb LN g/b
        _rep_spec((L, NUM_HEADS, H, HEAD_DIM)),                    # wq (pre-scaled)
        _rep_spec((L, NUM_HEADS, 1, HEAD_DIM)),                    # bq (pre-scaled)
        _rep_spec((L, NUM_HEADS, H, HEAD_DIM)),                    # wk
        _rep_spec((L, NUM_HEADS, 1, HEAD_DIM)),                    # bk
        _rep_spec((L, NUM_HEADS, H, HEAD_DIM)),                    # wv
        _rep_spec((L, NUM_HEADS, 1, HEAD_DIM)),                    # bv
        _rep_spec((L, NUM_HEADS, HEAD_DIM, H)),                    # wo (per-head)
        _rep_spec((L, 1, H)),                                      # bo
        _rep_spec((L, 1, H)), _rep_spec((L, 1, H)),                # ln1 g/b
        _rep_spec((L, H, I)), _rep_spec((L, 1, I)),                # wi, bi
        _rep_spec((L, I, H)), _rep_spec((L, 1, H)),                # wout, bout
        _rep_spec((L, 1, H)), _rep_spec((L, 1, H)),                # ln2 g/b
        _rep_spec((H, H)), _rep_spec((1, H)),                      # pooler w/b
        _rep_spec((H, LANE)), _rep_spec((1, LANE)),                # classifier (padded)
    ]

    out = pl.pallas_call(
        kernel,
        out_shape=jax.ShapeDtypeStruct((G, BPG, LANE), jnp.float32),
        grid=(G,),
        in_specs=in_specs,
        out_specs=pl.BlockSpec((1, BPG, LANE), lambda g: (g, 0, 0)),
        compiler_params=pltpu.CompilerParams(
            dimension_semantics=("parallel",)),
    )(emb, add_mask,
      params["emb_ln_g"], params["emb_ln_b"],
      params["wq"], params["bq"], params["wk"], params["bk"],
      params["wv"], params["bv"], params["wo"], params["bo"],
      params["ln1_g"], params["ln1_b"],
      params["wi"], params["bi"], params["wout"], params["bout"],
      params["ln2_g"], params["ln2_b"],
      params["pooler_w"], params["pooler_b"], fw_p, fb_p)

    return out.reshape(B, LANE)[:, :C]


# ----------------------------- parameters -----------------------------------
def init_params(key):
    std = 0.02

    def normal(k, shape, scale=1.0, dtype=jnp.float32):
        w = std * jax.random.normal(k, shape, dtype=jnp.float32)
        return (scale * w).astype(dtype)

    keys = iter(jax.random.split(key, 32))
    L, H, I, C, NH, DH = NUM_LAYERS, HIDDEN, INTERMEDIATE, NUM_CLASSES, NUM_HEADS, HEAD_DIM
    bf16 = jnp.bfloat16
    q_scale = 1.0 / float(DH) ** 0.5   # folded into Q projection (and its bias)
    return {
        # embeddings (f32, gathered in JAX)
        "word_emb": normal(next(keys), (VOCAB, H)),
        "pos_emb": normal(next(keys), (MAX_POS, H)),
        "type_emb": normal(next(keys), (TYPE_VOCAB, H)),
        "emb_ln_g": jnp.ones((1, H), jnp.float32),
        "emb_ln_b": jnp.zeros((1, H), jnp.float32),
        # encoder layers: per-head Q/K/V and output-projection slabs, bf16 MXU operands
        "wq": normal(next(keys), (L, NH, H, DH), scale=q_scale, dtype=bf16),
        "bq": jnp.zeros((L, NH, 1, DH), jnp.float32),   # (pre-scaled; zero anyway)
        "wk": normal(next(keys), (L, NH, H, DH), dtype=bf16),
        "bk": jnp.zeros((L, NH, 1, DH), jnp.float32),
        "wv": normal(next(keys), (L, NH, H, DH), dtype=bf16),
        "bv": jnp.zeros((L, NH, 1, DH), jnp.float32),
        "wo": normal(next(keys), (L, NH, DH, H), dtype=bf16),
        "bo": jnp.zeros((L, 1, H), jnp.float32),
        "ln1_g": jnp.ones((L, 1, H), jnp.float32),
        "ln1_b": jnp.zeros((L, 1, H), jnp.float32),
        "wi": normal(next(keys), (L, H, I), dtype=bf16),
        "bi": jnp.zeros((L, 1, I), jnp.float32),
        "wout": normal(next(keys), (L, I, H), dtype=bf16),
        "bout": jnp.zeros((L, 1, H), jnp.float32),
        "ln2_g": jnp.ones((L, 1, H), jnp.float32),
        "ln2_b": jnp.zeros((L, 1, H), jnp.float32),
        # pooler + classifier head
        "pooler_w": normal(next(keys), (H, H), dtype=bf16),
        "pooler_b": jnp.zeros((1, H), jnp.float32),
        "fc_w": normal(next(keys), (H, C), dtype=bf16),
        "fc_b": jnp.zeros((1, C), jnp.float32),
    }


# ----------------------------- main ------------------------------------------
if __name__ == "__main__":
    key = jax.random.PRNGKey(0)
    pkey, dkey = jax.random.split(key)

    params = init_params(pkey)

    B, S = 2, 8
    input_ids = jax.random.randint(dkey, (B, S), 0, VOCAB, dtype=jnp.int32)
    attention_mask = jnp.array(
        [[1, 1, 1, 1, 1, 1, 1, 1],
         [1, 1, 1, 1, 1, 0, 0, 0]], dtype=jnp.int32)

    logits = bert_classifier_forward(params, input_ids, attention_mask)
    logits = jax.block_until_ready(logits)

    assert logits.shape == (B, NUM_CLASSES)
    assert bool(jnp.all(jnp.isfinite(logits)))
    print("KERNEL_OK")
</pallas_src>

<mosaic_0001>
module attributes {stable_mosaic.version = 11 : i64} {
  func.func @bert_fused_kernel(%arg0: i32, %arg1: memref<1x16x32xf32, #tpu.memory_space<vmem>>, %arg2: memref<1x2x1x8xf32, #tpu.memory_space<vmem>>, %arg3: memref<1x32xf32, #tpu.memory_space<vmem>>, %arg4: memref<1x32xf32, #tpu.memory_space<vmem>>, %arg5: memref<2x2x32x16xbf16, #tpu.memory_space<vmem>>, %arg6: memref<2x2x1x16xf32, #tpu.memory_space<vmem>>, %arg7: memref<2x2x32x16xbf16, #tpu.memory_space<vmem>>, %arg8: memref<2x2x1x16xf32, #tpu.memory_space<vmem>>, %arg9: memref<2x2x32x16xbf16, #tpu.memory_space<vmem>>, %arg10: memref<2x2x1x16xf32, #tpu.memory_space<vmem>>, %arg11: memref<2x2x16x32xbf16, #tpu.memory_space<vmem>>, %arg12: memref<2x1x32xf32, #tpu.memory_space<vmem>>, %arg13: memref<2x1x32xf32, #tpu.memory_space<vmem>>, %arg14: memref<2x1x32xf32, #tpu.memory_space<vmem>>, %arg15: memref<2x32x64xbf16, #tpu.memory_space<vmem>>, %arg16: memref<2x1x64xf32, #tpu.memory_space<vmem>>, %arg17: memref<2x64x32xbf16, #tpu.memory_space<vmem>>, %arg18: memref<2x1x32xf32, #tpu.memory_space<vmem>>, %arg19: memref<2x1x32xf32, #tpu.memory_space<vmem>>, %arg20: memref<2x1x32xf32, #tpu.memory_space<vmem>>, %arg21: memref<32x32xbf16, #tpu.memory_space<vmem>>, %arg22: memref<1x32xf32, #tpu.memory_space<vmem>>, %arg23: memref<32x128xbf16, #tpu.memory_space<vmem>>, %arg24: memref<1x128xf32, #tpu.memory_space<vmem>>, %arg25: memref<1x2x128xf32, #tpu.memory_space<vmem>>) attributes {dimension_semantics = [#tpu.dimension_semantics<parallel>], iteration_bounds = array<i64: 1>, scalar_prefetch = 0 : i64, scratch_operands = 0 : i64, tpu.core_type = #tpu.core_type<tc>, window_params = [{transform_indices = @transform_0, window_bounds = array<i64: 1, 16, 32>}, {transform_indices = @transform_1, window_bounds = array<i64: 1, 2, 1, 8>}, {pipeline_mode = #tpu.pipeline_mode<synchronous>, transform_indices = @transform_2, window_bounds = array<i64: 1, 32>}, {pipeline_mode = #tpu.pipeline_mode<synchronous>, transform_indices = @transform_3, window_bounds = array<i64: 1, 32>}, {pipeline_mode = #tpu.pipeline_mode<synchronous>, transform_indices = @transform_4, window_bounds = array<i64: 2, 2, 32, 16>}, {pipeline_mode = #tpu.pipeline_mode<synchronous>, transform_indices = @transform_5, window_bounds = array<i64: 2, 2, 1, 16>}, {pipeline_mode = #tpu.pipeline_mode<synchronous>, transform_indices = @transform_6, window_bounds = array<i64: 2, 2, 32, 16>}, {pipeline_mode = #tpu.pipeline_mode<synchronous>, transform_indices = @transform_7, window_bounds = array<i64: 2, 2, 1, 16>}, {pipeline_mode = #tpu.pipeline_mode<synchronous>, transform_indices = @transform_8, window_bounds = array<i64: 2, 2, 32, 16>}, {pipeline_mode = #tpu.pipeline_mode<synchronous>, transform_indices = @transform_9, window_bounds = array<i64: 2, 2, 1, 16>}, {pipeline_mode = #tpu.pipeline_mode<synchronous>, transform_indices = @transform_10, window_bounds = array<i64: 2, 2, 16, 32>}, {pipeline_mode = #tpu.pipeline_mode<synchronous>, transform_indices = @transform_11, window_bounds = array<i64: 2, 1, 32>}, {pipeline_mode = #tpu.pipeline_mode<synchronous>, transform_indices = @transform_12, window_bounds = array<i64: 2, 1, 32>}, {pipeline_mode = #tpu.pipeline_mode<synchronous>, transform_indices = @transform_13, window_bounds = array<i64: 2, 1, 32>}, {pipeline_mode = #tpu.pipeline_mode<synchronous>, transform_indices = @transform_14, window_bounds = array<i64: 2, 32, 64>}, {pipeline_mode = #tpu.pipeline_mode<synchronous>, transform_indices = @transform_15, window_bounds = array<i64: 2, 1, 64>}, {pipeline_mode = #tpu.pipeline_mode<synchronous>, transform_indices = @transform_16, window_bounds = array<i64: 2, 64, 32>}, {pipeline_mode = #tpu.pipeline_mode<synchronous>, transform_indices = @transform_17, window_bounds = array<i64: 2, 1, 32>}, {pipeline_mode = #tpu.pipeline_mode<synchronous>, transform_indices = @transform_18, window_bounds = array<i64: 2, 1, 32>}, {pipeline_mode = #tpu.pipeline_mode<synchronous>, transform_indices = @transform_19, window_bounds = array<i64: 2, 1, 32>}, {pipeline_mode = #tpu.pipeline_mode<synchronous>, transform_indices = @transform_20, window_bounds = array<i64: 32, 32>}, {pipeline_mode = #tpu.pipeline_mode<synchronous>, transform_indices = @transform_21, window_bounds = array<i64: 1, 32>}, {pipeline_mode = #tpu.pipeline_mode<synchronous>, transform_indices = @transform_22, window_bounds = array<i64: 32, 128>}, {pipeline_mode = #tpu.pipeline_mode<synchronous>, transform_indices = @transform_23, window_bounds = array<i64: 1, 128>}, {transform_indices = @transform_24, window_bounds = array<i64: 1, 2, 128>}]} {
    %c0 = arith.constant 0 : index
    %c0_0 = arith.constant 0 : index
    %c0_1 = arith.constant 0 : index
    %0 = vector.load %arg1[%c0, %c0_0, %c0_1] : memref<1x16x32xf32, #tpu.memory_space<vmem>>, vector<1x16x32xf32>
    %1 = vector.shape_cast %0 : vector<1x16x32xf32> to vector<16x32xf32>
    %c0_2 = arith.constant 0 : index
    %c0_3 = arith.constant 0 : index
    %2 = vector.load %arg3[%c0_2, %c0_3] : memref<1x32xf32, #tpu.memory_space<vmem>>, vector<1x32xf32>
    %c0_4 = arith.constant 0 : index
    %c0_5 = arith.constant 0 : index
    %3 = vector.load %arg4[%c0_4, %c0_5] : memref<1x32xf32, #tpu.memory_space<vmem>>, vector<1x32xf32>
    %cst = arith.constant dense<0.000000e+00> : vector<16xf32>
    %4 = vector.multi_reduction <add>, %1, %cst [1] : vector<16x32xf32> to vector<16xf32>
    %5 = vector.shape_cast %4 : vector<16xf32> to vector<16x1xf32>
    %cst_6 = arith.constant 3.200000e+01 : f32
    %6 = vector.broadcast %cst_6 : f32 to vector<16x1xf32>
    %7 = arith.divf %5, %6 : vector<16x1xf32>
    %8 = vector.broadcast %7 : vector<16x1xf32> to vector<16x32xf32>
    %9 = arith.subf %1, %8 : vector<16x32xf32>
    %10 = arith.mulf %9, %9 : vector<16x32xf32>
    %cst_7 = arith.constant dense<0.000000e+00> : vector<16xf32>
    %11 = vector.multi_reduction <add>, %10, %cst_7 [1] : vector<16x32xf32> to vector<16xf32>
    %12 = vector.shape_cast %11 : vector<16xf32> to vector<16x1xf32>
    %cst_8 = arith.constant 3.200000e+01 : f32
    %13 = vector.broadcast %cst_8 : f32 to vector<16x1xf32>
    %14 = arith.divf %12, %13 : vector<16x1xf32>
    %15 = vector.broadcast %7 : vector<16x1xf32> to vector<16x32xf32>
    %16 = arith.subf %1, %15 : vector<16x32xf32>
    %cst_9 = arith.constant 9.99999996E-13 : f32
    %17 = vector.broadcast %cst_9 : f32 to vector<16x1xf32>
    %18 = arith.addf %14, %17 : vector<16x1xf32>
    %19 = math.rsqrt %18 : vector<16x1xf32>
    %20 = vector.broadcast %19 : vector<16x1xf32> to vector<16x32xf32>
    %21 = arith.mulf %16, %20 : vector<16x32xf32>
    %22 = vector.broadcast %2 : vector<1x32xf32> to vector<16x32xf32>
    %23 = arith.mulf %21, %22 : vector<16x32xf32>
    %24 = vector.broadcast %3 : vector<1x32xf32> to vector<16x32xf32>
    %25 = arith.addf %23, %24 : vector<16x32xf32>
    %c0_10 = arith.constant 0 : index
    %c0_11 = arith.constant 0 : index
    %c0_12 = arith.constant 0 : index
    %c0_13 = arith.constant 0 : index
    %26 = vector.load %arg2[%c0_10, %c0_11, %c0_12, %c0_13] : memref<1x2x1x8xf32, #tpu.memory_space<vmem>>, vector<1x2x1x8xf32>
    %27 = vector.shape_cast %26 : vector<1x2x1x8xf32> to vector<2x1x8xf32>
    %c0_14 = arith.constant 0 : index
    %c0_15 = arith.constant 0 : index
    %c0_16 = arith.constant 0 : index
    %c0_17 = arith.constant 0 : index
    %28 = vector.load %arg5[%c0_14, %c0_15, %c0_16, %c0_17] : memref<2x2x32x16xbf16, #tpu.memory_space<vmem>>, vector<1x1x32x16xbf16>
    %29 = vector.shape_cast %28 : vector<1x1x32x16xbf16> to vector<32x16xbf16>
    %30 = arith.truncf %25 : vector<16x32xf32> to vector<16x32xbf16>
    %cst_18 = arith.constant dense<0.000000e+00> : vector<16x16xf32>
    %31 = tpu.matmul %30, %29, %cst_18 {dimension_numbers = #tpu.dot_dimension_numbers<[1], [0], [0], [1], [0, 0, 1, 1], [], []>} : vector<16x32xbf16>, vector<32x16xbf16>, vector<16x16xf32> -> vector<16x16xf32>
    %c0_19 = arith.constant 0 : index
    %c0_20 = arith.constant 0 : index
    %c0_21 = arith.constant 0 : index
    %c0_22 = arith.constant 0 : index
    %32 = vector.load %arg6[%c0_19, %c0_20, %c0_21, %c0_22] : memref<2x2x1x16xf32, #tpu.memory_space<vmem>>, vector<1x1x1x16xf32>
    %33 = vector.shape_cast %32 : vector<1x1x1x16xf32> to vector<1x16xf32>
    %34 = vector.broadcast %33 : vector<1x16xf32> to vector<16x16xf32>
    %35 = arith.addf %31, %34 : vector<16x16xf32>
    %c0_23 = arith.constant 0 : index
    %c0_24 = arith.constant 0 : index
    %c0_25 = arith.constant 0 : index
    %c0_26 = arith.constant 0 : index
    %36 = vector.load %arg7[%c0_23, %c0_24, %c0_25, %c0_26] : memref<2x2x32x16xbf16, #tpu.memory_space<vmem>>, vector<1x1x32x16xbf16>
    %37 = vector.shape_cast %36 : vector<1x1x32x16xbf16> to vector<32x16xbf16>
    %38 = arith.truncf %25 : vector<16x32xf32> to vector<16x32xbf16>
    %cst_27 = arith.constant dense<0.000000e+00> : vector<16x16xf32>
    %39 = tpu.matmul %38, %37, %cst_27 {dimension_numbers = #tpu.dot_dimension_numbers<[1], [0], [0], [1], [0, 0, 1, 1], [], []>} : vector<16x32xbf16>, vector<32x16xbf16>, vector<16x16xf32> -> vector<16x16xf32>
    %c0_28 = arith.constant 0 : index
    %c0_29 = arith.constant 0 : index
    %c0_30 = arith.constant 0 : index
    %c0_31 = arith.constant 0 : index
    %40 = vector.load %arg8[%c0_28, %c0_29, %c0_30, %c0_31] : memref<2x2x1x16xf32, #tpu.memory_space<vmem>>, vector<1x1x1x16xf32>
    %41 = vector.shape_cast %40 : vector<1x1x1x16xf32> to vector<1x16xf32>
    %42 = vector.broadcast %41 : vector<1x16xf32> to vector<16x16xf32>
    %43 = arith.addf %39, %42 : vector<16x16xf32>
    %c0_32 = arith.constant 0 : index
    %c0_33 = arith.constant 0 : index
    %c0_34 = arith.constant 0 : index
    %c0_35 = arith.constant 0 : index
    %44 = vector.load %arg9[%c0_32, %c0_33, %c0_34, %c0_35] : memref<2x2x32x16xbf16, #tpu.memory_space<vmem>>, vector<1x1x32x16xbf16>
    %45 = vector.shape_cast %44 : vector<1x1x32x16xbf16> to vector<32x16xbf16>
    %46 = arith.truncf %25 : vector<16x32xf32> to vector<16x32xbf16>
    %cst_36 = arith.constant dense<0.000000e+00> : vector<16x16xf32>
    %47 = tpu.matmul %46, %45, %cst_36 {dimension_numbers = #tpu.dot_dimension_numbers<[1], [0], [0], [1], [0, 0, 1, 1], [], []>} : vector<16x32xbf16>, vector<32x16xbf16>, vector<16x16xf32> -> vector<16x16xf32>
    %c0_37 = arith.constant 0 : index
    %c0_38 = arith.constant 0 : index
    %c0_39 = arith.constant 0 : index
    %c0_40 = arith.constant 0 : index
    %48 = vector.load %arg10[%c0_37, %c0_38, %c0_39, %c0_40] : memref<2x2x1x16xf32, #tpu.memory_space<vmem>>, vector<1x1x1x16xf32>
    %49 = vector.shape_cast %48 : vector<1x1x1x16xf32> to vector<1x16xf32>
    %50 = vector.broadcast %49 : vector<1x16xf32> to vector<16x16xf32>
    %51 = arith.addf %47, %50 : vector<16x16xf32>
    %52 = vector.shape_cast %35 : vector<16x16xf32> to vector<2x8x16xf32>
    %53 = vector.shape_cast %43 : vector<16x16xf32> to vector<2x8x16xf32>
    %54 = vector.shape_cast %51 : vector<16x16xf32> to vector<2x8x16xf32>
    %55 = arith.truncf %52 : vector<2x8x16xf32> to vector<2x8x16xbf16>
    %56 = arith.truncf %53 : vector<2x8x16xf32> to vector<2x8x16xbf16>
    "tpu.trace_start"() <{level = 10 : i32, message = "bqd,bkd->bqk"}> : () -> ()
    %cst_41 = arith.constant dense<0.000000e+00> : vector<2x8x8xf32>
    %57 = tpu.matmul %55, %56, %cst_41 {dimension_numbers = #tpu.dot_dimension_numbers<[2], [2], [1], [1], [0, 0, 0, 1, 1, 1], [0], [0]>} : vector<2x8x16xbf16>, vector<2x8x16xbf16>, vector<2x8x8xf32> -> vector<2x8x8xf32>
    "tpu.trace_stop"() : () -> ()
    %58 = vector.broadcast %27 : vector<2x1x8xf32> to vector<2x8x8xf32>
    %59 = arith.addf %57, %58 : vector<2x8x8xf32>
    %60 = math.exp %59 : vector<2x8x8xf32>
    %cst_42 = arith.constant dense<0.000000e+00> : vector<2x8xf32>
    %61 = vector.multi_reduction <add>, %60, %cst_42 [2] : vector<2x8x8xf32> to vector<2x8xf32>
    %62 = vector.shape_cast %61 : vector<2x8xf32> to vector<2x8x1xf32>
    %63 = tpu.reciprocal %62 {approx = true} : vector<2x8x1xf32> -> vector<2x8x1xf32>
    %64 = vector.broadcast %63 : vector<2x8x1xf32> to vector<2x8x8xf32>
    %65 = arith.mulf %60, %64 : vector<2x8x8xf32>
    %66 = arith.truncf %65 : vector<2x8x8xf32> to vector<2x8x8xbf16>
    %67 = arith.truncf %54 : vector<2x8x16xf32> to vector<2x8x16xbf16>
    "tpu.trace_start"() <{level = 10 : i32, message = "bqk,bkd->bqd"}> : () -> ()
    %cst_43 = arith.constant dense<0.000000e+00> : vector<2x8x16xf32>
    %68 = tpu.matmul %66, %67, %cst_43 {dimension_numbers = #tpu.dot_dimension_numbers<[2], [1], [1], [2], [0, 0, 0, 1, 1, 2], [0], [0]>} : vector<2x8x8xbf16>, vector<2x8x16xbf16>, vector<2x8x16xf32> -> vector<2x8x16xf32>
    "tpu.trace_stop"() : () -> ()
    %69 = vector.shape_cast %68 : vector<2x8x16xf32> to vector<16x16xf32>
    %c0_44 = arith.constant 0 : index
    %c0_45 = arith.constant 0 : index
    %c0_46 = arith.constant 0 : index
    %c0_47 = arith.constant 0 : index
    %70 = vector.load %arg11[%c0_44, %c0_45, %c0_46, %c0_47] : memref<2x2x16x32xbf16, #tpu.memory_space<vmem>>, vector<1x1x16x32xbf16>
    %71 = vector.shape_cast %70 : vector<1x1x16x32xbf16> to vector<16x32xbf16>
    %72 = arith.truncf %69 : vector<16x16xf32> to vector<16x16xbf16>
    %cst_48 = arith.constant dense<0.000000e+00> : vector<16x32xf32>
    %73 = tpu.matmul %72, %71, %cst_48 {dimension_numbers = #tpu.dot_dimension_numbers<[1], [0], [0], [1], [0, 0, 1, 1], [], []>} : vector<16x16xbf16>, vector<16x32xbf16>, vector<16x32xf32> -> vector<16x32xf32>
    %c0_49 = arith.constant 0 : index
    %c1 = arith.constant 1 : index
    %c0_50 = arith.constant 0 : index
    %c0_51 = arith.constant 0 : index
    %74 = vector.load %arg5[%c0_49, %c1, %c0_50, %c0_51] : memref<2x2x32x16xbf16, #tpu.memory_space<vmem>>, vector<1x1x32x16xbf16>
    %75 = vector.shape_cast %74 : vector<1x1x32x16xbf16> to vector<32x16xbf16>
    %76 = arith.truncf %25 : vector<16x32xf32> to vector<16x32xbf16>
    %cst_52 = arith.constant dense<0.000000e+00> : vector<16x16xf32>
    %77 = tpu.matmul %76, %75, %cst_52 {dimension_numbers = #tpu.dot_dimension_numbers<[1], [0], [0], [1], [0, 0, 1, 1], [], []>} : vector<16x32xbf16>, vector<32x16xbf16>, vector<16x16xf32> -> vector<16x16xf32>
    %c0_53 = arith.constant 0 : index
    %c1_54 = arith.constant 1 : index
    %c0_55 = arith.constant 0 : index
    %c0_56 = arith.constant 0 : index
    %78 = vector.load %arg6[%c0_53, %c1_54, %c0_55, %c0_56] : memref<2x2x1x16xf32, #tpu.memory_space<vmem>>, vector<1x1x1x16xf32>
    %79 = vector.shape_cast %78 : vector<1x1x1x16xf32> to vector<1x16xf32>
    %80 = vector.broadcast %79 : vector<1x16xf32> to vector<16x16xf32>
    %81 = arith.addf %77, %80 : vector<16x16xf32>
    %c0_57 = arith.constant 0 : index
    %c1_58 = arith.constant 1 : index
    %c0_59 = arith.constant 0 : index
    %c0_60 = arith.constant 0 : index
    %82 = vector.load %arg7[%c0_57, %c1_58, %c0_59, %c0_60] : memref<2x2x32x16xbf16, #tpu.memory_space<vmem>>, vector<1x1x32x16xbf16>
    %83 = vector.shape_cast %82 : vector<1x1x32x16xbf16> to vector<32x16xbf16>
    %84 = arith.truncf %25 : vector<16x32xf32> to vector<16x32xbf16>
    %cst_61 = arith.constant dense<0.000000e+00> : vector<16x16xf32>
    %85 = tpu.matmul %84, %83, %cst_61 {dimension_numbers = #tpu.dot_dimension_numbers<[1], [0], [0], [1], [0, 0, 1, 1], [], []>} : vector<16x32xbf16>, vector<32x16xbf16>, vector<16x16xf32> -> vector<16x16xf32>
    %c0_62 = arith.constant 0 : index
    %c1_63 = arith.constant 1 : index
    %c0_64 = arith.constant 0 : index
    %c0_65 = arith.constant 0 : index
    %86 = vector.load %arg8[%c0_62, %c1_63, %c0_64, %c0_65] : memref<2x2x1x16xf32, #tpu.memory_space<vmem>>, vector<1x1x1x16xf32>
    %87 = vector.shape_cast %86 : vector<1x1x1x16xf32> to vector<1x16xf32>
    %88 = vector.broadcast %87 : vector<1x16xf32> to vector<16x16xf32>
    %89 = arith.addf %85, %88 : vector<16x16xf32>
    %c0_66 = arith.constant 0 : index
    %c1_67 = arith.constant 1 : index
    %c0_68 = arith.constant 0 : index
    %c0_69 = arith.constant 0 : index
    %90 = vector.load %arg9[%c0_66, %c1_67, %c0_68, %c0_69] : memref<2x2x32x16xbf16, #tpu.memory_space<vmem>>, vector<1x1x32x16xbf16>
    %91 = vector.shape_cast %90 : vector<1x1x32x16xbf16> to vector<32x16xbf16>
    %92 = arith.truncf %25 : vector<16x32xf32> to vector<16x32xbf16>
    %cst_70 = arith.constant dense<0.000000e+00> : vector<16x16xf32>
    %93 = tpu.matmul %92, %91, %cst_70 {dimension_numbers = #tpu.dot_dimension_numbers<[1], [0], [0], [1], [0, 0, 1, 1], [], []>} : vector<16x32xbf16>, vector<32x16xbf16>, vector<16x16xf32> -> vector<16x16xf32>
    %c0_71 = arith.constant 0 : index
    %c1_72 = arith.constant 1 : index
    %c0_73 = arith.constant 0 : index
    %c0_74 = arith.constant 0 : index
    %94 = vector.load %arg10[%c0_71, %c1_72, %c0_73, %c0_74] : memref<2x2x1x16xf32, #tpu.memory_space<vmem>>, vector<1x1x1x16xf32>
    %95 = vector.shape_cast %94 : vector<1x1x1x16xf32> to vector<1x16xf32>
    %96 = vector.broadcast %95 : vector<1x16xf32> to vector<16x16xf32>
    %97 = arith.addf %93, %96 : vector<16x16xf32>
    %98 = vector.shape_cast %81 : vector<16x16xf32> to vector<2x8x16xf32>
    %99 = vector.shape_cast %89 : vector<16x16xf32> to vector<2x8x16xf32>
    %100 = vector.shape_cast %97 : vector<16x16xf32> to vector<2x8x16xf32>
    %101 = arith.truncf %98 : vector<2x8x16xf32> to vector<2x8x16xbf16>
    %102 = arith.truncf %99 : vector<2x8x16xf32> to vector<2x8x16xbf16>
    "tpu.trace_start"() <{level = 10 : i32, message = "bqd,bkd->bqk"}> : () -> ()
    %cst_75 = arith.constant dense<0.000000e+00> : vector<2x8x8xf32>
    %103 = tpu.matmul %101, %102, %cst_75 {dimension_numbers = #tpu.dot_dimension_numbers<[2], [2], [1], [1], [0, 0, 0, 1, 1, 1], [0], [0]>} : vector<2x8x16xbf16>, vector<2x8x16xbf16>, vector<2x8x8xf32> -> vector<2x8x8xf32>
    "tpu.trace_stop"() : () -> ()
    %104 = vector.broadcast %27 : vector<2x1x8xf32> to vector<2x8x8xf32>
    %105 = arith.addf %103, %104 : vector<2x8x8xf32>
    %106 = math.exp %105 : vector<2x8x8xf32>
    %cst_76 = arith.constant dense<0.000000e+00> : vector<2x8xf32>
    %107 = vector.multi_reduction <add>, %106, %cst_76 [2] : vector<2x8x8xf32> to vector<2x8xf32>
    %108 = vector.shape_cast %107 : vector<2x8xf32> to vector<2x8x1xf32>
    %109 = tpu.reciprocal %108 {approx = true} : vector<2x8x1xf32> -> vector<2x8x1xf32>
    %110 = vector.broadcast %109 : vector<2x8x1xf32> to vector<2x8x8xf32>
    %111 = arith.mulf %106, %110 : vector<2x8x8xf32>
    %112 = arith.truncf %111 : vector<2x8x8xf32> to vector<2x8x8xbf16>
    %113 = arith.truncf %100 : vector<2x8x16xf32> to vector<2x8x16xbf16>
    "tpu.trace_start"() <{level = 10 : i32, message = "bqk,bkd->bqd"}> : () -> ()
    %cst_77 = arith.constant dense<0.000000e+00> : vector<2x8x16xf32>
    %114 = tpu.matmul %112, %113, %cst_77 {dimension_numbers = #tpu.dot_dimension_numbers<[2], [1], [1], [2], [0, 0, 0, 1, 1, 2], [0], [0]>} : vector<2x8x8xbf16>, vector<2x8x16xbf16>, vector<2x8x16xf32> -> vector<2x8x16xf32>
    "tpu.trace_stop"() : () -> ()
    %115 = vector.shape_cast %114 : vector<2x8x16xf32> to vector<16x16xf32>
    %c0_78 = arith.constant 0 : index
    %c1_79 = arith.constant 1 : index
    %c0_80 = arith.constant 0 : index
    %c0_81 = arith.constant 0 : index
    %116 = vector.load %arg11[%c0_78, %c1_79, %c0_80, %c0_81] : memref<2x2x16x32xbf16, #tpu.memory_space<vmem>>, vector<1x1x16x32xbf16>
    %117 = vector.shape_cast %116 : vector<1x1x16x32xbf16> to vector<16x32xbf16>
    %118 = arith.truncf %115 : vector<16x16xf32> to vector<16x16xbf16>
    %cst_82 = arith.constant dense<0.000000e+00> : vector<16x32xf32>
    %119 = tpu.matmul %118, %117, %cst_82 {dimension_numbers = #tpu.dot_dimension_numbers<[1], [0], [0], [1], [0, 0, 1, 1], [], []>} : vector<16x16xbf16>, vector<16x32xbf16>, vector<16x32xf32> -> vector<16x32xf32>
    %120 = arith.addf %73, %119 : vector<16x32xf32>
    %c0_83 = arith.constant 0 : index
    %c0_84 = arith.constant 0 : index
    %c0_85 = arith.constant 0 : index
    %121 = vector.load %arg12[%c0_83, %c0_84, %c0_85] : memref<2x1x32xf32, #tpu.memory_space<vmem>>, vector<1x1x32xf32>
    %122 = vector.shape_cast %121 : vector<1x1x32xf32> to vector<1x32xf32>
    %123 = vector.broadcast %122 : vector<1x32xf32> to vector<16x32xf32>
    %124 = arith.addf %120, %123 : vector<16x32xf32>
    %125 = arith.addf %124, %25 : vector<16x32xf32>
    %c0_86 = arith.constant 0 : index
    %c0_87 = arith.constant 0 : index
    %c0_88 = arith.constant 0 : index
    %126 = vector.load %arg13[%c0_86, %c0_87, %c0_88] : memref<2x1x32xf32, #tpu.memory_space<vmem>>, vector<1x1x32xf32>
    %127 = vector.shape_cast %126 : vector<1x1x32xf32> to vector<1x32xf32>
    %c0_89 = arith.constant 0 : index
    %c0_90 = arith.constant 0 : index
    %c0_91 = arith.constant 0 : index
    %128 = vector.load %arg14[%c0_89, %c0_90, %c0_91] : memref<2x1x32xf32, #tpu.memory_space<vmem>>, vector<1x1x32xf32>
    %129 = vector.shape_cast %128 : vector<1x1x32xf32> to vector<1x32xf32>
    %cst_92 = arith.constant dense<0.000000e+00> : vector<16xf32>
    %130 = vector.multi_reduction <add>, %125, %cst_92 [1] : vector<16x32xf32> to vector<16xf32>
    %131 = vector.shape_cast %130 : vector<16xf32> to vector<16x1xf32>
    %cst_93 = arith.constant 3.200000e+01 : f32
    %132 = vector.broadcast %cst_93 : f32 to vector<16x1xf32>
    %133 = arith.divf %131, %132 : vector<16x1xf32>
    %134 = vector.broadcast %133 : vector<16x1xf32> to vector<16x32xf32>
    %135 = arith.subf %125, %134 : vector<16x32xf32>
    %136 = arith.mulf %135, %135 : vector<16x32xf32>
    %cst_94 = arith.constant dense<0.000000e+00> : vector<16xf32>
    %137 = vector.multi_reduction <add>, %136, %cst_94 [1] : vector<16x32xf32> to vector<16xf32>
    %138 = vector.shape_cast %137 : vector<16xf32> to vector<16x1xf32>
    %cst_95 = arith.constant 3.200000e+01 : f32
    %139 = vector.broadcast %cst_95 : f32 to vector<16x1xf32>
    %140 = arith.divf %138, %139 : vector<16x1xf32>
    %141 = vector.broadcast %133 : vector<16x1xf32> to vector<16x32xf32>
    %142 = arith.subf %125, %141 : vector<16x32xf32>
    %cst_96 = arith.constant 9.99999996E-13 : f32
    %143 = vector.broadcast %cst_96 : f32 to vector<16x1xf32>
    %144 = arith.addf %140, %143 : vector<16x1xf32>
    %145 = math.rsqrt %144 : vector<16x1xf32>
    %146 = vector.broadcast %145 : vector<16x1xf32> to vector<16x32xf32>
    %147 = arith.mulf %142, %146 : vector<16x32xf32>
    %148 = vector.broadcast %127 : vector<1x32xf32> to vector<16x32xf32>
    %149 = arith.mulf %147, %148 : vector<16x32xf32>
    %150 = vector.broadcast %129 : vector<1x32xf32> to vector<16x32xf32>
    %151 = arith.addf %149, %150 : vector<16x32xf32>
    %c0_97 = arith.constant 0 : index
    %c0_98 = arith.constant 0 : index
    %c0_99 = arith.constant 0 : index
    %152 = vector.load %arg15[%c0_97, %c0_98, %c0_99] : memref<2x32x64xbf16, #tpu.memory_space<vmem>>, vector<1x32x64xbf16>
    %153 = vector.shape_cast %152 : vector<1x32x64xbf16> to vector<32x64xbf16>
    %154 = arith.truncf %151 : vector<16x32xf32> to vector<16x32xbf16>
    %cst_100 = arith.constant dense<0.000000e+00> : vector<16x64xf32>
    %155 = tpu.matmul %154, %153, %cst_100 {dimension_numbers = #tpu.dot_dimension_numbers<[1], [0], [0], [1], [0, 0, 1, 1], [], []>} : vector<16x32xbf16>, vector<32x64xbf16>, vector<16x64xf32> -> vector<16x64xf32>
    %c0_101 = arith.constant 0 : index
    %c0_102 = arith.constant 0 : index
    %c0_103 = arith.constant 0 : index
    %156 = vector.load %arg16[%c0_101, %c0_102, %c0_103] : memref<2x1x64xf32, #tpu.memory_space<vmem>>, vector<1x1x64xf32>
    %157 = vector.shape_cast %156 : vector<1x1x64xf32> to vector<1x64xf32>
    %158 = vector.broadcast %157 : vector<1x64xf32> to vector<16x64xf32>
    %159 = arith.addf %155, %158 : vector<16x64xf32>
    %cst_104 = arith.constant 0.636619746 : f32
    %160 = math.sqrt %cst_104 : f32
    %cst_105 = arith.constant 5.000000e-01 : f32
    %161 = vector.broadcast %cst_105 : f32 to vector<16x64xf32>
    %162 = arith.mulf %161, %159 : vector<16x64xf32>
    %cst_106 = arith.constant 4.471500e-02 : f32
    %163 = vector.broadcast %cst_106 : f32 to vector<16x64xf32>
    %164 = arith.mulf %163, %159 : vector<16x64xf32>
    %165 = arith.mulf %164, %159 : vector<16x64xf32>
    %166 = arith.mulf %165, %159 : vector<16x64xf32>
    %167 = arith.addf %159, %166 : vector<16x64xf32>
    %168 = vector.broadcast %160 : f32 to vector<16x64xf32>
    %169 = arith.mulf %168, %167 : vector<16x64xf32>
    %170 = math.tanh %169 : vector<16x64xf32>
    %cst_107 = arith.constant 1.000000e+00 : f32
    %171 = vector.broadcast %cst_107 : f32 to vector<16x64xf32>
    %172 = arith.addf %171, %170 : vector<16x64xf32>
    %173 = arith.mulf %162, %172 : vector<16x64xf32>
    %c0_108 = arith.constant 0 : index
    %c0_109 = arith.constant 0 : index
    %c0_110 = arith.constant 0 : index
    %174 = vector.load %arg17[%c0_108, %c0_109, %c0_110] : memref<2x64x32xbf16, #tpu.memory_space<vmem>>, vector<1x64x32xbf16>
    %175 = vector.shape_cast %174 : vector<1x64x32xbf16> to vector<64x32xbf16>
    %176 = arith.truncf %173 : vector<16x64xf32> to vector<16x64xbf16>
    %cst_111 = arith.constant dense<0.000000e+00> : vector<16x32xf32>
    %177 = tpu.matmul %176, %175, %cst_111 {dimension_numbers = #tpu.dot_dimension_numbers<[1], [0], [0], [1], [0, 0, 1, 1], [], []>} : vector<16x64xbf16>, vector<64x32xbf16>, vector<16x32xf32> -> vector<16x32xf32>
    %c0_112 = arith.constant 0 : index
    %c0_113 = arith.constant 0 : index
    %c0_114 = arith.constant 0 : index
    %178 = vector.load %arg18[%c0_112, %c0_113, %c0_114] : memref<2x1x32xf32, #tpu.memory_space<vmem>>, vector<1x1x32xf32>
    %179 = vector.shape_cast %178 : vector<1x1x32xf32> to vector<1x32xf32>
    %180 = vector.broadcast %179 : vector<1x32xf32> to vector<16x32xf32>
    %181 = arith.addf %177, %180 : vector<16x32xf32>
    %182 = arith.addf %181, %151 : vector<16x32xf32>
    %c0_115 = arith.constant 0 : index
    %c0_116 = arith.constant 0 : index
    %c0_117 = arith.constant 0 : index
    %183 = vector.load %arg19[%c0_115, %c0_116, %c0_117] : memref<2x1x32xf32, #tpu.memory_space<vmem>>, vector<1x1x32xf32>
    %184 = vector.shape_cast %183 : vector<1x1x32xf32> to vector<1x32xf32>
    %c0_118 = arith.constant 0 : index
    %c0_119 = arith.constant 0 : index
    %c0_120 = arith.constant 0 : index
    %185 = vector.load %arg20[%c0_118, %c0_119, %c0_120] : memref<2x1x32xf32, #tpu.memory_space<vmem>>, vector<1x1x32xf32>
    %186 = vector.shape_cast %185 : vector<1x1x32xf32> to vector<1x32xf32>
    %cst_121 = arith.constant dense<0.000000e+00> : vector<16xf32>
    %187 = vector.multi_reduction <add>, %182, %cst_121 [1] : vector<16x32xf32> to vector<16xf32>
    %188 = vector.shape_cast %187 : vector<16xf32> to vector<16x1xf32>
    %cst_122 = arith.constant 3.200000e+01 : f32
    %189 = vector.broadcast %cst_122 : f32 to vector<16x1xf32>
    %190 = arith.divf %188, %189 : vector<16x1xf32>
    %191 = vector.broadcast %190 : vector<16x1xf32> to vector<16x32xf32>
    %192 = arith.subf %182, %191 : vector<16x32xf32>
    %193 = arith.mulf %192, %192 : vector<16x32xf32>
    %cst_123 = arith.constant dense<0.000000e+00> : vector<16xf32>
    %194 = vector.multi_reduction <add>, %193, %cst_123 [1] : vector<16x32xf32> to vector<16xf32>
    %195 = vector.shape_cast %194 : vector<16xf32> to vector<16x1xf32>
    %cst_124 = arith.constant 3.200000e+01 : f32
    %196 = vector.broadcast %cst_124 : f32 to vector<16x1xf32>
    %197 = arith.divf %195, %196 : vector<16x1xf32>
    %198 = vector.broadcast %190 : vector<16x1xf32> to vector<16x32xf32>
    %199 = arith.subf %182, %198 : vector<16x32xf32>
    %cst_125 = arith.constant 9.99999996E-13 : f32
    %200 = vector.broadcast %cst_125 : f32 to vector<16x1xf32>
    %201 = arith.addf %197, %200 : vector<16x1xf32>
    %202 = math.rsqrt %201 : vector<16x1xf32>
    %203 = vector.broadcast %202 : vector<16x1xf32> to vector<16x32xf32>
    %204 = arith.mulf %199, %203 : vector<16x32xf32>
    %205 = vector.broadcast %184 : vector<1x32xf32> to vector<16x32xf32>
    %206 = arith.mulf %204, %205 : vector<16x32xf32>
    %207 = vector.broadcast %186 : vector<1x32xf32> to vector<16x32xf32>
    %208 = arith.addf %206, %207 : vector<16x32xf32>
    %c1_126 = arith.constant 1 : index
    %c0_127 = arith.constant 0 : index
    %c0_128 = arith.constant 0 : index
    %c0_129 = arith.constant 0 : index
    %209 = vector.load %arg5[%c1_126, %c0_127, %c0_128, %c0_129] : memref<2x2x32x16xbf16, #tpu.memory_space<vmem>>, vector<1x1x32x16xbf16>
    %210 = vector.shape_cast %209 : vector<1x1x32x16xbf16> to vector<32x16xbf16>
    %211 = arith.truncf %208 : vector<16x32xf32> to vector<16x32xbf16>
    %cst_130 = arith.constant dense<0.000000e+00> : vector<16x16xf32>
    %212 = tpu.matmul %211, %210, %cst_130 {dimension_numbers = #tpu.dot_dimension_numbers<[1], [0], [0], [1], [0, 0, 1, 1], [], []>} : vector<16x32xbf16>, vector<32x16xbf16>, vector<16x16xf32> -> vector<16x16xf32>
    %c1_131 = arith.constant 1 : index
    %c0_132 = arith.constant 0 : index
    %c0_133 = arith.constant 0 : index
    %c0_134 = arith.constant 0 : index
    %213 = vector.load %arg6[%c1_131, %c0_132, %c0_133, %c0_134] : memref<2x2x1x16xf32, #tpu.memory_space<vmem>>, vector<1x1x1x16xf32>
    %214 = vector.shape_cast %213 : vector<1x1x1x16xf32> to vector<1x16xf32>
    %215 = vector.broadcast %214 : vector<1x16xf32> to vector<16x16xf32>
    %216 = arith.addf %212, %215 : vector<16x16xf32>
    %c1_135 = arith.constant 1 : index
    %c0_136 = arith.constant 0 : index
    %c0_137 = arith.constant 0 : index
    %c0_138 = arith.constant 0 : index
    %217 = vector.load %arg7[%c1_135, %c0_136, %c0_137, %c0_138] : memref<2x2x32x16xbf16, #tpu.memory_space<vmem>>, vector<1x1x32x16xbf16>
    %218 = vector.shape_cast %217 : vector<1x1x32x16xbf16> to vector<32x16xbf16>
    %219 = arith.truncf %208 : vector<16x32xf32> to vector<16x32xbf16>
    %cst_139 = arith.constant dense<0.000000e+00> : vector<16x16xf32>
    %220 = tpu.matmul %219, %218, %cst_139 {dimension_numbers = #tpu.dot_dimension_numbers<[1], [0], [0], [1], [0, 0, 1, 1], [], []>} : vector<16x32xbf16>, vector<32x16xbf16>, vector<16x16xf32> -> vector<16x16xf32>
    %c1_140 = arith.constant 1 : index
    %c0_141 = arith.constant 0 : index
    %c0_142 = arith.constant 0 : index
    %c0_143 = arith.constant 0 : index
    %221 = vector.load %arg8[%c1_140, %c0_141, %c0_142, %c0_143] : memref<2x2x1x16xf32, #tpu.memory_space<vmem>>, vector<1x1x1x16xf32>
    %222 = vector.shape_cast %221 : vector<1x1x1x16xf32> to vector<1x16xf32>
    %223 = vector.broadcast %222 : vector<1x16xf32> to vector<16x16xf32>
    %224 = arith.addf %220, %223 : vector<16x16xf32>
    %c1_144 = arith.constant 1 : index
    %c0_145 = arith.constant 0 : index
    %c0_146 = arith.constant 0 : index
    %c0_147 = arith.constant 0 : index
    %225 = vector.load %arg9[%c1_144, %c0_145, %c0_146, %c0_147] : memref<2x2x32x16xbf16, #tpu.memory_space<vmem>>, vector<1x1x32x16xbf16>
    %226 = vector.shape_cast %225 : vector<1x1x32x16xbf16> to vector<32x16xbf16>
    %227 = arith.truncf %208 : vector<16x32xf32> to vector<16x32xbf16>
    %cst_148 = arith.constant dense<0.000000e+00> : vector<16x16xf32>
    %228 = tpu.matmul %227, %226, %cst_148 {dimension_numbers = #tpu.dot_dimension_numbers<[1], [0], [0], [1], [0, 0, 1, 1], [], []>} : vector<16x32xbf16>, vector<32x16xbf16>, vector<16x16xf32> -> vector<16x16xf32>
    %c1_149 = arith.constant 1 : index
    %c0_150 = arith.constant 0 : index
    %c0_151 = arith.constant 0 : index
    %c0_152 = arith.constant 0 : index
    %229 = vector.load %arg10[%c1_149, %c0_150, %c0_151, %c0_152] : memref<2x2x1x16xf32, #tpu.memory_space<vmem>>, vector<1x1x1x16xf32>
    %230 = vector.shape_cast %229 : vector<1x1x1x16xf32> to vector<1x16xf32>
    %231 = vector.broadcast %230 : vector<1x16xf32> to vector<16x16xf32>
    %232 = arith.addf %228, %231 : vector<16x16xf32>
    %233 = vector.shape_cast %216 : vector<16x16xf32> to vector<2x8x16xf32>
    %234 = vector.shape_cast %224 : vector<16x16xf32> to vector<2x8x16xf32>
    %235 = vector.shape_cast %232 : vector<16x16xf32> to vector<2x8x16xf32>
    %236 = arith.truncf %233 : vector<2x8x16xf32> to vector<2x8x16xbf16>
    %237 = arith.truncf %234 : vector<2x8x16xf32> to vector<2x8x16xbf16>
    "tpu.trace_start"() <{level = 10 : i32, message = "bqd,bkd->bqk"}> : () -> ()
    %cst_153 = arith.constant dense<0.000000e+00> : vector<2x8x8xf32>
    %238 = tpu.matmul %236, %237, %cst_153 {dimension_numbers = #tpu.dot_dimension_numbers<[2], [2], [1], [1], [0, 0, 0, 1, 1, 1], [0], [0]>} : vector<2x8x16xbf16>, vector<2x8x16xbf16>, vector<2x8x8xf32> -> vector<2x8x8xf32>
    "tpu.trace_stop"() : () -> ()
    %239 = vector.broadcast %27 : vector<2x1x8xf32> to vector<2x8x8xf32>
    %240 = arith.addf %238, %239 : vector<2x8x8xf32>
    %241 = math.exp %240 : vector<2x8x8xf32>
    %cst_154 = arith.constant dense<0.000000e+00> : vector<2x8xf32>
    %242 = vector.multi_reduction <add>, %241, %cst_154 [2] : vector<2x8x8xf32> to vector<2x8xf32>
    %243 = vector.shape_cast %242 : vector<2x8xf32> to vector<2x8x1xf32>
    %244 = tpu.reciprocal %243 {approx = true} : vector<2x8x1xf32> -> vector<2x8x1xf32>
    %245 = vector.broadcast %244 : vector<2x8x1xf32> to vector<2x8x8xf32>
    %246 = arith.mulf %241, %245 : vector<2x8x8xf32>
    %247 = arith.truncf %246 : vector<2x8x8xf32> to vector<2x8x8xbf16>
    %248 = arith.truncf %235 : vector<2x8x16xf32> to vector<2x8x16xbf16>
    "tpu.trace_start"() <{level = 10 : i32, message = "bqk,bkd->bqd"}> : () -> ()
    %cst_155 = arith.constant dense<0.000000e+00> : vector<2x8x16xf32>
    %249 = tpu.matmul %247, %248, %cst_155 {dimension_numbers = #tpu.dot_dimension_numbers<[2], [1], [1], [2], [0, 0, 0, 1, 1, 2], [0], [0]>} : vector<2x8x8xbf16>, vector<2x8x16xbf16>, vector<2x8x16xf32> -> vector<2x8x16xf32>
    "tpu.trace_stop"() : () -> ()
    %250 = vector.shape_cast %249 : vector<2x8x16xf32> to vector<16x16xf32>
    %c1_156 = arith.constant 1 : index
    %c0_157 = arith.constant 0 : index
    %c0_158 = arith.constant 0 : index
    %c0_159 = arith.constant 0 : index
    %251 = vector.load %arg11[%c1_156, %c0_157, %c0_158, %c0_159] : memref<2x2x16x32xbf16, #tpu.memory_space<vmem>>, vector<1x1x16x32xbf16>
    %252 = vector.shape_cast %251 : vector<1x1x16x32xbf16> to vector<16x32xbf16>
    %253 = arith.truncf %250 : vector<16x16xf32> to vector<16x16xbf16>
    %cst_160 = arith.constant dense<0.000000e+00> : vector<16x32xf32>
    %254 = tpu.matmul %253, %252, %cst_160 {dimension_numbers = #tpu.dot_dimension_numbers<[1], [0], [0], [1], [0, 0, 1, 1], [], []>} : vector<16x16xbf16>, vector<16x32xbf16>, vector<16x32xf32> -> vector<16x32xf32>
    %c1_161 = arith.constant 1 : index
    %c1_162 = arith.constant 1 : index
    %c0_163 = arith.constant 0 : index
    %c0_164 = arith.constant 0 : index
    %255 = vector.load %arg5[%c1_161, %c1_162, %c0_163, %c0_164] : memref<2x2x32x16xbf16, #tpu.memory_space<vmem>>, vector<1x1x32x16xbf16>
    %256 = vector.shape_cast %255 : vector<1x1x32x16xbf16> to vector<32x16xbf16>
    %257 = arith.truncf %208 : vector<16x32xf32> to vector<16x32xbf16>
    %cst_165 = arith.constant dense<0.000000e+00> : vector<16x16xf32>
    %258 = tpu.matmul %257, %256, %cst_165 {dimension_numbers = #tpu.dot_dimension_numbers<[1], [0], [0], [1], [0, 0, 1, 1], [], []>} : vector<16x32xbf16>, vector<32x16xbf16>, vector<16x16xf32> -> vector<16x16xf32>
    %c1_166 = arith.constant 1 : index
    %c1_167 = arith.constant 1 : index
    %c0_168 = arith.constant 0 : index
    %c0_169 = arith.constant 0 : index
    %259 = vector.load %arg6[%c1_166, %c1_167, %c0_168, %c0_169] : memref<2x2x1x16xf32, #tpu.memory_space<vmem>>, vector<1x1x1x16xf32>
    %260 = vector.shape_cast %259 : vector<1x1x1x16xf32> to vector<1x16xf32>
    %261 = vector.broadcast %260 : vector<1x16xf32> to vector<16x16xf32>
    %262 = arith.addf %258, %261 : vector<16x16xf32>
    %c1_170 = arith.constant 1 : index
    %c1_171 = arith.constant 1 : index
    %c0_172 = arith.constant 0 : index
    %c0_173 = arith.constant 0 : index
    %263 = vector.load %arg7[%c1_170, %c1_171, %c0_172, %c0_173] : memref<2x2x32x16xbf16, #tpu.memory_space<vmem>>, vector<1x1x32x16xbf16>
    %264 = vector.shape_cast %263 : vector<1x1x32x16xbf16> to vector<32x16xbf16>
    %265 = arith.truncf %208 : vector<16x32xf32> to vector<16x32xbf16>
    %cst_174 = arith.constant dense<0.000000e+00> : vector<16x16xf32>
    %266 = tpu.matmul %265, %264, %cst_174 {dimension_numbers = #tpu.dot_dimension_numbers<[1], [0], [0], [1], [0, 0, 1, 1], [], []>} : vector<16x32xbf16>, vector<32x16xbf16>, vector<16x16xf32> -> vector<16x16xf32>
    %c1_175 = arith.constant 1 : index
    %c1_176 = arith.constant 1 : index
    %c0_177 = arith.constant 0 : index
    %c0_178 = arith.constant 0 : index
    %267 = vector.load %arg8[%c1_175, %c1_176, %c0_177, %c0_178] : memref<2x2x1x16xf32, #tpu.memory_space<vmem>>, vector<1x1x1x16xf32>
    %268 = vector.shape_cast %267 : vector<1x1x1x16xf32> to vector<1x16xf32>
    %269 = vector.broadcast %268 : vector<1x16xf32> to vector<16x16xf32>
    %270 = arith.addf %266, %269 : vector<16x16xf32>
    %c1_179 = arith.constant 1 : index
    %c1_180 = arith.constant 1 : index
    %c0_181 = arith.constant 0 : index
    %c0_182 = arith.constant 0 : index
    %271 = vector.load %arg9[%c1_179, %c1_180, %c0_181, %c0_182] : memref<2x2x32x16xbf16, #tpu.memory_space<vmem>>, vector<1x1x32x16xbf16>
    %272 = vector.shape_cast %271 : vector<1x1x32x16xbf16> to vector<32x16xbf16>
    %273 = arith.truncf %208 : vector<16x32xf32> to vector<16x32xbf16>
    %cst_183 = arith.constant dense<0.000000e+00> : vector<16x16xf32>
    %274 = tpu.matmul %273, %272, %cst_183 {dimension_numbers = #tpu.dot_dimension_numbers<[1], [0], [0], [1], [0, 0, 1, 1], [], []>} : vector<16x32xbf16>, vector<32x16xbf16>, vector<16x16xf32> -> vector<16x16xf32>
    %c1_184 = arith.constant 1 : index
    %c1_185 = arith.constant 1 : index
    %c0_186 = arith.constant 0 : index
    %c0_187 = arith.constant 0 : index
    %275 = vector.load %arg10[%c1_184, %c1_185, %c0_186, %c0_187] : memref<2x2x1x16xf32, #tpu.memory_space<vmem>>, vector<1x1x1x16xf32>
    %276 = vector.shape_cast %275 : vector<1x1x1x16xf32> to vector<1x16xf32>
    %277 = vector.broadcast %276 : vector<1x16xf32> to vector<16x16xf32>
    %278 = arith.addf %274, %277 : vector<16x16xf32>
    %279 = vector.shape_cast %262 : vector<16x16xf32> to vector<2x8x16xf32>
    %280 = vector.shape_cast %270 : vector<16x16xf32> to vector<2x8x16xf32>
    %281 = vector.shape_cast %278 : vector<16x16xf32> to vector<2x8x16xf32>
    %282 = arith.truncf %279 : vector<2x8x16xf32> to vector<2x8x16xbf16>
    %283 = arith.truncf %280 : vector<2x8x16xf32> to vector<2x8x16xbf16>
    "tpu.trace_start"() <{level = 10 : i32, message = "bqd,bkd->bqk"}> : () -> ()
    %cst_188 = arith.constant dense<0.000000e+00> : vector<2x8x8xf32>
    %284 = tpu.matmul %282, %283, %cst_188 {dimension_numbers = #tpu.dot_dimension_numbers<[2], [2], [1], [1], [0, 0, 0, 1, 1, 1], [0], [0]>} : vector<2x8x16xbf16>, vector<2x8x16xbf16>, vector<2x8x8xf32> -> vector<2x8x8xf32>
    "tpu.trace_stop"() : () -> ()
    %285 = vector.broadcast %27 : vector<2x1x8xf32> to vector<2x8x8xf32>
    %286 = arith.addf %284, %285 : vector<2x8x8xf32>
    %287 = math.exp %286 : vector<2x8x8xf32>
    %cst_189 = arith.constant dense<0.000000e+00> : vector<2x8xf32>
    %288 = vector.multi_reduction <add>, %287, %cst_189 [2] : vector<2x8x8xf32> to vector<2x8xf32>
    %289 = vector.shape_cast %288 : vector<2x8xf32> to vector<2x8x1xf32>
    %290 = tpu.reciprocal %289 {approx = true} : vector<2x8x1xf32> -> vector<2x8x1xf32>
    %291 = vector.broadcast %290 : vector<2x8x1xf32> to vector<2x8x8xf32>
    %292 = arith.mulf %287, %291 : vector<2x8x8xf32>
    %293 = arith.truncf %292 : vector<2x8x8xf32> to vector<2x8x8xbf16>
    %294 = arith.truncf %281 : vector<2x8x16xf32> to vector<2x8x16xbf16>
    "tpu.trace_start"() <{level = 10 : i32, message = "bqk,bkd->bqd"}> : () -> ()
    %cst_190 = arith.constant dense<0.000000e+00> : vector<2x8x16xf32>
    %295 = tpu.matmul %293, %294, %cst_190 {dimension_numbers = #tpu.dot_dimension_numbers<[2], [1], [1], [2], [0, 0, 0, 1, 1, 2], [0], [0]>} : vector<2x8x8xbf16>, vector<2x8x16xbf16>, vector<2x8x16xf32> -> vector<2x8x16xf32>
    "tpu.trace_stop"() : () -> ()
    %296 = vector.shape_cast %295 : vector<2x8x16xf32> to vector<16x16xf32>
    %c1_191 = arith.constant 1 : index
    %c1_192 = arith.constant 1 : index
    %c0_193 = arith.constant 0 : index
    %c0_194 = arith.constant 0 : index
    %297 = vector.load %arg11[%c1_191, %c1_192, %c0_193, %c0_194] : memref<2x2x16x32xbf16, #tpu.memory_space<vmem>>, vector<1x1x16x32xbf16>
    %298 = vector.shape_cast %297 : vector<1x1x16x32xbf16> to vector<16x32xbf16>
    %299 = arith.truncf %296 : vector<16x16xf32> to vector<16x16xbf16>
    %cst_195 = arith.constant dense<0.000000e+00> : vector<16x32xf32>
    %300 = tpu.matmul %299, %298, %cst_195 {dimension_numbers = #tpu.dot_dimension_numbers<[1], [0], [0], [1], [0, 0, 1, 1], [], []>} : vector<16x16xbf16>, vector<16x32xbf16>, vector<16x32xf32> -> vector<16x32xf32>
    %301 = arith.addf %254, %300 : vector<16x32xf32>
    %c1_196 = arith.constant 1 : index
    %c0_197 = arith.constant 0 : index
    %c0_198 = arith.constant 0 : index
    %302 = vector.load %arg12[%c1_196, %c0_197, %c0_198] : memref<2x1x32xf32, #tpu.memory_space<vmem>>, vector<1x1x32xf32>
    %303 = vector.shape_cast %302 : vector<1x1x32xf32> to vector<1x32xf32>
    %304 = vector.broadcast %303 : vector<1x32xf32> to vector<16x32xf32>
    %305 = arith.addf %301, %304 : vector<16x32xf32>
    %306 = arith.addf %305, %208 : vector<16x32xf32>
    %c1_199 = arith.constant 1 : index
    %c0_200 = arith.constant 0 : index
    %c0_201 = arith.constant 0 : index
    %307 = vector.load %arg13[%c1_199, %c0_200, %c0_201] : memref<2x1x32xf32, #tpu.memory_space<vmem>>, vector<1x1x32xf32>
    %308 = vector.shape_cast %307 : vector<1x1x32xf32> to vector<1x32xf32>
    %c1_202 = arith.constant 1 : index
    %c0_203 = arith.constant 0 : index
    %c0_204 = arith.constant 0 : index
    %309 = vector.load %arg14[%c1_202, %c0_203, %c0_204] : memref<2x1x32xf32, #tpu.memory_space<vmem>>, vector<1x1x32xf32>
    %310 = vector.shape_cast %309 : vector<1x1x32xf32> to vector<1x32xf32>
    %cst_205 = arith.constant dense<0.000000e+00> : vector<16xf32>
    %311 = vector.multi_reduction <add>, %306, %cst_205 [1] : vector<16x32xf32> to vector<16xf32>
    %312 = vector.shape_cast %311 : vector<16xf32> to vector<16x1xf32>
    %cst_206 = arith.constant 3.200000e+01 : f32
    %313 = vector.broadcast %cst_206 : f32 to vector<16x1xf32>
    %314 = arith.divf %312, %313 : vector<16x1xf32>
    %315 = vector.broadcast %314 : vector<16x1xf32> to vector<16x32xf32>
    %316 = arith.subf %306, %315 : vector<16x32xf32>
    %317 = arith.mulf %316, %316 : vector<16x32xf32>
    %cst_207 = arith.constant dense<0.000000e+00> : vector<16xf32>
    %318 = vector.multi_reduction <add>, %317, %cst_207 [1] : vector<16x32xf32> to vector<16xf32>
    %319 = vector.shape_cast %318 : vector<16xf32> to vector<16x1xf32>
    %cst_208 = arith.constant 3.200000e+01 : f32
    %320 = vector.broadcast %cst_208 : f32 to vector<16x1xf32>
    %321 = arith.divf %319, %320 : vector<16x1xf32>
    %322 = vector.broadcast %314 : vector<16x1xf32> to vector<16x32xf32>
    %323 = arith.subf %306, %322 : vector<16x32xf32>
    %cst_209 = arith.constant 9.99999996E-13 : f32
    %324 = vector.broadcast %cst_209 : f32 to vector<16x1xf32>
    %325 = arith.addf %321, %324 : vector<16x1xf32>
    %326 = math.rsqrt %325 : vector<16x1xf32>
    %327 = vector.broadcast %326 : vector<16x1xf32> to vector<16x32xf32>
    %328 = arith.mulf %323, %327 : vector<16x32xf32>
    %329 = vector.broadcast %308 : vector<1x32xf32> to vector<16x32xf32>
    %330 = arith.mulf %328, %329 : vector<16x32xf32>
    %331 = vector.broadcast %310 : vector<1x32xf32> to vector<16x32xf32>
    %332 = arith.addf %330, %331 : vector<16x32xf32>
    %c1_210 = arith.constant 1 : index
    %c0_211 = arith.constant 0 : index
    %c0_212 = arith.constant 0 : index
    %333 = vector.load %arg15[%c1_210, %c0_211, %c0_212] : memref<2x32x64xbf16, #tpu.memory_space<vmem>>, vector<1x32x64xbf16>
    %334 = vector.shape_cast %333 : vector<1x32x64xbf16> to vector<32x64xbf16>
    %335 = arith.truncf %332 : vector<16x32xf32> to vector<16x32xbf16>
    %cst_213 = arith.constant dense<0.000000e+00> : vector<16x64xf32>
    %336 = tpu.matmul %335, %334, %cst_213 {dimension_numbers = #tpu.dot_dimension_numbers<[1], [0], [0], [1], [0, 0, 1, 1], [], []>} : vector<16x32xbf16>, vector<32x64xbf16>, vector<16x64xf32> -> vector<16x64xf32>
    %c1_214 = arith.constant 1 : index
    %c0_215 = arith.constant 0 : index
    %c0_216 = arith.constant 0 : index
    %337 = vector.load %arg16[%c1_214, %c0_215, %c0_216] : memref<2x1x64xf32, #tpu.memory_space<vmem>>, vector<1x1x64xf32>
    %338 = vector.shape_cast %337 : vector<1x1x64xf32> to vector<1x64xf32>
    %339 = vector.broadcast %338 : vector<1x64xf32> to vector<16x64xf32>
    %340 = arith.addf %336, %339 : vector<16x64xf32>
    %cst_217 = arith.constant 0.636619746 : f32
    %341 = math.sqrt %cst_217 : f32
    %cst_218 = arith.constant 5.000000e-01 : f32
    %342 = vector.broadcast %cst_218 : f32 to vector<16x64xf32>
    %343 = arith.mulf %342, %340 : vector<16x64xf32>
    %cst_219 = arith.constant 4.471500e-02 : f32
    %344 = vector.broadcast %cst_219 : f32 to vector<16x64xf32>
    %345 = arith.mulf %344, %340 : vector<16x64xf32>
    %346 = arith.mulf %345, %340 : vector<16x64xf32>
    %347 = arith.mulf %346, %340 : vector<16x64xf32>
    %348 = arith.addf %340, %347 : vector<16x64xf32>
    %349 = vector.broadcast %341 : f32 to vector<16x64xf32>
    %350 = arith.mulf %349, %348 : vector<16x64xf32>
    %351 = math.tanh %350 : vector<16x64xf32>
    %cst_220 = arith.constant 1.000000e+00 : f32
    %352 = vector.broadcast %cst_220 : f32 to vector<16x64xf32>
    %353 = arith.addf %352, %351 : vector<16x64xf32>
    %354 = arith.mulf %343, %353 : vector<16x64xf32>
    %c1_221 = arith.constant 1 : index
    %c0_222 = arith.constant 0 : index
    %c0_223 = arith.constant 0 : index
    %355 = vector.load %arg17[%c1_221, %c0_222, %c0_223] : memref<2x64x32xbf16, #tpu.memory_space<vmem>>, vector<1x64x32xbf16>
    %356 = vector.shape_cast %355 : vector<1x64x32xbf16> to vector<64x32xbf16>
    %357 = arith.truncf %354 : vector<16x64xf32> to vector<16x64xbf16>
    %cst_224 = arith.constant dense<0.000000e+00> : vector<16x32xf32>
    %358 = tpu.matmul %357, %356, %cst_224 {dimension_numbers = #tpu.dot_dimension_numbers<[1], [0], [0], [1], [0, 0, 1, 1], [], []>} : vector<16x64xbf16>, vector<64x32xbf16>, vector<16x32xf32> -> vector<16x32xf32>
    %c1_225 = arith.constant 1 : index
    %c0_226 = arith.constant 0 : index
    %c0_227 = arith.constant 0 : index
    %359 = vector.load %arg18[%c1_225, %c0_226, %c0_227] : memref<2x1x32xf32, #tpu.memory_space<vmem>>, vector<1x1x32xf32>
    %360 = vector.shape_cast %359 : vector<1x1x32xf32> to vector<1x32xf32>
    %361 = vector.broadcast %360 : vector<1x32xf32> to vector<16x32xf32>
    %362 = arith.addf %358, %361 : vector<16x32xf32>
    %363 = arith.addf %362, %332 : vector<16x32xf32>
    %c1_228 = arith.constant 1 : index
    %c0_229 = arith.constant 0 : index
    %c0_230 = arith.constant 0 : index
    %364 = vector.load %arg19[%c1_228, %c0_229, %c0_230] : memref<2x1x32xf32, #tpu.memory_space<vmem>>, vector<1x1x32xf32>
    %365 = vector.shape_cast %364 : vector<1x1x32xf32> to vector<1x32xf32>
    %c1_231 = arith.constant 1 : index
    %c0_232 = arith.constant 0 : index
    %c0_233 = arith.constant 0 : index
    %366 = vector.load %arg20[%c1_231, %c0_232, %c0_233] : memref<2x1x32xf32, #tpu.memory_space<vmem>>, vector<1x1x32xf32>
    %367 = vector.shape_cast %366 : vector<1x1x32xf32> to vector<1x32xf32>
    %cst_234 = arith.constant dense<0.000000e+00> : vector<16xf32>
    %368 = vector.multi_reduction <add>, %363, %cst_234 [1] : vector<16x32xf32> to vector<16xf32>
    %369 = vector.shape_cast %368 : vector<16xf32> to vector<16x1xf32>
    %cst_235 = arith.constant 3.200000e+01 : f32
    %370 = vector.broadcast %cst_235 : f32 to vector<16x1xf32>
    %371 = arith.divf %369, %370 : vector<16x1xf32>
    %372 = vector.broadcast %371 : vector<16x1xf32> to vector<16x32xf32>
    %373 = arith.subf %363, %372 : vector<16x32xf32>
    %374 = arith.mulf %373, %373 : vector<16x32xf32>
    %cst_236 = arith.constant dense<0.000000e+00> : vector<16xf32>
    %375 = vector.multi_reduction <add>, %374, %cst_236 [1] : vector<16x32xf32> to vector<16xf32>
    %376 = vector.shape_cast %375 : vector<16xf32> to vector<16x1xf32>
    %cst_237 = arith.constant 3.200000e+01 : f32
    %377 = vector.broadcast %cst_237 : f32 to vector<16x1xf32>
    %378 = arith.divf %376, %377 : vector<16x1xf32>
    %379 = vector.broadcast %371 : vector<16x1xf32> to vector<16x32xf32>
    %380 = arith.subf %363, %379 : vector<16x32xf32>
    %cst_238 = arith.constant 9.99999996E-13 : f32
    %381 = vector.broadcast %cst_238 : f32 to vector<16x1xf32>
    %382 = arith.addf %378, %381 : vector<16x1xf32>
    %383 = math.rsqrt %382 : vector<16x1xf32>
    %384 = vector.broadcast %383 : vector<16x1xf32> to vector<16x32xf32>
    %385 = arith.mulf %380, %384 : vector<16x32xf32>
    %386 = vector.broadcast %365 : vector<1x32xf32> to vector<16x32xf32>
    %387 = arith.mulf %385, %386 : vector<16x32xf32>
    %388 = vector.broadcast %367 : vector<1x32xf32> to vector<16x32xf32>
    %389 = arith.addf %387, %388 : vector<16x32xf32>
    %390 = vector.extract_strided_slice %389 {offsets = [0, 0], sizes = [1, 32], strides = [1, 1]} : vector<16x32xf32> to vector<1x32xf32>
    %391 = vector.extract_strided_slice %389 {offsets = [8, 0], sizes = [1, 32], strides = [1, 1]} : vector<16x32xf32> to vector<1x32xf32>
    %392 = tpu.concatenate %390, %391 in 0 : vector<1x32xf32>, vector<1x32xf32> -> vector<2x32xf32>
    %c0_239 = arith.constant 0 : index
    %c0_240 = arith.constant 0 : index
    %393 = vector.load %arg21[%c0_239, %c0_240] : memref<32x32xbf16, #tpu.memory_space<vmem>>, vector<32x32xbf16>
    %394 = arith.truncf %392 : vector<2x32xf32> to vector<2x32xbf16>
    %cst_241 = arith.constant dense<0.000000e+00> : vector<2x32xf32>
    %395 = tpu.matmul %394, %393, %cst_241 {dimension_numbers = #tpu.dot_dimension_numbers<[1], [0], [0], [1], [0, 0, 1, 1], [], []>} : vector<2x32xbf16>, vector<32x32xbf16>, vector<2x32xf32> -> vector<2x32xf32>
    %c0_242 = arith.constant 0 : index
    %c0_243 = arith.constant 0 : index
    %396 = vector.load %arg22[%c0_242, %c0_243] : memref<1x32xf32, #tpu.memory_space<vmem>>, vector<1x32xf32>
    %397 = vector.broadcast %396 : vector<1x32xf32> to vector<2x32xf32>
    %398 = arith.addf %395, %397 : vector<2x32xf32>
    %399 = math.tanh %398 : vector<2x32xf32>
    %c0_244 = arith.constant 0 : index
    %c0_245 = arith.constant 0 : index
    %400 = vector.load %arg23[%c0_244, %c0_245] : memref<32x128xbf16, #tpu.memory_space<vmem>>, vector<32x128xbf16>
    %401 = arith.truncf %399 : vector<2x32xf32> to vector<2x32xbf16>
    %cst_246 = arith.constant dense<0.000000e+00> : vector<2x128xf32>
    %402 = tpu.matmul %401, %400, %cst_246 {dimension_numbers = #tpu.dot_dimension_numbers<[1], [0], [0], [1], [0, 0, 1, 1], [], []>} : vector<2x32xbf16>, vector<32x128xbf16>, vector<2x128xf32> -> vector<2x128xf32>
    %c0_247 = arith.constant 0 : index
    %c0_248 = arith.constant 0 : index
    %403 = vector.load %arg24[%c0_247, %c0_248] : memref<1x128xf32, #tpu.memory_space<vmem>>, vector<1x128xf32>
    %404 = vector.broadcast %403 : vector<1x128xf32> to vector<2x128xf32>
    %405 = arith.addf %402, %404 : vector<2x128xf32>
    %c0_249 = arith.constant 0 : index
    %c0_250 = arith.constant 0 : index
    %c0_251 = arith.constant 0 : index
    %406 = vector.load %arg25[%c0_249, %c0_250, %c0_251] : memref<1x2x128xf32, #tpu.memory_space<vmem>>, vector<1x2x128xf32>
    %407 = vector.shape_cast %406 : vector<1x2x128xf32> to vector<2x128xf32>
    %408 = vector.shape_cast %405 : vector<2x128xf32> to vector<1x2x128xf32>
    tpu.vector_store %arg25[%c0_249, %c0_250, %c0_251], %408 {strides = array<i32>} : memref<1x2x128xf32, #tpu.memory_space<vmem>>, vector<1x2x128xf32>,
    return
  }
  func.func @transform_0(%arg0: i32) -> (i32, i32, i32) {
    %c0_i32 = arith.constant 0 : i32
    %c0_i32_0 = arith.constant 0 : i32
    %c0_i32_1 = arith.constant 0 : i32
    return %arg0, %c0_i32, %c0_i32_0 : i32, i32, i32
  }
  func.func @transform_1(%arg0: i32) -> (i32, i32, i32, i32) {
    %c0_i32 = arith.constant 0 : i32
    %c0_i32_0 = arith.constant 0 : i32
    %c0_i32_1 = arith.constant 0 : i32
    %c0_i32_2 = arith.constant 0 : i32
    return %arg0, %c0_i32, %c0_i32_0, %c0_i32_1 : i32, i32, i32, i32
  }
  func.func @transform_2(%arg0: i32) -> (i32, i32) {
    %c0_i32 = arith.constant 0 : i32
    %c0_i32_0 = arith.constant 0 : i32
    %c0_i32_1 = arith.constant 0 : i32
    return %c0_i32, %c0_i32_0 : i32, i32
  }
  func.func @transform_3(%arg0: i32) -> (i32, i32) {
    %c0_i32 = arith.constant 0 : i32
    %c0_i32_0 = arith.constant 0 : i32
    %c0_i32_1 = arith.constant 0 : i32
    return %c0_i32, %c0_i32_0 : i32, i32
  }
  func.func @transform_4(%arg0: i32) -> (i32, i32, i32, i32) {
    %c0_i32 = arith.constant 0 : i32
    %c0_i32_0 = arith.constant 0 : i32
    %c0_i32_1 = arith.constant 0 : i32
    %c0_i32_2 = arith.constant 0 : i32
    %c0_i32_3 = arith.constant 0 : i32
    return %c0_i32, %c0_i32_0, %c0_i32_1, %c0_i32_2 : i32, i32, i32, i32
  }
  func.func @transform_5(%arg0: i32) -> (i32, i32, i32, i32) {
    %c0_i32 = arith.constant 0 : i32
    %c0_i32_0 = arith.constant 0 : i32
    %c0_i32_1 = arith.constant 0 : i32
    %c0_i32_2 = arith.constant 0 : i32
    %c0_i32_3 = arith.constant 0 : i32
    return %c0_i32, %c0_i32_0, %c0_i32_1, %c0_i32_2 : i32, i32, i32, i32
  }
  func.func @transform_6(%arg0: i32) -> (i32, i32, i32, i32) {
    %c0_i32 = arith.constant 0 : i32
    %c0_i32_0 = arith.constant 0 : i32
    %c0_i32_1 = arith.constant 0 : i32
    %c0_i32_2 = arith.constant 0 : i32
    %c0_i32_3 = arith.constant 0 : i32
    return %c0_i32, %c0_i32_0, %c0_i32_1, %c0_i32_2 : i32, i32, i32, i32
  }
  func.func @transform_7(%arg0: i32) -> (i32, i32, i32, i32) {
    %c0_i32 = arith.constant 0 : i32
    %c0_i32_0 = arith.constant 0 : i32
    %c0_i32_1 = arith.constant 0 : i32
    %c0_i32_2 = arith.constant 0 : i32
    %c0_i32_3 = arith.constant 0 : i32
    return %c0_i32, %c0_i32_0, %c0_i32_1, %c0_i32_2 : i32, i32, i32, i32
  }
  func.func @transform_8(%arg0: i32) -> (i32, i32, i32, i32) {
    %c0_i32 = arith.constant 0 : i32
    %c0_i32_0 = arith.constant 0 : i32
    %c0_i32_1 = arith.constant 0 : i32
    %c0_i32_2 = arith.constant 0 : i32
    %c0_i32_3 = arith.constant 0 : i32
    return %c0_i32, %c0_i32_0, %c0_i32_1, %c0_i32_2 : i32, i32, i32, i32
  }
  func.func @transform_9(%arg0: i32) -> (i32, i32, i32, i32) {
    %c0_i32 = arith.constant 0 : i32
    %c0_i32_0 = arith.constant 0 : i32
    %c0_i32_1 = arith.constant 0 : i32
    %c0_i32_2 = arith.constant 0 : i32
    %c0_i32_3 = arith.constant 0 : i32
    return %c0_i32, %c0_i32_0, %c0_i32_1, %c0_i32_2 : i32, i32, i32, i32
  }
  func.func @transform_10(%arg0: i32) -> (i32, i32, i32, i32) {
    %c0_i32 = arith.constant 0 : i32
    %c0_i32_0 = arith.constant 0 : i32
    %c0_i32_1 = arith.constant 0 : i32
    %c0_i32_2 = arith.constant 0 : i32
    %c0_i32_3 = arith.constant 0 : i32
    return %c0_i32, %c0_i32_0, %c0_i32_1, %c0_i32_2 : i32, i32, i32, i32
  }
  func.func @transform_11(%arg0: i32) -> (i32, i32, i32) {
    %c0_i32 = arith.constant 0 : i32
    %c0_i32_0 = arith.constant 0 : i32
    %c0_i32_1 = arith.constant 0 : i32
    %c0_i32_2 = arith.constant 0 : i32
    return %c0_i32, %c0_i32_0, %c0_i32_1 : i32, i32, i32
  }
  func.func @transform_12(%arg0: i32) -> (i32, i32, i32) {
    %c0_i32 = arith.constant 0 : i32
    %c0_i32_0 = arith.constant 0 : i32
    %c0_i32_1 = arith.constant 0 : i32
    %c0_i32_2 = arith.constant 0 : i32
    return %c0_i32, %c0_i32_0, %c0_i32_1 : i32, i32, i32
  }
  func.func @transform_13(%arg0: i32) -> (i32, i32, i32) {
    %c0_i32 = arith.constant 0 : i32
    %c0_i32_0 = arith.constant 0 : i32
    %c0_i32_1 = arith.constant 0 : i32
    %c0_i32_2 = arith.constant 0 : i32
    return %c0_i32, %c0_i32_0, %c0_i32_1 : i32, i32, i32
  }
  func.func @transform_14(%arg0: i32) -> (i32, i32, i32) {
    %c0_i32 = arith.constant 0 : i32
    %c0_i32_0 = arith.constant 0 : i32
    %c0_i32_1 = arith.constant 0 : i32
    %c0_i32_2 = arith.constant 0 : i32
    return %c0_i32, %c0_i32_0, %c0_i32_1 : i32, i32, i32
  }
  func.func @transform_15(%arg0: i32) -> (i32, i32, i32) {
    %c0_i32 = arith.constant 0 : i32
    %c0_i32_0 = arith.constant 0 : i32
    %c0_i32_1 = arith.constant 0 : i32
    %c0_i32_2 = arith.constant 0 : i32
    return %c0_i32, %c0_i32_0, %c0_i32_1 : i32, i32, i32
  }
  func.func @transform_16(%arg0: i32) -> (i32, i32, i32) {
    %c0_i32 = arith.constant 0 : i32
    %c0_i32_0 = arith.constant 0 : i32
    %c0_i32_1 = arith.constant 0 : i32
    %c0_i32_2 = arith.constant 0 : i32
    return %c0_i32, %c0_i32_0, %c0_i32_1 : i32, i32, i32
  }
  func.func @transform_17(%arg0: i32) -> (i32, i32, i32) {
    %c0_i32 = arith.constant 0 : i32
    %c0_i32_0 = arith.constant 0 : i32
    %c0_i32_1 = arith.constant 0 : i32
    %c0_i32_2 = arith.constant 0 : i32
    return %c0_i32, %c0_i32_0, %c0_i32_1 : i32, i32, i32
  }
  func.func @transform_18(%arg0: i32) -> (i32, i32, i32) {
    %c0_i32 = arith.constant 0 : i32
    %c0_i32_0 = arith.constant 0 : i32
    %c0_i32_1 = arith.constant 0 : i32
    %c0_i32_2 = arith.constant 0 : i32
    return %c0_i32, %c0_i32_0, %c0_i32_1 : i32, i32, i32
  }
  func.func @transform_19(%arg0: i32) -> (i32, i32, i32) {
    %c0_i32 = arith.constant 0 : i32
    %c0_i32_0 = arith.constant 0 : i32
    %c0_i32_1 = arith.constant 0 : i32
    %c0_i32_2 = arith.constant 0 : i32
    return %c0_i32, %c0_i32_0, %c0_i32_1 : i32, i32, i32
  }
  func.func @transform_20(%arg0: i32) -> (i32, i32) {
    %c0_i32 = arith.constant 0 : i32
    %c0_i32_0 = arith.constant 0 : i32
    %c0_i32_1 = arith.constant 0 : i32
    return %c0_i32, %c0_i32_0 : i32, i32
  }
  func.func @transform_21(%arg0: i32) -> (i32, i32) {
    %c0_i32 = arith.constant 0 : i32
    %c0_i32_0 = arith.constant 0 : i32
    %c0_i32_1 = arith.constant 0 : i32
    return %c0_i32, %c0_i32_0 : i32, i32
  }
  func.func @transform_22(%arg0: i32) -> (i32, i32) {
    %c0_i32 = arith.constant 0 : i32
    %c0_i32_0 = arith.constant 0 : i32
    %c0_i32_1 = arith.constant 0 : i32
    return %c0_i32, %c0_i32_0 : i32, i32
  }
  func.func @transform_23(%arg0: i32) -> (i32, i32) {
    %c0_i32 = arith.constant 0 : i32
    %c0_i32_0 = arith.constant 0 : i32
    %c0_i32_1 = arith.constant 0 : i32
    return %c0_i32, %c0_i32_0 : i32, i32
  }
  func.func @transform_24(%arg0: i32) -> (i32, i32, i32) {
    %c0_i32 = arith.constant 0 : i32
    %c0_i32_0 = arith.constant 0 : i32
    %c0_i32_1 = arith.constant 0 : i32
    return %arg0, %c0_i32, %c0_i32_0 : i32, i32, i32
  }
}

</mosaic_0001>

<llo_original>
// kernel: bert_classifier_forward.1
$region0: #{bert_classifier_forward.1}
  #allocation0 [shape = 'u32[]', space=smem, size = 0x4, offset = 0x4, fixed_abs, tag = 'smem constant byte address 0x4 - core index']
  #allocation1 [shape = 'u32[144,128]{1,0:T(1,128)}', space=vmem, size = 0x12000, scoped, tag = 'internal scratch']
  %s0 = inlined_call_operand.vmem [shape: f32[1,16,32], index: 0, kind: input, shape index: {}]
  %s1 = inlined_call_operand.vmem [shape: f32[1,2,1,8], index: 1, kind: input, shape index: {}]
  %s2 = inlined_call_operand.vmem [shape: f32[1,32], index: 2, kind: input, shape index: {}]
  %s3 = inlined_call_operand.vmem [shape: f32[1,32], index: 3, kind: input, shape index: {}]
  %s4 = inlined_call_operand.vmem [shape: bf16[2,2,32,16], index: 4, kind: input, shape index: {}]
  %s5 = inlined_call_operand.vmem [shape: f32[2,2,1,16], index: 5, kind: input, shape index: {}]
  %s6 = inlined_call_operand.vmem [shape: bf16[2,2,32,16], index: 6, kind: input, shape index: {}]
  %s7 = inlined_call_operand.vmem [shape: f32[2,2,1,16], index: 7, kind: input, shape index: {}]
  %s8 = inlined_call_operand.vmem [shape: bf16[2,2,32,16], index: 8, kind: input, shape index: {}]
  %s9 = inlined_call_operand.vmem [shape: f32[2,2,1,16], index: 9, kind: input, shape index: {}]
  %s10 = inlined_call_operand.vmem [shape: bf16[2,2,16,32], index: 10, kind: input, shape index: {}]
  %s11 = inlined_call_operand.vmem [shape: f32[2,1,32], index: 11, kind: input, shape index: {}]
  %s12 = inlined_call_operand.vmem [shape: f32[2,1,32], index: 12, kind: input, shape index: {}]
  %s13 = inlined_call_operand.vmem [shape: f32[2,1,32], index: 13, kind: input, shape index: {}]
  %s14 = inlined_call_operand.vmem [shape: bf16[2,32,64], index: 14, kind: input, shape index: {}]
  %s15 = inlined_call_operand.vmem [shape: f32[2,1,64], index: 15, kind: input, shape index: {}]
  %s16 = inlined_call_operand.vmem [shape: bf16[2,64,32], index: 16, kind: input, shape index: {}]
  %s17 = inlined_call_operand.vmem [shape: f32[2,1,32], index: 17, kind: input, shape index: {}]
  %s18 = inlined_call_operand.vmem [shape: f32[2,1,32], index: 18, kind: input, shape index: {}]
  %s19 = inlined_call_operand.vmem [shape: f32[2,1,32], index: 19, kind: input, shape index: {}]
  %s20 = inlined_call_operand.vmem [shape: bf16[32,32], index: 20, kind: input, shape index: {}]
  %s21 = inlined_call_operand.vmem [shape: f32[1,32], index: 21, kind: input, shape index: {}]
  %s22 = inlined_call_operand.vmem [shape: bf16[32,128], index: 22, kind: input, shape index: {}]
  %s23 = inlined_call_operand.vmem [shape: f32[1,128], index: 23, kind: input, shape index: {}]
  %s24 = inlined_call_operand.hbm [shape: f32[1,2,128], index: 24, kind: output, shape index: {}]
  %s25 = sld [smem:[#allocation0]]
  $region106: #{bert_classifier_forward.1} parent=0
    _
  %s27 = ssub.s32 1, %s25
  %s28 = scalar_select 0, %s27, %s25
  $region1: #{bert_classifier_forward.1} parent=0
    #allocation2 [shape = 'u8[1024]{0}', space=vmem, size = 0x400, scoped, tag = 'output window, operand 0, single buffered']
    #allocation3 [shape = 's32[1]{0}', space=sflag, size = 0x4, scoped, tag = 'scoped memory for bert_classifier_forward.1']
    %29 = vsyncpa [#allocation3], 0
    // Predicated region
    $region2: #{bert_classifier_forward.1} parent=1 // pred_check
      _
    $region3: #{bert_classifier_forward.1} parent=1 // pred_check_branch
      %31 = sbr.rel (0) target = $region5
    $region4: #{bert_classifier_forward.1} parent=1 // pred_region
      _
    $region5: #{bert_classifier_forward.1} parent=1 // pred_fallthru
      _
    // Predicated region
    $region6: #{bert_classifier_forward.1} parent=1 // pred_check
      _
    $region7: #{bert_classifier_forward.1} parent=1 // pred_check_branch
      %33 = sbr.rel (0) target = $region9
    $region8: #{bert_classifier_forward.1} parent=1 // pred_region
      _
    $region9: #{bert_classifier_forward.1} parent=1 // pred_fallthru
      _
    // Predicated region
    $region10: #{bert_classifier_forward.1} parent=1 // pred_check
      _
    $region11: #{bert_classifier_forward.1} parent=1 // pred_check_branch
      %35 = sbr.rel (0) target = $region13
    $region12: #{bert_classifier_forward.1} parent=1 // pred_region
      _
    $region13: #{bert_classifier_forward.1} parent=1 // pred_fallthru
      _
    // Predicated region
    $region14: #{bert_classifier_forward.1} parent=1 // pred_check
      _
    $region15: #{bert_classifier_forward.1} parent=1 // pred_check_branch
      %37 = sbr.rel (0) target = $region17
    $region16: #{bert_classifier_forward.1} parent=1 // pred_region
      _
    $region17: #{bert_classifier_forward.1} parent=1 // pred_fallthru
      _
    // Predicated region
    $region18: #{bert_classifier_forward.1} parent=1 // pred_check
      _
    $region19: #{bert_classifier_forward.1} parent=1 // pred_check_branch
      %39 = sbr.rel (0) target = $region21
    $region20: #{bert_classifier_forward.1} parent=1 // pred_region
      _
    $region21: #{bert_classifier_forward.1} parent=1 // pred_fallthru
      _
    // Predicated region
    $region22: #{bert_classifier_forward.1} parent=1 // pred_check
      _
    $region23: #{bert_classifier_forward.1} parent=1 // pred_check_branch
      %41 = sbr.rel (0) target = $region25
    $region24: #{bert_classifier_forward.1} parent=1 // pred_region
      _
    $region25: #{bert_classifier_forward.1} parent=1 // pred_fallthru
      _
    // Predicated region
    $region26: #{bert_classifier_forward.1} parent=1 // pred_check
      _
    $region27: #{bert_classifier_forward.1} parent=1 // pred_check_branch
      %43 = sbr.rel (0) target = $region29
    $region28: #{bert_classifier_forward.1} parent=1 // pred_region
      _
    $region29: #{bert_classifier_forward.1} parent=1 // pred_fallthru
      _
    // Predicated region
    $region30: #{bert_classifier_forward.1} parent=1 // pred_check
      _
    $region31: #{bert_classifier_forward.1} parent=1 // pred_check_branch
      %45 = sbr.rel (0) target = $region33
    $region32: #{bert_classifier_forward.1} parent=1 // pred_region
      _
    $region33: #{bert_classifier_forward.1} parent=1 // pred_fallthru
      _
    // Predicated region
    $region34: #{bert_classifier_forward.1} parent=1 // pred_check
      _
    $region35: #{bert_classifier_forward.1} parent=1 // pred_check_branch
      %47 = sbr.rel (0) target = $region37
    $region36: #{bert_classifier_forward.1} parent=1 // pred_region
      _
    $region37: #{bert_classifier_forward.1} parent=1 // pred_fallthru
      _
    // Predicated region
    $region38: #{bert_classifier_forward.1} parent=1 // pred_check
      _
    $region39: #{bert_classifier_forward.1} parent=1 // pred_check_branch
      %49 = sbr.rel (0) target = $region41
    $region40: #{bert_classifier_forward.1} parent=1 // pred_region
      _
    $region41: #{bert_classifier_forward.1} parent=1 // pred_fallthru
      _
    // Predicated region
    $region42: #{bert_classifier_forward.1} parent=1 // pred_check
      _
    $region43: #{bert_classifier_forward.1} parent=1 // pred_check_branch
      %51 = sbr.rel (0) target = $region45
    $region44: #{bert_classifier_forward.1} parent=1 // pred_region
      _
    $region45: #{bert_classifier_forward.1} parent=1 // pred_fallthru
      _
    // Predicated region
    $region46: #{bert_classifier_forward.1} parent=1 // pred_check
      _
    $region47: #{bert_classifier_forward.1} parent=1 // pred_check_branch
      %53 = sbr.rel (0) target = $region49
    $region48: #{bert_classifier_forward.1} parent=1 // pred_region
      _
    $region49: #{bert_classifier_forward.1} parent=1 // pred_fallthru
      _
    // Predicated region
    $region50: #{bert_classifier_forward.1} parent=1 // pred_check
      _
    $region51: #{bert_classifier_forward.1} parent=1 // pred_check_branch
      %55 = sbr.rel (0) target = $region53
    $region52: #{bert_classifier_forward.1} parent=1 // pred_region
      _
    $region53: #{bert_classifier_forward.1} parent=1 // pred_fallthru
      _
    // Predicated region
    $region54: #{bert_classifier_forward.1} parent=1 // pred_check
      _
    $region55: #{bert_classifier_forward.1} parent=1 // pred_check_branch
      %57 = sbr.rel (0) target = $region57
    $region56: #{bert_classifier_forward.1} parent=1 // pred_region
      _
    $region57: #{bert_classifier_forward.1} parent=1 // pred_fallthru
      _
    // Predicated region
    $region58: #{bert_classifier_forward.1} parent=1 // pred_check
      _
    $region59: #{bert_classifier_forward.1} parent=1 // pred_check_branch
      %59 = sbr.rel (0) target = $region61
    $region60: #{bert_classifier_forward.1} parent=1 // pred_region
      _
    $region61: #{bert_classifier_forward.1} parent=1 // pred_fallthru
      _
    // Predicated region
    $region62: #{bert_classifier_forward.1} parent=1 // pred_check
      _
    $region63: #{bert_classifier_forward.1} parent=1 // pred_check_branch
      %61 = sbr.rel (0) target = $region65
    $region64: #{bert_classifier_forward.1} parent=1 // pred_region
      _
    $region65: #{bert_classifier_forward.1} parent=1 // pred_fallthru
      _
    // Predicated region
    $region66: #{bert_classifier_forward.1} parent=1 // pred_check
      _
    $region67: #{bert_classifier_forward.1} parent=1 // pred_check_branch
      %63 = sbr.rel (0) target = $region69
    $region68: #{bert_classifier_forward.1} parent=1 // pred_region
      _
    $region69: #{bert_classifier_forward.1} parent=1 // pred_fallthru
      _
    // Predicated region
    $region70: #{bert_classifier_forward.1} parent=1 // pred_check
      _
    $region71: #{bert_classifier_forward.1} parent=1 // pred_check_branch
      %65 = sbr.rel (0) target = $region73
    $region72: #{bert_classifier_forward.1} parent=1 // pred_region
      _
    $region73: #{bert_classifier_forward.1} parent=1 // pred_fallthru
      _
    // Predicated region
    $region74: #{bert_classifier_forward.1} parent=1 // pred_check
      _
    $region75: #{bert_classifier_forward.1} parent=1 // pred_check_branch
      %67 = sbr.rel (0) target = $region77
    $region76: #{bert_classifier_forward.1} parent=1 // pred_region
      _
    $region77: #{bert_classifier_forward.1} parent=1 // pred_fallthru
      _
    // Predicated region
    $region78: #{bert_classifier_forward.1} parent=1 // pred_check
      _
    $region79: #{bert_classifier_forward.1} parent=1 // pred_check_branch
      %69 = sbr.rel (0) target = $region81
    $region80: #{bert_classifier_forward.1} parent=1 // pred_region
      _
    $region81: #{bert_classifier_forward.1} parent=1 // pred_fallthru
      _
    // Predicated region
    $region82: #{bert_classifier_forward.1} parent=1 // pred_check
      _
    $region83: #{bert_classifier_forward.1} parent=1 // pred_check_branch
      %71 = sbr.rel (0) target = $region85
    $region84: #{bert_classifier_forward.1} parent=1 // pred_region
      _
    $region85: #{bert_classifier_forward.1} parent=1 // pred_fallthru
      _
    // Predicated region
    $region86: #{bert_classifier_forward.1} parent=1 // pred_check
      _
    $region87: #{bert_classifier_forward.1} parent=1 // pred_check_branch
      %73 = sbr.rel (0) target = $region89
    $region88: #{bert_classifier_forward.1} parent=1 // pred_region
      _
    $region89: #{bert_classifier_forward.1} parent=1 // pred_fallthru
      _
    // Predicated region
    $region90: #{bert_classifier_forward.1} parent=1 // pred_check
      _
    $region91: #{bert_classifier_forward.1} parent=1 // pred_check_branch
      %75 = sbr.rel (0) target = $region93
    $region92: #{bert_classifier_forward.1} parent=1 // pred_region
      _
    $region93: #{bert_classifier_forward.1} parent=1 // pred_fallthru
      _
    // Predicated region
    $region94: #{bert_classifier_forward.1} parent=1 // pred_check
      _
    $region95: #{bert_classifier_forward.1} parent=1 // pred_check_branch
      %77 = sbr.rel (0) target = $region97
    $region96: #{bert_classifier_forward.1} parent=1 // pred_region
      _
    $region97: #{bert_classifier_forward.1} parent=1 // pred_fallthru
      _
    %v79 = vld [vmem:[%s0] sm:$0xff]
    %v80 = vld [vmem:[%s0 + $0x8] sm:$0xff]
    %v81 = vld [vmem:[%s2] sm:$0x1]
    %v82 = vld [vmem:[%s3] sm:$0x1]
    %vm83 = vcmask 261120
    %v84 = vsel %vm83, %v79, 0.0
    %85 = vadd.xlane.f32.xlu0 %v84
    %v86 = vpop.xlane.xlu0 %85
    %v87 = vsel %vm83, %v80, 0.0
    %88 = vadd.xlane.f32.xlu0 %v87
    %v89 = vpop.xlane.xlu0 %88
    %v90 = vrcp.pop 32.0
    %v91 = vmul.f32 %v86, %v90
    %v92 = vmul.f32 %v89, %v90
    %v93 = vsub.f32 %v79, %v91
    %v94 = vsub.f32 %v80, %v92
    %v95 = vmul.f32 %v93, %v93
    %v96 = vmul.f32 %v94, %v94
    %v97 = vsel %vm83, %v95, 0.0
    %98 = vadd.xlane.f32.xlu0 %v97
    %v99 = vpop.xlane.xlu0 %98
    %v100 = vsel %vm83, %v96, 0.0
    %101 = vadd.xlane.f32.xlu0 %v100
    %v102 = vpop.xlane.xlu0 %101
    %v103 = vmul.f32 %v99, %v90
    %v104 = vmul.f32 %v102, %v90
    %v105 = vadd.f32 %v103, 1e-12
    %v106 = vadd.f32 %v104, 1e-12
    %v107 = vrsqrt.pop %v105
    %v108 = vrsqrt.pop %v106
    %v109 = vmul.f32 %v93, %v107
    %v110 = vmul.f32 %v94, %v108
    %v112 = vlaneseq
    %v113 = vshrl.u32 %v112, 7
    %v114 = vsub.s32 0, %v113
    %v115 = vrot.slane %v81, %v114
    %v117 = vmul.f32 %v109, %v115
    %v118 = vmul.f32 %v110, %v115
    %v120 = vlaneseq
    %v121 = vshrl.u32 %v120, 7
    %v122 = vsub.s32 0, %v121
    %v123 = vrot.slane %v82, %v122
    %v125 = vadd.f32 %v117, %v123
    %v126 = vadd.f32 %v118, %v123
    %v127 = vld [vmem:[%s1] sm:$0x1]
    %v128 = vld [vmem:[%s1 + $0x1] sm:$0x1]
    %v129 = vld [vmem:[%s4] sm:$0xf]
    %v130 = vld [vmem:[%s4 + $0x4] sm:$0xf]
    %v131 = vld [vmem:[%s4 + $0x8] sm:$0xf]
    %v132 = vld [vmem:[%s4 + $0xc] sm:$0xf]
    %v133 = vpack.c.bf16 %v126, %v125
    %v134 = vld [vmem:[%s5] sm:$0x1]
    %v136 = vlaneseq
    %v137 = vshrl.u32 %v136, 7
    %v138 = vsub.s32 0, %v137
    %v139 = vrot.slane %v134, %v138
    %v145 = vunpack.c.l.b16 %v129
    %v146 = vunpack.c.l.b16 %v130
    %v147 = vunpack.c.l.b16 %v131
    %v148 = vunpack.c.l.b16 %v132
    %v149 = vpack.c.b16 %v146, %v145
    %v150 = vpack.c.b16 %v148, %v147
    %v154 = vsel %vm83, %v133, 0
    %156 = vmatprep.subr.bf16.mxu0 0
    %157 = vmatpush1.bf16.msra.mxu0 %v149
    %158 = vmatprep.subr.bf16.mxu0 0
    %159 = vmatpush1.bf16.msra.mxu0 %v150
    %160 = vmatprep.subr.bf16.mxu0 0
    %161 = vmatpush1.bf16.msra.mxu0 0
    %162 = vmatprep.subr.bf16.mxu0 0
    %163 = vmatpush1.bf16.msra.mxu0 0
    %164 = vmatprep.subr.bf16.mxu0 0
    %165 = vmatpush1.bf16.msra.mxu0 0
    %166 = vmatprep.subr.bf16.mxu0 0
    %167 = vmatpush1.bf16.msra.mxu0 0
    %168 = vmatprep.subr.bf16.mxu0 0
    %169 = vmatpush1.bf16.msra.mxu0 0
    %170 = vmatprep.subr.bf16.mxu0 0
    %171 = vmatpush1.bf16.msra.mxu0 0
    %172 = vmatprep.subr.bf16.mxu0 0
    %173 = vmatpush1.bf16.msra.mxu0 0
    %174 = vmatprep.subr.bf16.mxu0 0
    %175 = vmatpush1.bf16.msra.mxu0 0
    %176 = vmatprep.subr.bf16.mxu0 0
    %177 = vmatpush1.bf16.msra.mxu0 0
    %178 = vmatprep.subr.bf16.mxu0 0
    %179 = vmatpush1.bf16.msra.mxu0 0
    %180 = vmatprep.subr.bf16.mxu0 0
    %181 = vmatpush1.bf16.msra.mxu0 0
    %182 = vmatprep.subr.bf16.mxu0 0
    %183 = vmatpush1.bf16.msra.mxu0 0
    %184 = vmatprep.subr.bf16.mxu0 0
    %185 = vmatpush1.bf16.msra.mxu0 0
    %186 = vmatprep.subr.bf16.mxu0 0
    %187 = vmatpush1.bf16.msra.mxu0 0
    %188 = vmatprep.mubr.bf16.mxu0 0
    %189 = vmatmul.mubr.bf16.gmra.mrb[0].mxu0 %v154
    %v190 = vpop.f32.mrb[0].mxu0
    %v191 = vadd.f32 %v139, %v190
    %v192 = vpop.f32.mrb[0].mxu0
    %v193 = vpop.f32.mrb[0].mxu0
    %v194 = vadd.f32 %v139, %v193
    %v195 = vpop.f32.mrb[0].mxu0
    %196 = vdwg.mxu0
    %v197 = vld [vmem:[%s6] sm:$0xf]
    %v198 = vld [vmem:[%s6 + $0x4] sm:$0xf]
    %v199 = vld [vmem:[%s6 + $0x8] sm:$0xf]
    %v200 = vld [vmem:[%s6 + $0xc] sm:$0xf]
    %v201 = vld [vmem:[%s7] sm:$0x1]
    %v203 = vlaneseq
    %v204 = vshrl.u32 %v203, 7
    %v205 = vsub.s32 0, %v204
    %v206 = vrot.slane %v201, %v205
    %v212 = vunpack.c.l.b16 %v197
    %v213 = vunpack.c.l.b16 %v198
    %v214 = vunpack.c.l.b16 %v199
    %v215 = vunpack.c.l.b16 %v200
    %v216 = vpack.c.b16 %v213, %v212
    %v217 = vpack.c.b16 %v215, %v214
    %220 = vmatprep.subr.bf16.mxu0 0
    %221 = vmatpush1.bf16.msra.mxu0 %v216
    %222 = vmatprep.subr.bf16.mxu0 0
    %223 = vmatpush1.bf16.msra.mxu0 %v217
    %224 = vmatprep.subr.bf16.mxu0 0
    %225 = vmatpush1.bf16.msra.mxu0 0
    %226 = vmatprep.subr.bf16.mxu0 0
    %227 = vmatpush1.bf16.msra.mxu0 0
    %228 = vmatprep.subr.bf16.mxu0 0
    %229 = vmatpush1.bf16.msra.mxu0 0
    %230 = vmatprep.subr.bf16.mxu0 0
    %231 = vmatpush1.bf16.msra.mxu0 0
    %232 = vmatprep.subr.bf16.mxu0 0
    %233 = vmatpush1.bf16.msra.mxu0 0
    %234 = vmatprep.subr.bf16.mxu0 0
    %235 = vmatpush1.bf16.msra.mxu0 0
    %236 = vmatprep.subr.bf16.mxu0 0
    %237 = vmatpush1.bf16.msra.mxu0 0
    %238 = vmatprep.subr.bf16.mxu0 0
    %239 = vmatpush1.bf16.msra.mxu0 0
    %240 = vmatprep.subr.bf16.mxu0 0
    %241 = vmatpush1.bf16.msra.mxu0 0
    %242 = vmatprep.subr.bf16.mxu0 0
    %243 = vmatpush1.bf16.msra.mxu0 0
    %244 = vmatprep.subr.bf16.mxu0 0
    %245 = vmatpush1.bf16.msra.mxu0 0
    %246 = vmatprep.subr.bf16.mxu0 0
    %247 = vmatpush1.bf16.msra.mxu0 0
    %248 = vmatprep.subr.bf16.mxu0 0
    %249 = vmatpush1.bf16.msra.mxu0 0
    %250 = vmatprep.subr.bf16.mxu0 0
    %251 = vmatpush1.bf16.msra.mxu0 0
    %252 = vmatprep.mubr.bf16.mxu0 0
    %253 = vmatmul.mubr.bf16.gmra.mrb[0].mxu0 %v154
    %v254 = vpop.f32.mrb[0].mxu0
    %v255 = vadd.f32 %v206, %v254
    %v256 = vpop.f32.mrb[0].mxu0
    %v257 = vpop.f32.mrb[0].mxu0
    %v258 = vadd.f32 %v206, %v257
    %v259 = vpop.f32.mrb[0].mxu0
    %260 = vdwg.mxu0
    %v261 = vld [vmem:[%s8] sm:$0xf]
    %v262 = vld [vmem:[%s8 + $0x4] sm:$0xf]
    %v263 = vld [vmem:[%s8 + $0x8] sm:$0xf]
    %v264 = vld [vmem:[%s8 + $0xc] sm:$0xf]
    %v265 = vld [vmem:[%s9] sm:$0x1]
    %v267 = vlaneseq
    %v268 = vshrl.u32 %v267, 7
    %v269 = vsub.s32 0, %v268
    %v270 = vrot.slane %v265, %v269
    %v276 = vunpack.c.l.b16 %v261
    %v277 = vunpack.c.l.b16 %v262
    %v278 = vunpack.c.l.b16 %v263
    %v279 = vunpack.c.l.b16 %v264
    %v280 = vpack.c.b16 %v277, %v276
    %v281 = vpack.c.b16 %v279, %v278
    %284 = vmatprep.subr.bf16.mxu0 0
    %285 = vmatpush1.bf16.msra.mxu0 %v280
    %286 = vmatprep.subr.bf16.mxu0 0
    %287 = vmatpush1.bf16.msra.mxu0 %v281
    %288 = vmatprep.subr.bf16.mxu0 0
    %289 = vmatpush1.bf16.msra.mxu0 0
    %290 = vmatprep.subr.bf16.mxu0 0
    %291 = vmatpush1.bf16.msra.mxu0 0
    %292 = vmatprep.subr.bf16.mxu0 0
    %293 = vmatpush1.bf16.msra.mxu0 0
    %294 = vmatprep.subr.bf16.mxu0 0
    %295 = vmatpush1.bf16.msra.mxu0 0
    %296 = vmatprep.subr.bf16.mxu0 0
    %297 = vmatpush1.bf16.msra.mxu0 0
    %298 = vmatprep.subr.bf16.mxu0 0
    %299 = vmatpush1.bf16.msra.mxu0 0
    %300 = vmatprep.subr.bf16.mxu0 0
    %301 = vmatpush1.bf16.msra.mxu0 0
    %302 = vmatprep.subr.bf16.mxu0 0
    %303 = vmatpush1.bf16.msra.mxu0 0
    %304 = vmatprep.subr.bf16.mxu0 0
    %305 = vmatpush1.bf16.msra.mxu0 0
    %306 = vmatprep.subr.bf16.mxu0 0
    %307 = vmatpush1.bf16.msra.mxu0 0
    %308 = vmatprep.subr.bf16.mxu0 0
    %309 = vmatpush1.bf16.msra.mxu0 0
    %310 = vmatprep.subr.bf16.mxu0 0
    %311 = vmatpush1.bf16.msra.mxu0 0
    %312 = vmatprep.subr.bf16.mxu0 0
    %313 = vmatpush1.bf16.msra.mxu0 0
    %314 = vmatprep.subr.bf16.mxu0 0
    %315 = vmatpush1.bf16.msra.mxu0 0
    %316 = vmatprep.mubr.bf16.mxu0 0
    %317 = vmatmul.mubr.bf16.gmra.mrb[0].mxu0 %v154
    %v318 = vpop.f32.mrb[0].mxu0
    %v319 = vadd.f32 %v270, %v318
    %v320 = vpop.f32.mrb[0].mxu0
    %v321 = vpop.f32.mrb[0].mxu0
    %v322 = vadd.f32 %v270, %v321
    %v323 = vpop.f32.mrb[0].mxu0
    %324 = vdwg.mxu0
    %v325 = vpack.c.bf16 %v191, %v191
    %v326 = vpack.c.bf16 %v194, %v194
    %v327 = vpack.c.bf16 %v255, %v255
    %v328 = vpack.c.bf16 %v258, %v258
    %v331 = vlaneseq
    %v332 = vshrl.u32 %v331, 7
    %v333 = vsub.s32 0, %v332
    %v334 = vrot.slane %v127, %v333
    %v335 = vlaneseq
    %v336 = vshrl.u32 %v335, 7
    %v337 = vsub.s32 0, %v336
    %v338 = vrot.slane %v128, %v337
    %vm341 = vcmask 130048
    %v343 = vsel %vm341, %v325, 0
    %v346 = vsel %vm341, %v327, 0
    %348 = vmatprep.subr.bf16.mxu0 0
    %349 = vmatpush1.bf16.xpose.msra.mxu0 %v346
    %350 = vmatprep.subr.bf16.mxu0 0
    %351 = vmatpush1.bf16.xpose.msra.mxu0 0
    %352 = vmatprep.subr.bf16.mxu0 0
    %353 = vmatpush1.bf16.xpose.msra.mxu0 0
    %354 = vmatprep.subr.bf16.mxu0 0
    %355 = vmatpush1.bf16.xpose.msra.mxu0 0
    %356 = vmatprep.subr.bf16.mxu0 0
    %357 = vmatpush1.bf16.xpose.msra.mxu0 0
    %358 = vmatprep.subr.bf16.mxu0 0
    %359 = vmatpush1.bf16.xpose.msra.mxu0 0
    %360 = vmatprep.subr.bf16.mxu0 0
    %361 = vmatpush1.bf16.xpose.msra.mxu0 0
    %362 = vmatprep.subr.bf16.mxu0 0
    %363 = vmatpush1.bf16.xpose.msra.mxu0 0
    %364 = vmatprep.subr.bf16.mxu0 0
    %365 = vmatpush1.bf16.xpose.msra.mxu0 0
    %366 = vmatprep.subr.bf16.mxu0 0
    %367 = vmatpush1.bf16.xpose.msra.mxu0 0
    %368 = vmatprep.subr.bf16.mxu0 0
    %369 = vmatpush1.bf16.xpose.msra.mxu0 0
    %370 = vmatprep.subr.bf16.mxu0 0
    %371 = vmatpush1.bf16.xpose.msra.mxu0 0
    %372 = vmatprep.subr.bf16.mxu0 0
    %373 = vmatpush1.bf16.xpose.msra.mxu0 0
    %374 = vmatprep.subr.bf16.mxu0 0
    %375 = vmatpush1.bf16.xpose.msra.mxu0 0
    %376 = vmatprep.subr.bf16.mxu0 0
    %377 = vmatpush1.bf16.xpose.msra.mxu0 0
    %378 = vmatprep.subr.bf16.mxu0 0
    %379 = vmatpush1.bf16.xpose.msra.mxu0 0
    %380 = vmatprep.mubr.bf16.mxu0 0
    %381 = vmatmul.mubr.bf16.gmra.mrb[0].mxu0 %v343
    %v382 = vpop.f32.mrb[0].mxu0
    %v383 = vadd.f32 %v334, %v382
    %v384 = vpop.f32.mrb[0].mxu0
    %v385 = vpop.f32.mrb[0].mxu0
    %v386 = vpop.f32.mrb[0].mxu0
    %387 = vdwg.mxu0
    %v389 = vsel %vm341, %v326, 0
    %v392 = vsel %vm341, %v328, 0
    %394 = vmatprep.subr.bf16.mxu0 0
    %395 = vmatpush1.bf16.xpose.msra.mxu0 %v392
    %396 = vmatprep.subr.bf16.mxu0 0
    %397 = vmatpush1.bf16.xpose.msra.mxu0 0
    %398 = vmatprep.subr.bf16.mxu0 0
    %399 = vmatpush1.bf16.xpose.msra.mxu0 0
    %400 = vmatprep.subr.bf16.mxu0 0
    %401 = vmatpush1.bf16.xpose.msra.mxu0 0
    %402 = vmatprep.subr.bf16.mxu0 0
    %403 = vmatpush1.bf16.xpose.msra.mxu0 0
    %404 = vmatprep.subr.bf16.mxu0 0
    %405 = vmatpush1.bf16.xpose.msra.mxu0 0
    %406 = vmatprep.subr.bf16.mxu0 0
    %407 = vmatpush1.bf16.xpose.msra.mxu0 0
    %408 = vmatprep.subr.bf16.mxu0 0
    %409 = vmatpush1.bf16.xpose.msra.mxu0 0
    %410 = vmatprep.subr.bf16.mxu0 0
    %411 = vmatpush1.bf16.xpose.msra.mxu0 0
    %412 = vmatprep.subr.bf16.mxu0 0
    %413 = vmatpush1.bf16.xpose.msra.mxu0 0
    %414 = vmatprep.subr.bf16.mxu0 0
    %415 = vmatpush1.bf16.xpose.msra.mxu0 0
    %416 = vmatprep.subr.bf16.mxu0 0
    %417 = vmatpush1.bf16.xpose.msra.mxu0 0
    %418 = vmatprep.subr.bf16.mxu0 0
    %419 = vmatpush1.bf16.xpose.msra.mxu0 0
    %420 = vmatprep.subr.bf16.mxu0 0
    %421 = vmatpush1.bf16.xpose.msra.mxu0 0
    %422 = vmatprep.subr.bf16.mxu0 0
    %423 = vmatpush1.bf16.xpose.msra.mxu0 0
    %424 = vmatprep.subr.bf16.mxu0 0
    %425 = vmatpush1.bf16.xpose.msra.mxu0 0
    %426 = vmatprep.mubr.bf16.mxu0 0
    %427 = vmatmul.mubr.bf16.gmra.mrb[0].mxu0 %v389
    %v428 = vpop.f32.mrb[0].mxu0
    %v429 = vadd.f32 %v338, %v428
    %v430 = vpop.f32.mrb[0].mxu0
    %v431 = vpop.f32.mrb[0].mxu0
    %v432 = vpop.f32.mrb[0].mxu0
    %433 = vdwg.mxu0
    %v434 = vmul.f32 %v383, 1.442695
    %v435 = vpow.pop %v434
    %v436 = vmul.f32 %v429, 1.442695
    %v437 = vpow.pop %v436
    %vm438 = vcmask 64512
    %v439 = vsel %vm438, %v435, 0.0
    %440 = vadd.xlane.f32.xlu0 %v439
    %v441 = vpop.xlane.xlu0 %440
    %v442 = vsel %vm438, %v437, 0.0
    %443 = vadd.xlane.f32.xlu0 %v442
    %v444 = vpop.xlane.xlu0 %443
    %v445 = vrcp.pop %v441
    %v446 = vrcp.pop %v444
    %v447 = vmul.f32 %v435, %v445
    %v448 = vmul.f32 %v437, %v446
    %v449 = vpack.c.bf16 %v447, %v447
    %v450 = vpack.c.bf16 %v448, %v448
    %v451 = vpack.c.bf16 %v319, %v319
    %v452 = vpack.c.bf16 %v322, %v322
    %v454 = vsel %vm438, %v449, 0
    %vm456 = vcmask 1043456
    %v458 = vsel %vm456, %v451, 0
    %460 = vmatprep.subr.bf16.mxu0 0
    %461 = vmatpush1.bf16.msra.mxu0 %v458
    %462 = vmatprep.subr.bf16.mxu0 0
    %463 = vmatpush1.bf16.msra.mxu0 0
    %464 = vmatprep.subr.bf16.mxu0 0
    %465 = vmatpush1.bf16.msra.mxu0 0
    %466 = vmatprep.subr.bf16.mxu0 0
    %467 = vmatpush1.bf16.msra.mxu0 0
    %468 = vmatprep.subr.bf16.mxu0 0
    %469 = vmatpush1.bf16.msra.mxu0 0
    %470 = vmatprep.subr.bf16.mxu0 0
    %471 = vmatpush1.bf16.msra.mxu0 0
    %472 = vmatprep.subr.bf16.mxu0 0
    %473 = vmatpush1.bf16.msra.mxu0 0
    %474 = vmatprep.subr.bf16.mxu0 0
    %475 = vmatpush1.bf16.msra.mxu0 0
    %476 = vmatprep.subr.bf16.mxu0 0
    %477 = vmatpush1.bf16.msra.mxu0 0
    %478 = vmatprep.subr.bf16.mxu0 0
    %479 = vmatpush1.bf16.msra.mxu0 0
    %480 = vmatprep.subr.bf16.mxu0 0
    %481 = vmatpush1.bf16.msra.mxu0 0
    %482 = vmatprep.subr.bf16.mxu0 0
    %483 = vmatpush1.bf16.msra.mxu0 0
    %484 = vmatprep.subr.bf16.mxu0 0
    %485 = vmatpush1.bf16.msra.mxu0 0
    %486 = vmatprep.subr.bf16.mxu0 0
    %487 = vmatpush1.bf16.msra.mxu0 0
    %488 = vmatprep.subr.bf16.mxu0 0
    %489 = vmatpush1.bf16.msra.mxu0 0
    %490 = vmatprep.subr.bf16.mxu0 0
    %491 = vmatpush1.bf16.msra.mxu0 0
    %492 = vmatprep.mubr.bf16.mxu0 0
    %493 = vmatmul.mubr.bf16.gmra.mrb[0].mxu0 %v454
    %v494 = vpop.f32.mrb[0].mxu0
    %v495 = vadd.f32 0.0, %v494
    %v496 = vpop.f32.mrb[0].mxu0
    %v497 = vpop.f32.mrb[0].mxu0
    %v498 = vpop.f32.mrb[0].mxu0
    %499 = vdwg.mxu0
    %v501 = vsel %vm438, %v450, 0
    %v504 = vsel %vm456, %v452, 0
    %506 = vmatprep.subr.bf16.mxu0 0
    %507 = vmatpush1.bf16.msra.mxu0 %v504
    %508 = vmatprep.subr.bf16.mxu0 0
    %509 = vmatpush1.bf16.msra.mxu0 0
    %510 = vmatprep.subr.bf16.mxu0 0
    %511 = vmatpush1.bf16.msra.mxu0 0
    %512 = vmatprep.subr.bf16.mxu0 0
    %513 = vmatpush1.bf16.msra.mxu0 0
    %514 = vmatprep.subr.bf16.mxu0 0
    %515 = vmatpush1.bf16.msra.mxu0 0
    %516 = vmatprep.subr.bf16.mxu0 0
    %517 = vmatpush1.bf16.msra.mxu0 0
    %518 = vmatprep.subr.bf16.mxu0 0
    %519 = vmatpush1.bf16.msra.mxu0 0
    %520 = vmatprep.subr.bf16.mxu0 0
    %521 = vmatpush1.bf16.msra.mxu0 0
    %522 = vmatprep.subr.bf16.mxu0 0
    %523 = vmatpush1.bf16.msra.mxu0 0
    %524 = vmatprep.subr.bf16.mxu0 0
    %525 = vmatpush1.bf16.msra.mxu0 0
    %526 = vmatprep.subr.bf16.mxu0 0
    %527 = vmatpush1.bf16.msra.mxu0 0
    %528 = vmatprep.subr.bf16.mxu0 0
    %529 = vmatpush1.bf16.msra.mxu0 0
    %530 = vmatprep.subr.bf16.mxu0 0
    %531 = vmatpush1.bf16.msra.mxu0 0
    %532 = vmatprep.subr.bf16.mxu0 0
    %533 = vmatpush1.bf16.msra.mxu0 0
    %534 = vmatprep.subr.bf16.mxu0 0
    %535 = vmatpush1.bf16.msra.mxu0 0
    %536 = vmatprep.subr.bf16.mxu0 0
    %537 = vmatpush1.bf16.msra.mxu0 0
    %538 = vmatprep.mubr.bf16.mxu0 0
    %539 = vmatmul.mubr.bf16.gmra.mrb[0].mxu0 %v501
    %v540 = vpop.f32.mrb[0].mxu0
    %v541 = vadd.f32 0.0, %v540
    %v542 = vpop.f32.mrb[0].mxu0
    %v543 = vpop.f32.mrb[0].mxu0
    %v544 = vpop.f32.mrb[0].mxu0
    %545 = vdwg.mxu0
    %v546 = vld [vmem:[%s10] sm:$0xf]
    %v547 = vld [vmem:[%s10 + $0x4] sm:$0xf]
    %v548 = vpack.c.bf16 %v541, %v495
    %s549 = scalar_lea.vmem %s4, 16
    %v550 = vld [vmem:[%s549] sm:$0xf]
    %v551 = vld [vmem:[%s549 + $0x4] sm:$0xf]
    %v552 = vld [vmem:[%s549 + $0x8] sm:$0xf]
    %v553 = vld [vmem:[%s549 + $0xc] sm:$0xf]
    %s554 = scalar_lea.vmem %s5, 1
    %v555 = vld [vmem:[%s554] sm:$0x1]
    %v557 = vlaneseq
    %v558 = vshrl.u32 %v557, 7
    %v559 = vsub.s32 0, %v558
    %v560 = vrot.slane %v555, %v559
    %v566 = vunpack.c.l.b16 %v550
    %v567 = vunpack.c.l.b16 %v551
    %v568 = vunpack.c.l.b16 %v552
    %v569 = vunpack.c.l.b16 %v553
    %v570 = vpack.c.b16 %v567, %v566
    %v571 = vpack.c.b16 %v569, %v568
    %574 = vmatprep.subr.bf16.mxu0 0
    %575 = vmatpush1.bf16.msra.mxu0 %v570
    %576 = vmatprep.subr.bf16.mxu0 0
    %577 = vmatpush1.bf16.msra.mxu0 %v571
    %578 = vmatprep.subr.bf16.mxu0 0
    %579 = vmatpush1.bf16.msra.mxu0 0
    %580 = vmatprep.subr.bf16.mxu0 0
    %581 = vmatpush1.bf16.msra.mxu0 0
    %582 = vmatprep.subr.bf16.mxu0 0
    %583 = vmatpush1.bf16.msra.mxu0 0
    %584 = vmatprep.subr.bf16.mxu0 0
    %585 = vmatpush1.bf16.msra.mxu0 0
    %586 = vmatprep.subr.bf16.mxu0 0
    %587 = vmatpush1.bf16.msra.mxu0 0
    %588 = vmatprep.subr.bf16.mxu0 0
    %589 = vmatpush1.bf16.msra.mxu0 0
    %590 = vmatprep.subr.bf16.mxu0 0
    %591 = vmatpush1.bf16.msra.mxu0 0
    %592 = vmatprep.subr.bf16.mxu0 0
    %593 = vmatpush1.bf16.msra.mxu0 0
    %594 = vmatprep.subr.bf16.mxu0 0
    %595 = vmatpush1.bf16.msra.mxu0 0
    %596 = vmatprep.subr.bf16.mxu0 0
    %597 = vmatpush1.bf16.msra.mxu0 0
    %598 = vmatprep.subr.bf16.mxu0 0
    %599 = vmatpush1.bf16.msra.mxu0 0
    %600 = vmatprep.subr.bf16.mxu0 0
    %601 = vmatpush1.bf16.msra.mxu0 0
    %602 = vmatprep.subr.bf16.mxu0 0
    %603 = vmatpush1.bf16.msra.mxu0 0
    %604 = vmatprep.subr.bf16.mxu0 0
    %605 = vmatpush1.bf16.msra.mxu0 0
    %606 = vmatprep.mubr.bf16.mxu0 0
    %607 = vmatmul.mubr.bf16.gmra.mrb[0].mxu0 %v154
    %v608 = vpop.f32.mrb[0].mxu0
    %v609 = vadd.f32 %v560, %v608
    %v610 = vpop.f32.mrb[0].mxu0
    %v611 = vpop.f32.mrb[0].mxu0
    %v612 = vadd.f32 %v560, %v611
    %v613 = vpop.f32.mrb[0].mxu0
    %614 = vdwg.mxu0
    %s615 = scalar_lea.vmem %s6, 16
    %v616 = vld [vmem:[%s615] sm:$0xf]
    %v617 = vld [vmem:[%s615 + $0x4] sm:$0xf]
    %v618 = vld [vmem:[%s615 + $0x8] sm:$0xf]
    %v619 = vld [vmem:[%s615 + $0xc] sm:$0xf]
    %s620 = scalar_lea.vmem %s7, 1
    %v621 = vld [vmem:[%s620] sm:$0x1]
    %v623 = vlaneseq
    %v624 = vshrl.u32 %v623, 7
    %v625 = vsub.s32 0, %v624
    %v626 = vrot.slane %v621, %v625
    %v632 = vunpack.c.l.b16 %v616
    %v633 = vunpack.c.l.b16 %v617
    %v634 = vunpack.c.l.b16 %v618
    %v635 = vunpack.c.l.b16 %v619
    %v636 = vpack.c.b16 %v633, %v632
    %v637 = vpack.c.b16 %v635, %v634
    %640 = vmatprep.subr.bf16.mxu0 0
    %641 = vmatpush1.bf16.msra.mxu0 %v636
    %642 = vmatprep.subr.bf16.mxu0 0
    %643 = vmatpush1.bf16.msra.mxu0 %v637
    %644 = vmatprep.subr.bf16.mxu0 0
    %645 = vmatpush1.bf16.msra.mxu0 0
    %646 = vmatprep.subr.bf16.mxu0 0
    %647 = vmatpush1.bf16.msra.mxu0 0
    %648 = vmatprep.subr.bf16.mxu0 0
    %649 = vmatpush1.bf16.msra.mxu0 0
    %650 = vmatprep.subr.bf16.mxu0 0
    %651 = vmatpush1.bf16.msra.mxu0 0
    %652 = vmatprep.subr.bf16.mxu0 0
    %653 = vmatpush1.bf16.msra.mxu0 0
    %654 = vmatprep.subr.bf16.mxu0 0
    %655 = vmatpush1.bf16.msra.mxu0 0
    %656 = vmatprep.subr.bf16.mxu0 0
    %657 = vmatpush1.bf16.msra.mxu0 0
    %658 = vmatprep.subr.bf16.mxu0 0
    %659 = vmatpush1.bf16.msra.mxu0 0
    %660 = vmatprep.subr.bf16.mxu0 0
    %661 = vmatpush1.bf16.msra.mxu0 0
    %662 = vmatprep.subr.bf16.mxu0 0
    %663 = vmatpush1.bf16.msra.mxu0 0
    %664 = vmatprep.subr.bf16.mxu0 0
    %665 = vmatpush1.bf16.msra.mxu0 0
    %666 = vmatprep.subr.bf16.mxu0 0
    %667 = vmatpush1.bf16.msra.mxu0 0
    %668 = vmatprep.subr.bf16.mxu0 0
    %669 = vmatpush1.bf16.msra.mxu0 0
    %670 = vmatprep.subr.bf16.mxu0 0
    %671 = vmatpush1.bf16.msra.mxu0 0
    %672 = vmatprep.mubr.bf16.mxu0 0
    %673 = vmatmul.mubr.bf16.gmra.mrb[0].mxu0 %v154
    %v674 = vpop.f32.mrb[0].mxu0
    %v675 = vadd.f32 %v626, %v674
    %v676 = vpop.f32.mrb[0].mxu0
    %v677 = vpop.f32.mrb[0].mxu0
    %v678 = vadd.f32 %v626, %v677
    %v679 = vpop.f32.mrb[0].mxu0
    %680 = vdwg.mxu0
    %s681 = scalar_lea.vmem %s8, 16
    %v682 = vld [vmem:[%s681] sm:$0xf]
    %v683 = vld [vmem:[%s681 + $0x4] sm:$0xf]
    %v684 = vld [vmem:[%s681 + $0x8] sm:$0xf]
    %v685 = vld [vmem:[%s681 + $0xc] sm:$0xf]
    %s686 = scalar_lea.vmem %s9, 1
    %v687 = vld [vmem:[%s686] sm:$0x1]
    %v689 = vlaneseq
    %v690 = vshrl.u32 %v689, 7
    %v691 = vsub.s32 0, %v690
    %v692 = vrot.slane %v687, %v691
    %v698 = vunpack.c.l.b16 %v682
    %v699 = vunpack.c.l.b16 %v683
    %v700 = vunpack.c.l.b16 %v684
    %v701 = vunpack.c.l.b16 %v685
    %v702 = vpack.c.b16 %v699, %v698
    %v703 = vpack.c.b16 %v701, %v700
    %706 = vmatprep.subr.bf16.mxu0 0
    %707 = vmatpush1.bf16.msra.mxu0 %v702
    %708 = vmatprep.subr.bf16.mxu0 0
    %709 = vmatpush1.bf16.msra.mxu0 %v703
    %710 = vmatprep.subr.bf16.mxu0 0
    %711 = vmatpush1.bf16.msra.mxu0 0
    %712 = vmatprep.subr.bf16.mxu0 0
    %713 = vmatpush1.bf16.msra.mxu0 0
    %714 = vmatprep.subr.bf16.mxu0 0
    %715 = vmatpush1.bf16.msra.mxu0 0
    %716 = vmatprep.subr.bf16.mxu0 0
    %717 = vmatpush1.bf16.msra.mxu0 0
    %718 = vmatprep.subr.bf16.mxu0 0
    %719 = vmatpush1.bf16.msra.mxu0 0
    %720 = vmatprep.subr.bf16.mxu0 0
    %721 = vmatpush1.bf16.msra.mxu0 0
    %722 = vmatprep.subr.bf16.mxu0 0
    %723 = vmatpush1.bf16.msra.mxu0 0
    %724 = vmatprep.subr.bf16.mxu0 0
    %725 = vmatpush1.bf16.msra.mxu0 0
    %726 = vmatprep.subr.bf16.mxu0 0
    %727 = vmatpush1.bf16.msra.mxu0 0
    %728 = vmatprep.subr.bf16.mxu0 0
    %729 = vmatpush1.bf16.msra.mxu0 0
    %730 = vmatprep.subr.bf16.mxu0 0
    %731 = vmatpush1.bf16.msra.mxu0 0
    %732 = vmatprep.subr.bf16.mxu0 0
    %733 = vmatpush1.bf16.msra.mxu0 0
    %734 = vmatprep.subr.bf16.mxu0 0
    %735 = vmatpush1.bf16.msra.mxu0 0
    %736 = vmatprep.subr.bf16.mxu0 0
    %737 = vmatpush1.bf16.msra.mxu0 0
    %738 = vmatprep.mubr.bf16.mxu0 0
    %739 = vmatmul.mubr.bf16.gmra.mrb[0].mxu0 %v154
    %v740 = vpop.f32.mrb[0].mxu0
    %v741 = vadd.f32 %v692, %v740
    %v742 = vpop.f32.mrb[0].mxu0
    %v743 = vpop.f32.mrb[0].mxu0
    %v744 = vadd.f32 %v692, %v743
    %v745 = vpop.f32.mrb[0].mxu0
    %746 = vdwg.mxu0
    %v747 = vpack.c.bf16 %v609, %v609
    %v748 = vpack.c.bf16 %v612, %v612
    %v749 = vpack.c.bf16 %v675, %v675
    %v750 = vpack.c.bf16 %v678, %v678
    %v752 = vsel %vm341, %v747, 0
    %v755 = vsel %vm341, %v749, 0
    %757 = vmatprep.subr.bf16.mxu0 0
    %758 = vmatpush1.bf16.xpose.msra.mxu0 %v755
    %759 = vmatprep.subr.bf16.mxu0 0
    %760 = vmatpush1.bf16.xpose.msra.mxu0 0
    %761 = vmatprep.subr.bf16.mxu0 0
    %762 = vmatpush1.bf16.xpose.msra.mxu0 0
    %763 = vmatprep.subr.bf16.mxu0 0
    %764 = vmatpush1.bf16.xpose.msra.mxu0 0
    %765 = vmatprep.subr.bf16.mxu0 0
    %766 = vmatpush1.bf16.xpose.msra.mxu0 0
    %767 = vmatprep.subr.bf16.mxu0 0
    %768 = vmatpush1.bf16.xpose.msra.mxu0 0
    %769 = vmatprep.subr.bf16.mxu0 0
    %770 = vmatpush1.bf16.xpose.msra.mxu0 0
    %771 = vmatprep.subr.bf16.mxu0 0
    %772 = vmatpush1.bf16.xpose.msra.mxu0 0
    %773 = vmatprep.subr.bf16.mxu0 0
    %774 = vmatpush1.bf16.xpose.msra.mxu0 0
    %775 = vmatprep.subr.bf16.mxu0 0
    %776 = vmatpush1.bf16.xpose.msra.mxu0 0
    %777 = vmatprep.subr.bf16.mxu0 0
    %778 = vmatpush1.bf16.xpose.msra.mxu0 0
    %779 = vmatprep.subr.bf16.mxu0 0
    %780 = vmatpush1.bf16.xpose.msra.mxu0 0
    %781 = vmatprep.subr.bf16.mxu0 0
    %782 = vmatpush1.bf16.xpose.msra.mxu0 0
    %783 = vmatprep.subr.bf16.mxu0 0
    %784 = vmatpush1.bf16.xpose.msra.mxu0 0
    %785 = vmatprep.subr.bf16.mxu0 0
    %786 = vmatpush1.bf16.xpose.msra.mxu0 0
    %787 = vmatprep.subr.bf16.mxu0 0
    %788 = vmatpush1.bf16.xpose.msra.mxu0 0
    %789 = vmatprep.mubr.bf16.mxu0 0
    %790 = vmatmul.mubr.bf16.gmra.mrb[0].mxu0 %v752
    %v791 = vpop.f32.mrb[0].mxu0
    %v792 = vadd.f32 %v334, %v791
    %v793 = vpop.f32.mrb[0].mxu0
    %v794 = vpop.f32.mrb[0].mxu0
    %v795 = vpop.f32.mrb[0].mxu0
    %796 = vdwg.mxu0
    %v798 = vsel %vm341, %v748, 0
    %v801 = vsel %vm341, %v750, 0
    %803 = vmatprep.subr.bf16.mxu0 0
    %804 = vmatpush1.bf16.xpose.msra.mxu0 %v801
    %805 = vmatprep.subr.bf16.mxu0 0
    %806 = vmatpush1.bf16.xpose.msra.mxu0 0
    %807 = vmatprep.subr.bf16.mxu0 0
    %808 = vmatpush1.bf16.xpose.msra.mxu0 0
    %809 = vmatprep.subr.bf16.mxu0 0
    %810 = vmatpush1.bf16.xpose.msra.mxu0 0
    %811 = vmatprep.subr.bf16.mxu0 0
    %812 = vmatpush1.bf16.xpose.msra.mxu0 0
    %813 = vmatprep.subr.bf16.mxu0 0
    %814 = vmatpush1.bf16.xpose.msra.mxu0 0
    %815 = vmatprep.subr.bf16.mxu0 0
    %816 = vmatpush1.bf16.xpose.msra.mxu0 0
    %817 = vmatprep.subr.bf16.mxu0 0
    %818 = vmatpush1.bf16.xpose.msra.mxu0 0
    %819 = vmatprep.subr.bf16.mxu0 0
    %820 = vmatpush1.bf16.xpose.msra.mxu0 0
    %821 = vmatprep.subr.bf16.mxu0 0
    %822 = vmatpush1.bf16.xpose.msra.mxu0 0
    %823 = vmatprep.subr.bf16.mxu0 0
    %824 = vmatpush1.bf16.xpose.msra.mxu0 0
    %825 = vmatprep.subr.bf16.mxu0 0
    %826 = vmatpush1.bf16.xpose.msra.mxu0 0
    %827 = vmatprep.subr.bf16.mxu0 0
    %828 = vmatpush1.bf16.xpose.msra.mxu0 0
    %829 = vmatprep.subr.bf16.mxu0 0
    %830 = vmatpush1.bf16.xpose.msra.mxu0 0
    %831 = vmatprep.subr.bf16.mxu0 0
    %832 = vmatpush1.bf16.xpose.msra.mxu0 0
    %833 = vmatprep.subr.bf16.mxu0 0
    %834 = vmatpush1.bf16.xpose.msra.mxu0 0
    %835 = vmatprep.mubr.bf16.mxu0 0
    %836 = vmatmul.mubr.bf16.gmra.mrb[0].mxu0 %v798
    %v837 = vpop.f32.mrb[0].mxu0
    %v838 = vadd.f32 %v338, %v837
    %v839 = vpop.f32.mrb[0].mxu0
    %v840 = vpop.f32.mrb[0].mxu0
    %v841 = vpop.f32.mrb[0].mxu0
    %842 = vdwg.mxu0
    %v843 = vmul.f32 %v792, 1.442695
    %v844 = vpow.pop %v843
    %v845 = vmul.f32 %v838, 1.442695
    %v846 = vpow.pop %v845
    %v847 = vsel %vm438, %v844, 0.0
    %848 = vadd.xlane.f32.xlu0 %v847
    %v849 = vpop.xlane.xlu0 %848
    %v850 = vsel %vm438, %v846, 0.0
    %851 = vadd.xlane.f32.xlu0 %v850
    %v852 = vpop.xlane.xlu0 %851
    %v853 = vrcp.pop %v849
    %v854 = vrcp.pop %v852
    %v855 = vmul.f32 %v844, %v853
    %v856 = vmul.f32 %v846, %v854
    %v857 = vpack.c.bf16 %v855, %v855
    %v858 = vpack.c.bf16 %v856, %v856
    %v859 = vpack.c.bf16 %v741, %v741
    %v860 = vpack.c.bf16 %v744, %v744
    %v862 = vsel %vm438, %v857, 0
    %v865 = vsel %vm456, %v859, 0
    %867 = vmatprep.subr.bf16.mxu0 0
    %868 = vmatpush1.bf16.msra.mxu0 %v865
    %869 = vmatprep.subr.bf16.mxu0 0
    %870 = vmatpush1.bf16.msra.mxu0 0
    %871 = vmatprep.subr.bf16.mxu0 0
    %872 = vmatpush1.bf16.msra.mxu0 0
    %873 = vmatprep.subr.bf16.mxu0 0
    %874 = vmatpush1.bf16.msra.mxu0 0
    %875 = vmatprep.subr.bf16.mxu0 0
    %876 = vmatpush1.bf16.msra.mxu0 0
    %877 = vmatprep.subr.bf16.mxu0 0
    %878 = vmatpush1.bf16.msra.mxu0 0
    %879 = vmatprep.subr.bf16.mxu0 0
    %880 = vmatpush1.bf16.msra.mxu0 0
    %881 = vmatprep.subr.bf16.mxu0 0
    %882 = vmatpush1.bf16.msra.mxu0 0
    %883 = vmatprep.subr.bf16.mxu0 0
    %884 = vmatpush1.bf16.msra.mxu0 0
    %885 = vmatprep.subr.bf16.mxu0 0
    %886 = vmatpush1.bf16.msra.mxu0 0
    %887 = vmatprep.subr.bf16.mxu0 0
    %888 = vmatpush1.bf16.msra.mxu0 0
    %889 = vmatprep.subr.bf16.mxu0 0
    %890 = vmatpush1.bf16.msra.mxu0 0
    %891 = vmatprep.subr.bf16.mxu0 0
    %892 = vmatpush1.bf16.msra.mxu0 0
    %893 = vmatprep.subr.bf16.mxu0 0
    %894 = vmatpush1.bf16.msra.mxu0 0
    %895 = vmatprep.subr.bf16.mxu0 0
    %896 = vmatpush1.bf16.msra.mxu0 0
    %897 = vmatprep.subr.bf16.mxu0 0
    %898 = vmatpush1.bf16.msra.mxu0 0
    %899 = vmatprep.mubr.bf16.mxu0 0
    %900 = vmatmul.mubr.bf16.gmra.mrb[0].mxu0 %v862
    %v901 = vpop.f32.mrb[0].mxu0
    %v902 = vadd.f32 0.0, %v901
    %v903 = vpop.f32.mrb[0].mxu0
    %v904 = vpop.f32.mrb[0].mxu0
    %v905 = vpop.f32.mrb[0].mxu0
    %906 = vdwg.mxu0
    %v908 = vsel %vm438, %v858, 0
    %v911 = vsel %vm456, %v860, 0
    %913 = vmatprep.subr.bf16.mxu0 0
    %914 = vmatpush1.bf16.msra.mxu0 %v911
    %915 = vmatprep.subr.bf16.mxu0 0
    %916 = vmatpush1.bf16.msra.mxu0 0
    %917 = vmatprep.subr.bf16.mxu0 0
    %918 = vmatpush1.bf16.msra.mxu0 0
    %919 = vmatprep.subr.bf16.mxu0 0
    %920 = vmatpush1.bf16.msra.mxu0 0
    %921 = vmatprep.subr.bf16.mxu0 0
    %922 = vmatpush1.bf16.msra.mxu0 0
    %923 = vmatprep.subr.bf16.mxu0 0
    %924 = vmatpush1.bf16.msra.mxu0 0
    %925 = vmatprep.subr.bf16.mxu0 0
    %926 = vmatpush1.bf16.msra.mxu0 0
    %927 = vmatprep.subr.bf16.mxu0 0
    %928 = vmatpush1.bf16.msra.mxu0 0
    %929 = vmatprep.subr.bf16.mxu0 0
    %930 = vmatpush1.bf16.msra.mxu0 0
    %931 = vmatprep.subr.bf16.mxu0 0
    %932 = vmatpush1.bf16.msra.mxu0 0
    %933 = vmatprep.subr.bf16.mxu0 0
    %934 = vmatpush1.bf16.msra.mxu0 0
    %935 = vmatprep.subr.bf16.mxu0 0
    %936 = vmatpush1.bf16.msra.mxu0 0
    %937 = vmatprep.subr.bf16.mxu0 0
    %938 = vmatpush1.bf16.msra.mxu0 0
    %939 = vmatprep.subr.bf16.mxu0 0
    %940 = vmatpush1.bf16.msra.mxu0 0
    %941 = vmatprep.subr.bf16.mxu0 0
    %942 = vmatpush1.bf16.msra.mxu0 0
    %943 = vmatprep.subr.bf16.mxu0 0
    %944 = vmatpush1.bf16.msra.mxu0 0
    %945 = vmatprep.mubr.bf16.mxu0 0
    %946 = vmatmul.mubr.bf16.gmra.mrb[0].mxu0 %v908
    %v947 = vpop.f32.mrb[0].mxu0
    %v948 = vadd.f32 0.0, %v947
    %v949 = vpop.f32.mrb[0].mxu0
    %v950 = vpop.f32.mrb[0].mxu0
    %v951 = vpop.f32.mrb[0].mxu0
    %952 = vdwg.mxu0
    %s953 = scalar_lea.vmem %s10, 8
    %v954 = vld [vmem:[%s953] sm:$0xf]
    %v955 = vld [vmem:[%s953 + $0x4] sm:$0xf]
    %v956 = vpack.c.bf16 %v948, %v902
    %v959 = vunpack.c.l.b16 %v954
    %v960 = vunpack.c.l.b16 %v955
    %v961 = vpack.c.b16 %v960, %v959
    %v964 = vsel %vm341, %v956, 0
    %966 = vmatprep.subr.bf16.mxu0 0
    %967 = vmatpush1.bf16.msra.mxu0 %v961
    %968 = vmatprep.subr.bf16.mxu0 0
    %969 = vmatpush1.bf16.msra.mxu0 0
    %970 = vmatprep.subr.bf16.mxu0 0
    %971 = vmatpush1.bf16.msra.mxu0 0
    %972 = vmatprep.subr.bf16.mxu0 0
    %973 = vmatpush1.bf16.msra.mxu0 0
    %974 = vmatprep.subr.bf16.mxu0 0
    %975 = vmatpush1.bf16.msra.mxu0 0
    %976 = vmatprep.subr.bf16.mxu0 0
    %977 = vmatpush1.bf16.msra.mxu0 0
    %978 = vmatprep.subr.bf16.mxu0 0
    %979 = vmatpush1.bf16.msra.mxu0 0
    %980 = vmatprep.subr.bf16.mxu0 0
    %981 = vmatpush1.bf16.msra.mxu0 0
    %982 = vmatprep.subr.bf16.mxu0 0
    %983 = vmatpush1.bf16.msra.mxu0 0
    %984 = vmatprep.subr.bf16.mxu0 0
    %985 = vmatpush1.bf16.msra.mxu0 0
    %986 = vmatprep.subr.bf16.mxu0 0
    %987 = vmatpush1.bf16.msra.mxu0 0
    %988 = vmatprep.subr.bf16.mxu0 0
    %989 = vmatpush1.bf16.msra.mxu0 0
    %990 = vmatprep.subr.bf16.mxu0 0
    %991 = vmatpush1.bf16.msra.mxu0 0
    %992 = vmatprep.subr.bf16.mxu0 0
    %993 = vmatpush1.bf16.msra.mxu0 0
    %994 = vmatprep.subr.bf16.mxu0 0
    %995 = vmatpush1.bf16.msra.mxu0 0
    %996 = vmatprep.subr.bf16.mxu0 0
    %997 = vmatpush1.bf16.msra.mxu0 0
    %998 = vmatprep.mubr.bf16.mxu0 0
    %999 = vmatmul.mubr.bf16.gmra.mrb[0].mxu0 %v964
    %v1000 = vpop.f32.mrb[0].mxu0
    %v1001 = vadd.f32 0.0, %v1000
    %v1002 = vpop.f32.mrb[0].mxu0
    %v1003 = vpop.f32.mrb[0].mxu0
    %v1004 = vadd.f32 0.0, %v1003
    %v1005 = vpop.f32.mrb[0].mxu0
    %1006 = vdwg.mxu0
    %v1009 = vunpack.c.l.b16 %v546
    %v1010 = vunpack.c.l.b16 %v547
    %v1011 = vpack.c.b16 %v1010, %v1009
    %v1014 = vsel %vm341, %v548, 0
    %1016 = vmatprep.subr.bf16.mxu0 0
    %1017 = vmatpush1.bf16.msra.mxu0 %v1011
    %1018 = vmatprep.subr.bf16.mxu0 0
    %1019 = vmatpush1.bf16.msra.mxu0 0
    %1020 = vmatprep.subr.bf16.mxu0 0
    %1021 = vmatpush1.bf16.msra.mxu0 0
    %1022 = vmatprep.subr.bf16.mxu0 0
    %1023 = vmatpush1.bf16.msra.mxu0 0
    %1024 = vmatprep.subr.bf16.mxu0 0
    %1025 = vmatpush1.bf16.msra.mxu0 0
    %1026 = vmatprep.subr.bf16.mxu0 0
    %1027 = vmatpush1.bf16.msra.mxu0 0
    %1028 = vmatprep.subr.bf16.mxu0 0
    %1029 = vmatpush1.bf16.msra.mxu0 0
    %1030 = vmatprep.subr.bf16.mxu0 0
    %1031 = vmatpush1.bf16.msra.mxu0 0
    %1032 = vmatprep.subr.bf16.mxu0 0
    %1033 = vmatpush1.bf16.msra.mxu0 0
    %1034 = vmatprep.subr.bf16.mxu0 0
    %1035 = vmatpush1.bf16.msra.mxu0 0
    %1036 = vmatprep.subr.bf16.mxu0 0
    %1037 = vmatpush1.bf16.msra.mxu0 0
    %1038 = vmatprep.subr.bf16.mxu0 0
    %1039 = vmatpush1.bf16.msra.mxu0 0
    %1040 = vmatprep.subr.bf16.mxu0 0
    %1041 = vmatpush1.bf16.msra.mxu0 0
    %1042 = vmatprep.subr.bf16.mxu0 0
    %1043 = vmatpush1.bf16.msra.mxu0 0
    %1044 = vmatprep.subr.bf16.mxu0 0
    %1045 = vmatpush1.bf16.msra.mxu0 0
    %1046 = vmatprep.subr.bf16.mxu0 0
    %1047 = vmatpush1.bf16.msra.mxu0 0
    %1048 = vmatprep.mubr.bf16.mxu0 0
    %1049 = vmatmul.mubr.bf16.gmra.mrb[0].mxu0 %v1014
    %v1050 = vpop.f32.mrb[0].mxu0
    %v1051 = vadd.f32 %v1001, %v1050
    %v1052 = vpop.f32.mrb[0].mxu0
    %v1053 = vpop.f32.mrb[0].mxu0
    %v1054 = vadd.f32 %v1004, %v1053
    %v1055 = vpop.f32.mrb[0].mxu0
    %1056 = vdwg.mxu0
    %v1057 = vld [vmem:[%s11] sm:$0x1]
    %v1059 = vlaneseq
    %v1060 = vshrl.u32 %v1059, 7
    %v1061 = vsub.s32 0, %v1060
    %v1062 = vrot.slane %v1057, %v1061
    %v1064 = vadd.f32 %v1051, %v1062
    %v1065 = vadd.f32 %v1054, %v1062
    %v1066 = vadd.f32 %v1064, %v125
    %v1067 = vadd.f32 %v1065, %v126
    %v1068 = vld [vmem:[%s12] sm:$0x1]
    %v1069 = vld [vmem:[%s13] sm:$0x1]
    %v1070 = vsel %vm83, %v1066, 0.0
    %1071 = vadd.xlane.f32.xlu0 %v1070
    %v1072 = vpop.xlane.xlu0 %1071
    %v1073 = vsel %vm83, %v1067, 0.0
    %1074 = vadd.xlane.f32.xlu0 %v1073
    %v1075 = vpop.xlane.xlu0 %1074
    %v1076 = vmul.f32 %v1072, %v90
    %v1077 = vmul.f32 %v1075, %v90
    %v1078 = vsub.f32 %v1066, %v1076
    %v1079 = vsub.f32 %v1067, %v1077
    %v1080 = vmul.f32 %v1078, %v1078
    %v1081 = vmul.f32 %v1079, %v1079
    %v1082 = vsel %vm83, %v1080, 0.0
    %1083 = vadd.xlane.f32.xlu0 %v1082
    %v1084 = vpop.xlane.xlu0 %1083
    %v1085 = vsel %vm83, %v1081, 0.0
    %1086 = vadd.xlane.f32.xlu0 %v1085
    %v1087 = vpop.xlane.xlu0 %1086
    %v1088 = vmul.f32 %v1084, %v90
    %v1089 = vmul.f32 %v1087, %v90
    %v1090 = vadd.f32 %v1088, 1e-12
    %v1091 = vadd.f32 %v1089, 1e-12
    %v1092 = vrsqrt.pop %v1090
    %v1093 = vrsqrt.pop %v1091
    %v1094 = vmul.f32 %v1078, %v1092
    %v1095 = vmul.f32 %v1079, %v1093
    %v1097 = vlaneseq
    %v1098 = vshrl.u32 %v1097, 7
    %v1099 = vsub.s32 0, %v1098
    %v1100 = vrot.slane %v1068, %v1099
    %v1102 = vmul.f32 %v1094, %v1100
    %v1103 = vmul.f32 %v1095, %v1100
    %v1105 = vlaneseq
    %v1106 = vshrl.u32 %v1105, 7
    %v1107 = vsub.s32 0, %v1106
    %v1108 = vrot.slane %v1069, %v1107
    %v1110 = vadd.f32 %v1102, %v1108
    %v1111 = vadd.f32 %v1103, %v1108
    %v1112 = vld [vmem:[%s14] sm:$0xf]
    %v1113 = vld [vmem:[%s14 + $0x4] sm:$0xf]
    %v1114 = vld [vmem:[%s14 + $0x8] sm:$0xf]
    %v1115 = vld [vmem:[%s14 + $0xc] sm:$0xf]
    %v1116 = vpack.c.bf16 %v1111, %v1110
    %v1117 = vld [vmem:[%s15] sm:$0x1]
    %v1119 = vlaneseq
    %v1120 = vshrl.u32 %v1119, 7
    %v1121 = vsub.s32 0, %v1120
    %v1122 = vrot.slane %v1117, %v1121
    %v1128 = vunpack.c.l.b16 %v1112
    %v1129 = vunpack.c.l.b16 %v1113
    %v1130 = vunpack.c.l.b16 %v1114
    %v1131 = vunpack.c.l.b16 %v1115
    %v1132 = vpack.c.b16 %v1129, %v1128
    %v1133 = vpack.c.b16 %v1131, %v1130
    %v1137 = vsel %vm83, %v1116, 0
    %1139 = vmatprep.subr.bf16.mxu0 0
    %1140 = vmatpush1.bf16.msra.mxu0 %v1132
    %1141 = vmatprep.subr.bf16.mxu0 0
    %1142 = vmatpush1.bf16.msra.mxu0 %v1133
    %1143 = vmatprep.subr.bf16.mxu0 0
    %1144 = vmatpush1.bf16.msra.mxu0 0
    %1145 = vmatprep.subr.bf16.mxu0 0
    %1146 = vmatpush1.bf16.msra.mxu0 0
    %1147 = vmatprep.subr.bf16.mxu0 0
    %1148 = vmatpush1.bf16.msra.mxu0 0
    %1149 = vmatprep.subr.bf16.mxu0 0
    %1150 = vmatpush1.bf16.msra.mxu0 0
    %1151 = vmatprep.subr.bf16.mxu0 0
    %1152 = vmatpush1.bf16.msra.mxu0 0
    %1153 = vmatprep.subr.bf16.mxu0 0
    %1154 = vmatpush1.bf16.msra.mxu0 0
    %1155 = vmatprep.subr.bf16.mxu0 0
    %1156 = vmatpush1.bf16.msra.mxu0 0
    %1157 = vmatprep.subr.bf16.mxu0 0
    %1158 = vmatpush1.bf16.msra.mxu0 0
    %1159 = vmatprep.subr.bf16.mxu0 0
    %1160 = vmatpush1.bf16.msra.mxu0 0
    %1161 = vmatprep.subr.bf16.mxu0 0
    %1162 = vmatpush1.bf16.msra.mxu0 0
    %1163 = vmatprep.subr.bf16.mxu0 0
    %1164 = vmatpush1.bf16.msra.mxu0 0
    %1165 = vmatprep.subr.bf16.mxu0 0
    %1166 = vmatpush1.bf16.msra.mxu0 0
    %1167 = vmatprep.subr.bf16.mxu0 0
    %1168 = vmatpush1.bf16.msra.mxu0 0
    %1169 = vmatprep.subr.bf16.mxu0 0
    %1170 = vmatpush1.bf16.msra.mxu0 0
    %1171 = vmatprep.mubr.bf16.mxu0 0
    %1172 = vmatmul.mubr.bf16.gmra.mrb[0].mxu0 %v1137
    %v1173 = vpop.f32.mrb[0].mxu0
    %v1174 = vadd.f32 %v1122, %v1173
    %v1175 = vpop.f32.mrb[0].mxu0
    %v1176 = vpop.f32.mrb[0].mxu0
    %v1177 = vadd.f32 %v1122, %v1176
    %v1178 = vpop.f32.mrb[0].mxu0
    %1179 = vdwg.mxu0
    %v1180 = vmul.f32 %v1174, 0.5
    %v1181 = vmul.f32 %v1177, 0.5
    %v1182 = vmul.f32 %v1174, 0.044715
    %v1183 = vmul.f32 %v1177, 0.044715
    %v1184 = vmul.f32 %v1182, %v1174
    %v1185 = vmul.f32 %v1183, %v1177
    %v1186 = vmul.f32 %v1184, %v1174
    %v1187 = vmul.f32 %v1185, %v1177
    %v1188 = vadd.f32 %v1174, %v1186
    %v1189 = vadd.f32 %v1177, %v1187
    %v1190 = vmul.f32 %v1188, 0.7978845
    %v1191 = vmul.f32 %v1189, 0.7978845
    %v1192 = vtanh.pop %v1190
    %v1193 = vtanh.pop %v1191
    %v1194 = vadd.f32 %v1192, 1.0
    %v1195 = vadd.f32 %v1193, 1.0
    %v1196 = vmul.f32 %v1180, %v1194
    %v1197 = vmul.f32 %v1181, %v1195
    %v1198 = vld [vmem:[%s16] sm:$0xf]
    %v1199 = vld [vmem:[%s16 + $0x4] sm:$0xf]
    %v1200 = vld [vmem:[%s16 + $0x8] sm:$0xf]
    %v1201 = vld [vmem:[%s16 + $0xc] sm:$0xf]
    %v1202 = vld [vmem:[%s16 + $0x10] sm:$0xf]
    %v1203 = vld [vmem:[%s16 + $0x14] sm:$0xf]
    %v1204 = vld [vmem:[%s16 + $0x18] sm:$0xf]
    %v1205 = vld [vmem:[%s16 + $0x1c] sm:$0xf]
    %v1206 = vpack.c.bf16 %v1197, %v1196
    %v1207 = vld [vmem:[%s17] sm:$0x1]
    %v1209 = vlaneseq
    %v1210 = vshrl.u32 %v1209, 7
    %v1211 = vsub.s32 0, %v1210
    %v1212 = vrot.slane %v1207, %v1211
    %v1222 = vunpack.c.l.b16 %v1198
    %v1223 = vunpack.c.l.b16 %v1199
    %v1224 = vunpack.c.l.b16 %v1200
    %v1225 = vunpack.c.l.b16 %v1201
    %v1226 = vunpack.c.l.b16 %v1202
    %v1227 = vunpack.c.l.b16 %v1203
    %v1228 = vunpack.c.l.b16 %v1204
    %v1229 = vunpack.c.l.b16 %v1205
    %v1230 = vpack.c.b16 %v1223, %v1222
    %v1231 = vpack.c.b16 %v1225, %v1224
    %v1232 = vpack.c.b16 %v1227, %v1226
    %v1233 = vpack.c.b16 %v1229, %v1228
    %vm1238 = vcmask 523264
    %v1240 = vsel %vm1238, %v1206, 0
    %1242 = vmatprep.subr.bf16.mxu0 0
    %1243 = vmatpush1.bf16.msra.mxu0 %v1230
    %1244 = vmatprep.subr.bf16.mxu0 0
    %1245 = vmatpush1.bf16.msra.mxu0 %v1231
    %1246 = vmatprep.subr.bf16.mxu0 0
    %1247 = vmatpush1.bf16.msra.mxu0 %v1232
    %1248 = vmatprep.subr.bf16.mxu0 0
    %1249 = vmatpush1.bf16.msra.mxu0 %v1233
    %1250 = vmatprep.subr.bf16.mxu0 0
    %1251 = vmatpush1.bf16.msra.mxu0 0
    %1252 = vmatprep.subr.bf16.mxu0 0
    %1253 = vmatpush1.bf16.msra.mxu0 0
    %1254 = vmatprep.subr.bf16.mxu0 0
    %1255 = vmatpush1.bf16.msra.mxu0 0
    %1256 = vmatprep.subr.bf16.mxu0 0
    %1257 = vmatpush1.bf16.msra.mxu0 0
    %1258 = vmatprep.subr.bf16.mxu0 0
    %1259 = vmatpush1.bf16.msra.mxu0 0
    %1260 = vmatprep.subr.bf16.mxu0 0
    %1261 = vmatpush1.bf16.msra.mxu0 0
    %1262 = vmatprep.subr.bf16.mxu0 0
    %1263 = vmatpush1.bf16.msra.mxu0 0
    %1264 = vmatprep.subr.bf16.mxu0 0
    %1265 = vmatpush1.bf16.msra.mxu0 0
    %1266 = vmatprep.subr.bf16.mxu0 0
    %1267 = vmatpush1.bf16.msra.mxu0 0
    %1268 = vmatprep.subr.bf16.mxu0 0
    %1269 = vmatpush1.bf16.msra.mxu0 0
    %1270 = vmatprep.subr.bf16.mxu0 0
    %1271 = vmatpush1.bf16.msra.mxu0 0
    %1272 = vmatprep.subr.bf16.mxu0 0
    %1273 = vmatpush1.bf16.msra.mxu0 0
    %1274 = vmatprep.mubr.bf16.mxu0 0
    %1275 = vmatmul.mubr.bf16.gmra.mrb[0].mxu0 %v1240
    %v1276 = vpop.f32.mrb[0].mxu0
    %v1277 = vadd.f32 %v1212, %v1276
    %v1278 = vpop.f32.mrb[0].mxu0
    %v1279 = vpop.f32.mrb[0].mxu0
    %v1280 = vadd.f32 %v1212, %v1279
    %v1281 = vpop.f32.mrb[0].mxu0
    %1282 = vdwg.mxu0
    %v1283 = vadd.f32 %v1277, %v1110
    %v1284 = vadd.f32 %v1280, %v1111
    %v1285 = vld [vmem:[%s18] sm:$0x1]
    %v1286 = vld [vmem:[%s19] sm:$0x1]
    %v1287 = vsel %vm83, %v1283, 0.0
    %1288 = vadd.xlane.f32.xlu0 %v1287
    %v1289 = vpop.xlane.xlu0 %1288
    %v1290 = vsel %vm83, %v1284, 0.0
    %1291 = vadd.xlane.f32.xlu0 %v1290
    %v1292 = vpop.xlane.xlu0 %1291
    %v1293 = vmul.f32 %v1289, %v90
    %v1294 = vmul.f32 %v1292, %v90
    %v1295 = vsub.f32 %v1283, %v1293
    %v1296 = vsub.f32 %v1284, %v1294
    %v1297 = vmul.f32 %v1295, %v1295
    %v1298 = vmul.f32 %v1296, %v1296
    %v1299 = vsel %vm83, %v1297, 0.0
    %1300 = vadd.xlane.f32.xlu0 %v1299
    %v1301 = vpop.xlane.xlu0 %1300
    %v1302 = vsel %vm83, %v1298, 0.0
    %1303 = vadd.xlane.f32.xlu0 %v1302
    %v1304 = vpop.xlane.xlu0 %1303
    %v1305 = vmul.f32 %v1301, %v90
    %v1306 = vmul.f32 %v1304, %v90
    %v1307 = vadd.f32 %v1305, 1e-12
    %v1308 = vadd.f32 %v1306, 1e-12
    %v1309 = vrsqrt.pop %v1307
    %v1310 = vrsqrt.pop %v1308
    %v1311 = vmul.f32 %v1295, %v1309
    %v1312 = vmul.f32 %v1296, %v1310
    %v1314 = vlaneseq
    %v1315 = vshrl.u32 %v1314, 7
    %v1316 = vsub.s32 0, %v1315
    %v1317 = vrot.slane %v1285, %v1316
    %v1319 = vmul.f32 %v1311, %v1317
    %v1320 = vmul.f32 %v1312, %v1317
    %v1322 = vlaneseq
    %v1323 = vshrl.u32 %v1322, 7
    %v1324 = vsub.s32 0, %v1323
    %v1325 = vrot.slane %v1286, %v1324
    %v1327 = vadd.f32 %v1319, %v1325
    %v1328 = vadd.f32 %v1320, %v1325
    %s1329 = scalar_lea.vmem %s4, 32
    %v1330 = vld [vmem:[%s1329] sm:$0xf]
    %v1331 = vld [vmem:[%s1329 + $0x4] sm:$0xf]
    %v1332 = vld [vmem:[%s1329 + $0x8] sm:$0xf]
    %v1333 = vld [vmem:[%s1329 + $0xc] sm:$0xf]
    %v1334 = vpack.c.bf16 %v1328, %v1327
    %s1335 = scalar_lea.vmem %s5, 2
    %v1336 = vld [vmem:[%s1335] sm:$0x1]
    %v1338 = vlaneseq
    %v1339 = vshrl.u32 %v1338, 7
    %v1340 = vsub.s32 0, %v1339
    %v1341 = vrot.slane %v1336, %v1340
    %v1347 = vunpack.c.l.b16 %v1330
    %v1348 = vunpack.c.l.b16 %v1331
    %v1349 = vunpack.c.l.b16 %v1332
    %v1350 = vunpack.c.l.b16 %v1333
    %v1351 = vpack.c.b16 %v1348, %v1347
    %v1352 = vpack.c.b16 %v1350, %v1349
    %v1356 = vsel %vm83, %v1334, 0
    %1358 = vmatprep.subr.bf16.mxu0 0
    %1359 = vmatpush1.bf16.msra.mxu0 %v1351
    %1360 = vmatprep.subr.bf16.mxu0 0
    %1361 = vmatpush1.bf16.msra.mxu0 %v1352
    %1362 = vmatprep.subr.bf16.mxu0 0
    %1363 = vmatpush1.bf16.msra.mxu0 0
    %1364 = vmatprep.subr.bf16.mxu0 0
    %1365 = vmatpush1.bf16.msra.mxu0 0
    %1366 = vmatprep.subr.bf16.mxu0 0
    %1367 = vmatpush1.bf16.msra.mxu0 0
    %1368 = vmatprep.subr.bf16.mxu0 0
    %1369 = vmatpush1.bf16.msra.mxu0 0
    %1370 = vmatprep.subr.bf16.mxu0 0
    %1371 = vmatpush1.bf16.msra.mxu0 0
    %1372 = vmatprep.subr.bf16.mxu0 0
    %1373 = vmatpush1.bf16.msra.mxu0 0
    %1374 = vmatprep.subr.bf16.mxu0 0
    %1375 = vmatpush1.bf16.msra.mxu0 0
    %1376 = vmatprep.subr.bf16.mxu0 0
    %1377 = vmatpush1.bf16.msra.mxu0 0
    %1378 = vmatprep.subr.bf16.mxu0 0
    %1379 = vmatpush1.bf16.msra.mxu0 0
    %1380 = vmatprep.subr.bf16.mxu0 0
    %1381 = vmatpush1.bf16.msra.mxu0 0
    %1382 = vmatprep.subr.bf16.mxu0 0
    %1383 = vmatpush1.bf16.msra.mxu0 0
    %1384 = vmatprep.subr.bf16.mxu0 0
    %1385 = vmatpush1.bf16.msra.mxu0 0
    %1386 = vmatprep.subr.bf16.mxu0 0
    %1387 = vmatpush1.bf16.msra.mxu0 0
    %1388 = vmatprep.subr.bf16.mxu0 0
    %1389 = vmatpush1.bf16.msra.mxu0 0
    %1390 = vmatprep.mubr.bf16.mxu0 0
    %1391 = vmatmul.mubr.bf16.gmra.mrb[0].mxu0 %v1356
    %v1392 = vpop.f32.mrb[0].mxu0
    %v1393 = vadd.f32 %v1341, %v1392
    %v1394 = vpop.f32.mrb[0].mxu0
    %v1395 = vpop.f32.mrb[0].mxu0
    %v1396 = vadd.f32 %v1341, %v1395
    %v1397 = vpop.f32.mrb[0].mxu0
    %1398 = vdwg.mxu0
    %s1399 = scalar_lea.vmem %s6, 32
    %v1400 = vld [vmem:[%s1399] sm:$0xf]
    %v1401 = vld [vmem:[%s1399 + $0x4] sm:$0xf]
    %v1402 = vld [vmem:[%s1399 + $0x8] sm:$0xf]
    %v1403 = vld [vmem:[%s1399 + $0xc] sm:$0xf]
    %s1404 = scalar_lea.vmem %s7, 2
    %v1405 = vld [vmem:[%s1404] sm:$0x1]
    %v1407 = vlaneseq
    %v1408 = vshrl.u32 %v1407, 7
    %v1409 = vsub.s32 0, %v1408
    %v1410 = vrot.slane %v1405, %v1409
    %v1416 = vunpack.c.l.b16 %v1400
    %v1417 = vunpack.c.l.b16 %v1401
    %v1418 = vunpack.c.l.b16 %v1402
    %v1419 = vunpack.c.l.b16 %v1403
    %v1420 = vpack.c.b16 %v1417, %v1416
    %v1421 = vpack.c.b16 %v1419, %v1418
    %1424 = vmatprep.subr.bf16.mxu0 0
    %1425 = vmatpush1.bf16.msra.mxu0 %v1420
    %1426 = vmatprep.subr.bf16.mxu0 0
    %1427 = vmatpush1.bf16.msra.mxu0 %v1421
    %1428 = vmatprep.subr.bf16.mxu0 0
    %1429 = vmatpush1.bf16.msra.mxu0 0
    %1430 = vmatprep.subr.bf16.mxu0 0
    %1431 = vmatpush1.bf16.msra.mxu0 0
    %1432 = vmatprep.subr.bf16.mxu0 0
    %1433 = vmatpush1.bf16.msra.mxu0 0
    %1434 = vmatprep.subr.bf16.mxu0 0
    %1435 = vmatpush1.bf16.msra.mxu0 0
    %1436 = vmatprep.subr.bf16.mxu0 0
    %1437 = vmatpush1.bf16.msra.mxu0 0
    %1438 = vmatprep.subr.bf16.mxu0 0
    %1439 = vmatpush1.bf16.msra.mxu0 0
    %1440 = vmatprep.subr.bf16.mxu0 0
    %1441 = vmatpush1.bf16.msra.mxu0 0
    %1442 = vmatprep.subr.bf16.mxu0 0
    %1443 = vmatpush1.bf16.msra.mxu0 0
    %1444 = vmatprep.subr.bf16.mxu0 0
    %1445 = vmatpush1.bf16.msra.mxu0 0
    %1446 = vmatprep.subr.bf16.mxu0 0
    %1447 = vmatpush1.bf16.msra.mxu0 0
    %1448 = vmatprep.subr.bf16.mxu0 0
    %1449 = vmatpush1.bf16.msra.mxu0 0
    %1450 = vmatprep.subr.bf16.mxu0 0
    %1451 = vmatpush1.bf16.msra.mxu0 0
    %1452 = vmatprep.subr.bf16.mxu0 0
    %1453 = vmatpush1.bf16.msra.mxu0 0
    %1454 = vmatprep.subr.bf16.mxu0 0
    %1455 = vmatpush1.bf16.msra.mxu0 0
    %1456 = vmatprep.mubr.bf16.mxu0 0
    %1457 = vmatmul.mubr.bf16.gmra.mrb[0].mxu0 %v1356
    %v1458 = vpop.f32.mrb[0].mxu0
    %v1459 = vadd.f32 %v1410, %v1458
    %v1460 = vpop.f32.mrb[0].mxu0
    %v1461 = vpop.f32.mrb[0].mxu0
    %v1462 = vadd.f32 %v1410, %v1461
    %v1463 = vpop.f32.mrb[0].mxu0
    %1464 = vdwg.mxu0
    %s1465 = scalar_lea.vmem %s8, 32
    %v1466 = vld [vmem:[%s1465] sm:$0xf]
    %v1467 = vld [vmem:[%s1465 + $0x4] sm:$0xf]
    %v1468 = vld [vmem:[%s1465 + $0x8] sm:$0xf]
    %v1469 = vld [vmem:[%s1465 + $0xc] sm:$0xf]
    %s1470 = scalar_lea.vmem %s9, 2
    %v1471 = vld [vmem:[%s1470] sm:$0x1]
    %v1473 = vlaneseq
    %v1474 = vshrl.u32 %v1473, 7
    %v1475 = vsub.s32 0, %v1474
    %v1476 = vrot.slane %v1471, %v1475
    %v1482 = vunpack.c.l.b16 %v1466
    %v1483 = vunpack.c.l.b16 %v1467
    %v1484 = vunpack.c.l.b16 %v1468
    %v1485 = vunpack.c.l.b16 %v1469
    %v1486 = vpack.c.b16 %v1483, %v1482
    %v1487 = vpack.c.b16 %v1485, %v1484
    %1490 = vmatprep.subr.bf16.mxu0 0
    %1491 = vmatpush1.bf16.msra.mxu0 %v1486
    %1492 = vmatprep.subr.bf16.mxu0 0
    %1493 = vmatpush1.bf16.msra.mxu0 %v1487
    %1494 = vmatprep.subr.bf16.mxu0 0
    %1495 = vmatpush1.bf16.msra.mxu0 0
    %1496 = vmatprep.subr.bf16.mxu0 0
    %1497 = vmatpush1.bf16.msra.mxu0 0
    %1498 = vmatprep.subr.bf16.mxu0 0
    %1499 = vmatpush1.bf16.msra.mxu0 0
    %1500 = vmatprep.subr.bf16.mxu0 0
    %1501 = vmatpush1.bf16.msra.mxu0 0
    %1502 = vmatprep.subr.bf16.mxu0 0
    %1503 = vmatpush1.bf16.msra.mxu0 0
    %1504 = vmatprep.subr.bf16.mxu0 0
    %1505 = vmatpush1.bf16.msra.mxu0 0
    %1506 = vmatprep.subr.bf16.mxu0 0
    %1507 = vmatpush1.bf16.msra.mxu0 0
    %1508 = vmatprep.subr.bf16.mxu0 0
    %1509 = vmatpush1.bf16.msra.mxu0 0
    %1510 = vmatprep.subr.bf16.mxu0 0
    %1511 = vmatpush1.bf16.msra.mxu0 0
    %1512 = vmatprep.subr.bf16.mxu0 0
    %1513 = vmatpush1.bf16.msra.mxu0 0
    %1514 = vmatprep.subr.bf16.mxu0 0
    %1515 = vmatpush1.bf16.msra.mxu0 0
    %1516 = vmatprep.subr.bf16.mxu0 0
    %1517 = vmatpush1.bf16.msra.mxu0 0
    %1518 = vmatprep.subr.bf16.mxu0 0
    %1519 = vmatpush1.bf16.msra.mxu0 0
    %1520 = vmatprep.subr.bf16.mxu0 0
    %1521 = vmatpush1.bf16.msra.mxu0 0
    %1522 = vmatprep.mubr.bf16.mxu0 0
    %1523 = vmatmul.mubr.bf16.gmra.mrb[0].mxu0 %v1356
    %v1524 = vpop.f32.mrb[0].mxu0
    %v1525 = vadd.f32 %v1476, %v1524
    %v1526 = vpop.f32.mrb[0].mxu0
    %v1527 = vpop.f32.mrb[0].mxu0
    %v1528 = vadd.f32 %v1476, %v1527
    %v1529 = vpop.f32.mrb[0].mxu0
    %1530 = vdwg.mxu0
    %v1531 = vpack.c.bf16 %v1393, %v1393
    %v1532 = vpack.c.bf16 %v1396, %v1396
    %v1533 = vpack.c.bf16 %v1459, %v1459
    %v1534 = vpack.c.bf16 %v1462, %v1462
    %v1536 = vsel %vm341, %v1531, 0
    %v1539 = vsel %vm341, %v1533, 0
    %1541 = vmatprep.subr.bf16.mxu0 0
    %1542 = vmatpush1.bf16.xpose.msra.mxu0 %v1539
    %1543 = vmatprep.subr.bf16.mxu0 0
    %1544 = vmatpush1.bf16.xpose.msra.mxu0 0
    %1545 = vmatprep.subr.bf16.mxu0 0
    %1546 = vmatpush1.bf16.xpose.msra.mxu0 0
    %1547 = vmatprep.subr.bf16.mxu0 0
    %1548 = vmatpush1.bf16.xpose.msra.mxu0 0
    %1549 = vmatprep.subr.bf16.mxu0 0
    %1550 = vmatpush1.bf16.xpose.msra.mxu0 0
    %1551 = vmatprep.subr.bf16.mxu0 0
    %1552 = vmatpush1.bf16.xpose.msra.mxu0 0
    %1553 = vmatprep.subr.bf16.mxu0 0
    %1554 = vmatpush1.bf16.xpose.msra.mxu0 0
    %1555 = vmatprep.subr.bf16.mxu0 0
    %1556 = vmatpush1.bf16.xpose.msra.mxu0 0
    %1557 = vmatprep.subr.bf16.mxu0 0
    %1558 = vmatpush1.bf16.xpose.msra.mxu0 0
    %1559 = vmatprep.subr.bf16.mxu0 0
    %1560 = vmatpush1.bf16.xpose.msra.mxu0 0
    %1561 = vmatprep.subr.bf16.mxu0 0
    %1562 = vmatpush1.bf16.xpose.msra.mxu0 0
    %1563 = vmatprep.subr.bf16.mxu0 0
    %1564 = vmatpush1.bf16.xpose.msra.mxu0 0
    %1565 = vmatprep.subr.bf16.mxu0 0
    %1566 = vmatpush1.bf16.xpose.msra.mxu0 0
    %1567 = vmatprep.subr.bf16.mxu0 0
    %1568 = vmatpush1.bf16.xpose.msra.mxu0 0
    %1569 = vmatprep.subr.bf16.mxu0 0
    %1570 = vmatpush1.bf16.xpose.msra.mxu0 0
    %1571 = vmatprep.subr.bf16.mxu0 0
    %1572 = vmatpush1.bf16.xpose.msra.mxu0 0
    %1573 = vmatprep.mubr.bf16.mxu0 0
    %1574 = vmatmul.mubr.bf16.gmra.mrb[0].mxu0 %v1536
    %v1575 = vpop.f32.mrb[0].mxu0
    %v1576 = vadd.f32 %v334, %v1575
    %v1577 = vpop.f32.mrb[0].mxu0
    %v1578 = vpop.f32.mrb[0].mxu0
    %v1579 = vpop.f32.mrb[0].mxu0
    %1580 = vdwg.mxu0
    %v1582 = vsel %vm341, %v1532, 0
    %v1585 = vsel %vm341, %v1534, 0
    %1587 = vmatprep.subr.bf16.mxu0 0
    %1588 = vmatpush1.bf16.xpose.msra.mxu0 %v1585
    %1589 = vmatprep.subr.bf16.mxu0 0
    %1590 = vmatpush1.bf16.xpose.msra.mxu0 0
    %1591 = vmatprep.subr.bf16.mxu0 0
    %1592 = vmatpush1.bf16.xpose.msra.mxu0 0
    %1593 = vmatprep.subr.bf16.mxu0 0
    %1594 = vmatpush1.bf16.xpose.msra.mxu0 0
    %1595 = vmatprep.subr.bf16.mxu0 0
    %1596 = vmatpush1.bf16.xpose.msra.mxu0 0
    %1597 = vmatprep.subr.bf16.mxu0 0
    %1598 = vmatpush1.bf16.xpose.msra.mxu0 0
    %1599 = vmatprep.subr.bf16.mxu0 0
    %1600 = vmatpush1.bf16.xpose.msra.mxu0 0
    %1601 = vmatprep.subr.bf16.mxu0 0
    %1602 = vmatpush1.bf16.xpose.msra.mxu0 0
    %1603 = vmatprep.subr.bf16.mxu0 0
    %1604 = vmatpush1.bf16.xpose.msra.mxu0 0
    %1605 = vmatprep.subr.bf16.mxu0 0
    %1606 = vmatpush1.bf16.xpose.msra.mxu0 0
    %1607 = vmatprep.subr.bf16.mxu0 0
    %1608 = vmatpush1.bf16.xpose.msra.mxu0 0
    %1609 = vmatprep.subr.bf16.mxu0 0
    %1610 = vmatpush1.bf16.xpose.msra.mxu0 0
    %1611 = vmatprep.subr.bf16.mxu0 0
    %1612 = vmatpush1.bf16.xpose.msra.mxu0 0
    %1613 = vmatprep.subr.bf16.mxu0 0
    %1614 = vmatpush1.bf16.xpose.msra.mxu0 0
    %1615 = vmatprep.subr.bf16.mxu0 0
    %1616 = vmatpush1.bf16.xpose.msra.mxu0 0
    %1617 = vmatprep.subr.bf16.mxu0 0
    %1618 = vmatpush1.bf16.xpose.msra.mxu0 0
    %1619 = vmatprep.mubr.bf16.mxu0 0
    %1620 = vmatmul.mubr.bf16.gmra.mrb[0].mxu0 %v1582
    %v1621 = vpop.f32.mrb[0].mxu0
    %v1622 = vadd.f32 %v338, %v1621
    %v1623 = vpop.f32.mrb[0].mxu0
    %v1624 = vpop.f32.mrb[0].mxu0
    %v1625 = vpop.f32.mrb[0].mxu0
    %1626 = vdwg.mxu0
    %v1627 = vmul.f32 %v1576, 1.442695
    %v1628 = vpow.pop %v1627
    %v1629 = vmul.f32 %v1622, 1.442695
    %v1630 = vpow.pop %v1629
    %v1631 = vsel %vm438, %v1628, 0.0
    %1632 = vadd.xlane.f32.xlu0 %v1631
    %v1633 = vpop.xlane.xlu0 %1632
    %v1634 = vsel %vm438, %v1630, 0.0
    %1635 = vadd.xlane.f32.xlu0 %v1634
    %v1636 = vpop.xlane.xlu0 %1635
    %v1637 = vrcp.pop %v1633
    %v1638 = vrcp.pop %v1636
    %v1639 = vmul.f32 %v1628, %v1637
    %v1640 = vmul.f32 %v1630, %v1638
    %v1641 = vpack.c.bf16 %v1639, %v1639
    %v1642 = vpack.c.bf16 %v1640, %v1640
    %v1643 = vpack.c.bf16 %v1525, %v1525
    %v1644 = vpack.c.bf16 %v1528, %v1528
    %v1646 = vsel %vm438, %v1641, 0
    %v1649 = vsel %vm456, %v1643, 0
    %1651 = vmatprep.subr.bf16.mxu0 0
    %1652 = vmatpush1.bf16.msra.mxu0 %v1649
    %1653 = vmatprep.subr.bf16.mxu0 0
    %1654 = vmatpush1.bf16.msra.mxu0 0
    %1655 = vmatprep.subr.bf16.mxu0 0
    %1656 = vmatpush1.bf16.msra.mxu0 0
    %1657 = vmatprep.subr.bf16.mxu0 0
    %1658 = vmatpush1.bf16.msra.mxu0 0
    %1659 = vmatprep.subr.bf16.mxu0 0
    %1660 = vmatpush1.bf16.msra.mxu0 0
    %1661 = vmatprep.subr.bf16.mxu0 0
    %1662 = vmatpush1.bf16.msra.mxu0 0
    %1663 = vmatprep.subr.bf16.mxu0 0
    %1664 = vmatpush1.bf16.msra.mxu0 0
    %1665 = vmatprep.subr.bf16.mxu0 0
    %1666 = vmatpush1.bf16.msra.mxu0 0
    %1667 = vmatprep.subr.bf16.mxu0 0
    %1668 = vmatpush1.bf16.msra.mxu0 0
    %1669 = vmatprep.subr.bf16.mxu0 0
    %1670 = vmatpush1.bf16.msra.mxu0 0
    %1671 = vmatprep.subr.bf16.mxu0 0
    %1672 = vmatpush1.bf16.msra.mxu0 0
    %1673 = vmatprep.subr.bf16.mxu0 0
    %1674 = vmatpush1.bf16.msra.mxu0 0
    %1675 = vmatprep.subr.bf16.mxu0 0
    %1676 = vmatpush1.bf16.msra.mxu0 0
    %1677 = vmatprep.subr.bf16.mxu0 0
    %1678 = vmatpush1.bf16.msra.mxu0 0
    %1679 = vmatprep.subr.bf16.mxu0 0
    %1680 = vmatpush1.bf16.msra.mxu0 0
    %1681 = vmatprep.subr.bf16.mxu0 0
    %1682 = vmatpush1.bf16.msra.mxu0 0
    %1683 = vmatprep.mubr.bf16.mxu0 0
    %1684 = vmatmul.mubr.bf16.gmra.mrb[0].mxu0 %v1646
    %v1685 = vpop.f32.mrb[0].mxu0
    %v1686 = vadd.f32 0.0, %v1685
    %v1687 = vpop.f32.mrb[0].mxu0
    %v1688 = vpop.f32.mrb[0].mxu0
    %v1689 = vpop.f32.mrb[0].mxu0
    %1690 = vdwg.mxu0
    %v1692 = vsel %vm438, %v1642, 0
    %v1695 = vsel %vm456, %v1644, 0
    %1697 = vmatprep.subr.bf16.mxu0 0
    %1698 = vmatpush1.bf16.msra.mxu0 %v1695
    %1699 = vmatprep.subr.bf16.mxu0 0
    %1700 = vmatpush1.bf16.msra.mxu0 0
    %1701 = vmatprep.subr.bf16.mxu0 0
    %1702 = vmatpush1.bf16.msra.mxu0 0
    %1703 = vmatprep.subr.bf16.mxu0 0
    %1704 = vmatpush1.bf16.msra.mxu0 0
    %1705 = vmatprep.subr.bf16.mxu0 0
    %1706 = vmatpush1.bf16.msra.mxu0 0
    %1707 = vmatprep.subr.bf16.mxu0 0
    %1708 = vmatpush1.bf16.msra.mxu0 0
    %1709 = vmatprep.subr.bf16.mxu0 0
    %1710 = vmatpush1.bf16.msra.mxu0 0
    %1711 = vmatprep.subr.bf16.mxu0 0
    %1712 = vmatpush1.bf16.msra.mxu0 0
    %1713 = vmatprep.subr.bf16.mxu0 0
    %1714 = vmatpush1.bf16.msra.mxu0 0
    %1715 = vmatprep.subr.bf16.mxu0 0
    %1716 = vmatpush1.bf16.msra.mxu0 0
    %1717 = vmatprep.subr.bf16.mxu0 0
    %1718 = vmatpush1.bf16.msra.mxu0 0
    %1719 = vmatprep.subr.bf16.mxu0 0
    %1720 = vmatpush1.bf16.msra.mxu0 0
    %1721 = vmatprep.subr.bf16.mxu0 0
    %1722 = vmatpush1.bf16.msra.mxu0 0
    %1723 = vmatprep.subr.bf16.mxu0 0
    %1724 = vmatpush1.bf16.msra.mxu0 0
    %1725 = vmatprep.subr.bf16.mxu0 0
    %1726 = vmatpush1.bf16.msra.mxu0 0
    %1727 = vmatprep.subr.bf16.mxu0 0
    %1728 = vmatpush1.bf16.msra.mxu0 0
    %1729 = vmatprep.mubr.bf16.mxu0 0
    %1730 = vmatmul.mubr.bf16.gmra.mrb[0].mxu0 %v1692
    %v1731 = vpop.f32.mrb[0].mxu0
    %v1732 = vadd.f32 0.0, %v1731
    %v1733 = vpop.f32.mrb[0].mxu0
    %v1734 = vpop.f32.mrb[0].mxu0
    %v1735 = vpop.f32.mrb[0].mxu0
    %1736 = vdwg.mxu0
    %s1737 = scalar_lea.vmem %s10, 16
    %v1738 = vld [vmem:[%s1737] sm:$0xf]
    %v1739 = vld [vmem:[%s1737 + $0x4] sm:$0xf]
    %v1740 = vpack.c.bf16 %v1732, %v1686
    %s1741 = scalar_lea.vmem %s4, 48
    %v1742 = vld [vmem:[%s1741] sm:$0xf]
    %v1743 = vld [vmem:[%s1741 + $0x4] sm:$0xf]
    %v1744 = vld [vmem:[%s1741 + $0x8] sm:$0xf]
    %v1745 = vld [vmem:[%s1741 + $0xc] sm:$0xf]
    %s1746 = scalar_lea.vmem %s5, 3
    %v1747 = vld [vmem:[%s1746] sm:$0x1]
    %v1749 = vlaneseq
    %v1750 = vshrl.u32 %v1749, 7
    %v1751 = vsub.s32 0, %v1750
    %v1752 = vrot.slane %v1747, %v1751
    %v1758 = vunpack.c.l.b16 %v1742
    %v1759 = vunpack.c.l.b16 %v1743
    %v1760 = vunpack.c.l.b16 %v1744
    %v1761 = vunpack.c.l.b16 %v1745
    %v1762 = vpack.c.b16 %v1759, %v1758
    %v1763 = vpack.c.b16 %v1761, %v1760
    %1766 = vmatprep.subr.bf16.mxu0 0
    %1767 = vmatpush1.bf16.msra.mxu0 %v1762
    %1768 = vmatprep.subr.bf16.mxu0 0
    %1769 = vmatpush1.bf16.msra.mxu0 %v1763
    %1770 = vmatprep.subr.bf16.mxu0 0
    %1771 = vmatpush1.bf16.msra.mxu0 0
    %1772 = vmatprep.subr.bf16.mxu0 0
    %1773 = vmatpush1.bf16.msra.mxu0 0
    %1774 = vmatprep.subr.bf16.mxu0 0
    %1775 = vmatpush1.bf16.msra.mxu0 0
    %1776 = vmatprep.subr.bf16.mxu0 0
    %1777 = vmatpush1.bf16.msra.mxu0 0
    %1778 = vmatprep.subr.bf16.mxu0 0
    %1779 = vmatpush1.bf16.msra.mxu0 0
    %1780 = vmatprep.subr.bf16.mxu0 0
    %1781 = vmatpush1.bf16.msra.mxu0 0
    %1782 = vmatprep.subr.bf16.mxu0 0
    %1783 = vmatpush1.bf16.msra.mxu0 0
    %1784 = vmatprep.subr.bf16.mxu0 0
    %1785 = vmatpush1.bf16.msra.mxu0 0
    %1786 = vmatprep.subr.bf16.mxu0 0
    %1787 = vmatpush1.bf16.msra.mxu0 0
    %1788 = vmatprep.subr.bf16.mxu0 0
    %1789 = vmatpush1.bf16.msra.mxu0 0
    %1790 = vmatprep.subr.bf16.mxu0 0
    %1791 = vmatpush1.bf16.msra.mxu0 0
    %1792 = vmatprep.subr.bf16.mxu0 0
    %1793 = vmatpush1.bf16.msra.mxu0 0
    %1794 = vmatprep.subr.bf16.mxu0 0
    %1795 = vmatpush1.bf16.msra.mxu0 0
    %1796 = vmatprep.subr.bf16.mxu0 0
    %1797 = vmatpush1.bf16.msra.mxu0 0
    %1798 = vmatprep.mubr.bf16.mxu0 0
    %1799 = vmatmul.mubr.bf16.gmra.mrb[0].mxu0 %v1356
    %v1800 = vpop.f32.mrb[0].mxu0
    %v1801 = vadd.f32 %v1752, %v1800
    %v1802 = vpop.f32.mrb[0].mxu0
    %v1803 = vpop.f32.mrb[0].mxu0
    %v1804 = vadd.f32 %v1752, %v1803
    %v1805 = vpop.f32.mrb[0].mxu0
    %1806 = vdwg.mxu0
    %s1807 = scalar_lea.vmem %s6, 48
    %v1808 = vld [vmem:[%s1807] sm:$0xf]
    %v1809 = vld [vmem:[%s1807 + $0x4] sm:$0xf]
    %v1810 = vld [vmem:[%s1807 + $0x8] sm:$0xf]
    %v1811 = vld [vmem:[%s1807 + $0xc] sm:$0xf]
    %s1812 = scalar_lea.vmem %s7, 3
    %v1813 = vld [vmem:[%s1812] sm:$0x1]
    %v1815 = vlaneseq
    %v1816 = vshrl.u32 %v1815, 7
    %v1817 = vsub.s32 0, %v1816
    %v1818 = vrot.slane %v1813, %v1817
    %v1824 = vunpack.c.l.b16 %v1808
    %v1825 = vunpack.c.l.b16 %v1809
    %v1826 = vunpack.c.l.b16 %v1810
    %v1827 = vunpack.c.l.b16 %v1811
    %v1828 = vpack.c.b16 %v1825, %v1824
    %v1829 = vpack.c.b16 %v1827, %v1826
    %1832 = vmatprep.subr.bf16.mxu0 0
    %1833 = vmatpush1.bf16.msra.mxu0 %v1828
    %1834 = vmatprep.subr.bf16.mxu0 0
    %1835 = vmatpush1.bf16.msra.mxu0 %v1829
    %1836 = vmatprep.subr.bf16.mxu0 0
    %1837 = vmatpush1.bf16.msra.mxu0 0
    %1838 = vmatprep.subr.bf16.mxu0 0
    %1839 = vmatpush1.bf16.msra.mxu0 0
    %1840 = vmatprep.subr.bf16.mxu0 0
    %1841 = vmatpush1.bf16.msra.mxu0 0
    %1842 = vmatprep.subr.bf16.mxu0 0
    %1843 = vmatpush1.bf16.msra.mxu0 0
    %1844 = vmatprep.subr.bf16.mxu0 0
    %1845 = vmatpush1.bf16.msra.mxu0 0
    %1846 = vmatprep.subr.bf16.mxu0 0
    %1847 = vmatpush1.bf16.msra.mxu0 0
    %1848 = vmatprep.subr.bf16.mxu0 0
    %1849 = vmatpush1.bf16.msra.mxu0 0
    %1850 = vmatprep.subr.bf16.mxu0 0
    %1851 = vmatpush1.bf16.msra.mxu0 0
    %1852 = vmatprep.subr.bf16.mxu0 0
    %1853 = vmatpush1.bf16.msra.mxu0 0
    %1854 = vmatprep.subr.bf16.mxu0 0
    %1855 = vmatpush1.bf16.msra.mxu0 0
    %1856 = vmatprep.subr.bf16.mxu0 0
    %1857 = vmatpush1.bf16.msra.mxu0 0
    %1858 = vmatprep.subr.bf16.mxu0 0
    %1859 = vmatpush1.bf16.msra.mxu0 0
    %1860 = vmatprep.subr.bf16.mxu0 0
    %1861 = vmatpush1.bf16.msra.mxu0 0
    %1862 = vmatprep.subr.bf16.mxu0 0
    %1863 = vmatpush1.bf16.msra.mxu0 0
    %1864 = vmatprep.mubr.bf16.mxu0 0
    %1865 = vmatmul.mubr.bf16.gmra.mrb[0].mxu0 %v1356
    %v1866 = vpop.f32.mrb[0].mxu0
    %v1867 = vadd.f32 %v1818, %v1866
    %v1868 = vpop.f32.mrb[0].mxu0
    %v1869 = vpop.f32.mrb[0].mxu0
    %v1870 = vadd.f32 %v1818, %v1869
    %v1871 = vpop.f32.mrb[0].mxu0
    %1872 = vdwg.mxu0
    %s1873 = scalar_lea.vmem %s8, 48
    %v1874 = vld [vmem:[%s1873] sm:$0xf]
    %v1875 = vld [vmem:[%s1873 + $0x4] sm:$0xf]
    %v1876 = vld [vmem:[%s1873 + $0x8] sm:$0xf]
    %v1877 = vld [vmem:[%s1873 + $0xc] sm:$0xf]
    %s1878 = scalar_lea.vmem %s9, 3
    %v1879 = vld [vmem:[%s1878] sm:$0x1]
    %v1881 = vlaneseq
    %v1882 = vshrl.u32 %v1881, 7
    %v1883 = vsub.s32 0, %v1882
    %v1884 = vrot.slane %v1879, %v1883
    %v1890 = vunpack.c.l.b16 %v1874
    %v1891 = vunpack.c.l.b16 %v1875
    %v1892 = vunpack.c.l.b16 %v1876
    %v1893 = vunpack.c.l.b16 %v1877
    %v1894 = vpack.c.b16 %v1891, %v1890
    %v1895 = vpack.c.b16 %v1893, %v1892
    %1898 = vmatprep.subr.bf16.mxu0 0
    %1899 = vmatpush1.bf16.msra.mxu0 %v1894
    %1900 = vmatprep.subr.bf16.mxu0 0
    %1901 = vmatpush1.bf16.msra.mxu0 %v1895
    %1902 = vmatprep.subr.bf16.mxu0 0
    %1903 = vmatpush1.bf16.msra.mxu0 0
    %1904 = vmatprep.subr.bf16.mxu0 0
    %1905 = vmatpush1.bf16.msra.mxu0 0
    %1906 = vmatprep.subr.bf16.mxu0 0
    %1907 = vmatpush1.bf16.msra.mxu0 0
    %1908 = vmatprep.subr.bf16.mxu0 0
    %1909 = vmatpush1.bf16.msra.mxu0 0
    %1910 = vmatprep.subr.bf16.mxu0 0
    %1911 = vmatpush1.bf16.msra.mxu0 0
    %1912 = vmatprep.subr.bf16.mxu0 0
    %1913 = vmatpush1.bf16.msra.mxu0 0
    %1914 = vmatprep.subr.bf16.mxu0 0
    %1915 = vmatpush1.bf16.msra.mxu0 0
    %1916 = vmatprep.subr.bf16.mxu0 0
    %1917 = vmatpush1.bf16.msra.mxu0 0
    %1918 = vmatprep.subr.bf16.mxu0 0
    %1919 = vmatpush1.bf16.msra.mxu0 0
    %1920 = vmatprep.subr.bf16.mxu0 0
    %1921 = vmatpush1.bf16.msra.mxu0 0
    %1922 = vmatprep.subr.bf16.mxu0 0
    %1923 = vmatpush1.bf16.msra.mxu0 0
    %1924 = vmatprep.subr.bf16.mxu0 0
    %1925 = vmatpush1.bf16.msra.mxu0 0
    %1926 = vmatprep.subr.bf16.mxu0 0
    %1927 = vmatpush1.bf16.msra.mxu0 0
    %1928 = vmatprep.subr.bf16.mxu0 0
    %1929 = vmatpush1.bf16.msra.mxu0 0
    %1930 = vmatprep.mubr.bf16.mxu0 0
    %1931 = vmatmul.mubr.bf16.gmra.mrb[0].mxu0 %v1356
    %v1932 = vpop.f32.mrb[0].mxu0
    %v1933 = vadd.f32 %v1884, %v1932
    %v1934 = vpop.f32.mrb[0].mxu0
    %v1935 = vpop.f32.mrb[0].mxu0
    %v1936 = vadd.f32 %v1884, %v1935
    %v1937 = vpop.f32.mrb[0].mxu0
    %1938 = vdwg.mxu0
    %v1939 = vpack.c.bf16 %v1801, %v1801
    %v1940 = vpack.c.bf16 %v1804, %v1804
    %v1941 = vpack.c.bf16 %v1867, %v1867
    %v1942 = vpack.c.bf16 %v1870, %v1870
    %v1944 = vsel %vm341, %v1939, 0
    %v1947 = vsel %vm341, %v1941, 0
    %1949 = vmatprep.subr.bf16.mxu0 0
    %1950 = vmatpush1.bf16.xpose.msra.mxu0 %v1947
    %1951 = vmatprep.subr.bf16.mxu0 0
    %1952 = vmatpush1.bf16.xpose.msra.mxu0 0
    %1953 = vmatprep.subr.bf16.mxu0 0
    %1954 = vmatpush1.bf16.xpose.msra.mxu0 0
    %1955 = vmatprep.subr.bf16.mxu0 0
    %1956 = vmatpush1.bf16.xpose.msra.mxu0 0
    %1957 = vmatprep.subr.bf16.mxu0 0
    %1958 = vmatpush1.bf16.xpose.msra.mxu0 0
    %1959 = vmatprep.subr.bf16.mxu0 0
    %1960 = vmatpush1.bf16.xpose.msra.mxu0 0
    %1961 = vmatprep.subr.bf16.mxu0 0
    %1962 = vmatpush1.bf16.xpose.msra.mxu0 0
    %1963 = vmatprep.subr.bf16.mxu0 0
    %1964 = vmatpush1.bf16.xpose.msra.mxu0 0
    %1965 = vmatprep.subr.bf16.mxu0 0
    %1966 = vmatpush1.bf16.xpose.msra.mxu0 0
    %1967 = vmatprep.subr.bf16.mxu0 0
    %1968 = vmatpush1.bf16.xpose.msra.mxu0 0
    %1969 = vmatprep.subr.bf16.mxu0 0
    %1970 = vmatpush1.bf16.xpose.msra.mxu0 0
    %1971 = vmatprep.subr.bf16.mxu0 0
    %1972 = vmatpush1.bf16.xpose.msra.mxu0 0
    %1973 = vmatprep.subr.bf16.mxu0 0
    %1974 = vmatpush1.bf16.xpose.msra.mxu0 0
    %1975 = vmatprep.subr.bf16.mxu0 0
    %1976 = vmatpush1.bf16.xpose.msra.mxu0 0
    %1977 = vmatprep.subr.bf16.mxu0 0
    %1978 = vmatpush1.bf16.xpose.msra.mxu0 0
    %1979 = vmatprep.subr.bf16.mxu0 0
    %1980 = vmatpush1.bf16.xpose.msra.mxu0 0
    %1981 = vmatprep.mubr.bf16.mxu0 0
    %1982 = vmatmul.mubr.bf16.gmra.mrb[0].mxu0 %v1944
    %v1983 = vpop.f32.mrb[0].mxu0
    %v1984 = vadd.f32 %v334, %v1983
    %v1985 = vpop.f32.mrb[0].mxu0
    %v1986 = vpop.f32.mrb[0].mxu0
    %v1987 = vpop.f32.mrb[0].mxu0
    %1988 = vdwg.mxu0
    %v1990 = vsel %vm341, %v1940, 0
    %v1993 = vsel %vm341, %v1942, 0
    %1995 = vmatprep.subr.bf16.mxu0 0
    %1996 = vmatpush1.bf16.xpose.msra.mxu0 %v1993
    %1997 = vmatprep.subr.bf16.mxu0 0
    %1998 = vmatpush1.bf16.xpose.msra.mxu0 0
    %1999 = vmatprep.subr.bf16.mxu0 0
    %2000 = vmatpush1.bf16.xpose.msra.mxu0 0
    %2001 = vmatprep.subr.bf16.mxu0 0
    %2002 = vmatpush1.bf16.xpose.msra.mxu0 0
    %2003 = vmatprep.subr.bf16.mxu0 0
    %2004 = vmatpush1.bf16.xpose.msra.mxu0 0
    %2005 = vmatprep.subr.bf16.mxu0 0
    %2006 = vmatpush1.bf16.xpose.msra.mxu0 0
    %2007 = vmatprep.subr.bf16.mxu0 0
    %2008 = vmatpush1.bf16.xpose.msra.mxu0 0
    %2009 = vmatprep.subr.bf16.mxu0 0
    %2010 = vmatpush1.bf16.xpose.msra.mxu0 0
    %2011 = vmatprep.subr.bf16.mxu0 0
    %2012 = vmatpush1.bf16.xpose.msra.mxu0 0
    %2013 = vmatprep.subr.bf16.mxu0 0
    %2014 = vmatpush1.bf16.xpose.msra.mxu0 0
    %2015 = vmatprep.subr.bf16.mxu0 0
    %2016 = vmatpush1.bf16.xpose.msra.mxu0 0
    %2017 = vmatprep.subr.bf16.mxu0 0
    %2018 = vmatpush1.bf16.xpose.msra.mxu0 0
    %2019 = vmatprep.subr.bf16.mxu0 0
    %2020 = vmatpush1.bf16.xpose.msra.mxu0 0
    %2021 = vmatprep.subr.bf16.mxu0 0
    %2022 = vmatpush1.bf16.xpose.msra.mxu0 0
    %2023 = vmatprep.subr.bf16.mxu0 0
    %2024 = vmatpush1.bf16.xpose.msra.mxu0 0
    %2025 = vmatprep.subr.bf16.mxu0 0
    %2026 = vmatpush1.bf16.xpose.msra.mxu0 0
    %2027 = vmatprep.mubr.bf16.mxu0 0
    %2028 = vmatmul.mubr.bf16.gmra.mrb[0].mxu0 %v1990
    %v2029 = vpop.f32.mrb[0].mxu0
    %v2030 = vadd.f32 %v338, %v2029
    %v2031 = vpop.f32.mrb[0].mxu0
    %v2032 = vpop.f32.mrb[0].mxu0
    %v2033 = vpop.f32.mrb[0].mxu0
    %2034 = vdwg.mxu0
    %v2035 = vmul.f32 %v1984, 1.442695
    %v2036 = vpow.pop %v2035
    %v2037 = vmul.f32 %v2030, 1.442695
    %v2038 = vpow.pop %v2037
    %v2039 = vsel %vm438, %v2036, 0.0
    %2040 = vadd.xlane.f32.xlu0 %v2039
    %v2041 = vpop.xlane.xlu0 %2040
    %v2042 = vsel %vm438, %v2038, 0.0
    %2043 = vadd.xlane.f32.xlu0 %v2042
    %v2044 = vpop.xlane.xlu0 %2043
    %v2045 = vrcp.pop %v2041
    %v2046 = vrcp.pop %v2044
    %v2047 = vmul.f32 %v2036, %v2045
    %v2048 = vmul.f32 %v2038, %v2046
    %v2049 = vpack.c.bf16 %v2047, %v2047
    %v2050 = vpack.c.bf16 %v2048, %v2048
    %v2051 = vpack.c.bf16 %v1933, %v1933
    %v2052 = vpack.c.bf16 %v1936, %v1936
    %v2054 = vsel %vm438, %v2049, 0
    %v2057 = vsel %vm456, %v2051, 0
    %2059 = vmatprep.subr.bf16.mxu0 0
    %2060 = vmatpush1.bf16.msra.mxu0 %v2057
    %2061 = vmatprep.subr.bf16.mxu0 0
    %2062 = vmatpush1.bf16.msra.mxu0 0
    %2063 = vmatprep.subr.bf16.mxu0 0
    %2064 = vmatpush1.bf16.msra.mxu0 0
    %2065 = vmatprep.subr.bf16.mxu0 0
    %2066 = vmatpush1.bf16.msra.mxu0 0
    %2067 = vmatprep.subr.bf16.mxu0 0
    %2068 = vmatpush1.bf16.msra.mxu0 0
    %2069 = vmatprep.subr.bf16.mxu0 0
    %2070 = vmatpush1.bf16.msra.mxu0 0
    %2071 = vmatprep.subr.bf16.mxu0 0
    %2072 = vmatpush1.bf16.msra.mxu0 0
    %2073 = vmatprep.subr.bf16.mxu0 0
    %2074 = vmatpush1.bf16.msra.mxu0 0
    %2075 = vmatprep.subr.bf16.mxu0 0
    %2076 = vmatpush1.bf16.msra.mxu0 0
    %2077 = vmatprep.subr.bf16.mxu0 0
    %2078 = vmatpush1.bf16.msra.mxu0 0
    %2079 = vmatprep.subr.bf16.mxu0 0
    %2080 = vmatpush1.bf16.msra.mxu0 0
    %2081 = vmatprep.subr.bf16.mxu0 0
    %2082 = vmatpush1.bf16.msra.mxu0 0
    %2083 = vmatprep.subr.bf16.mxu0 0
    %2084 = vmatpush1.bf16.msra.mxu0 0
    %2085 = vmatprep.subr.bf16.mxu0 0
    %2086 = vmatpush1.bf16.msra.mxu0 0
    %2087 = vmatprep.subr.bf16.mxu0 0
    %2088 = vmatpush1.bf16.msra.mxu0 0
    %2089 = vmatprep.subr.bf16.mxu0 0
    %2090 = vmatpush1.bf16.msra.mxu0 0
    %2091 = vmatprep.mubr.bf16.mxu0 0
    %2092 = vmatmul.mubr.bf16.gmra.mrb[0].mxu0 %v2054
    %v2093 = vpop.f32.mrb[0].mxu0
    %v2094 = vadd.f32 0.0, %v2093
    %v2095 = vpop.f32.mrb[0].mxu0
    %v2096 = vpop.f32.mrb[0].mxu0
    %v2097 = vpop.f32.mrb[0].mxu0
    %2098 = vdwg.mxu0
    %v2100 = vsel %vm438, %v2050, 0
    %v2103 = vsel %vm456, %v2052, 0
    %2105 = vmatprep.subr.bf16.mxu0 0
    %2106 = vmatpush1.bf16.msra.mxu0 %v2103
    %2107 = vmatprep.subr.bf16.mxu0 0
    %2108 = vmatpush1.bf16.msra.mxu0 0
    %2109 = vmatprep.subr.bf16.mxu0 0
    %2110 = vmatpush1.bf16.msra.mxu0 0
    %2111 = vmatprep.subr.bf16.mxu0 0
    %2112 = vmatpush1.bf16.msra.mxu0 0
    %2113 = vmatprep.subr.bf16.mxu0 0
    %2114 = vmatpush1.bf16.msra.mxu0 0
    %2115 = vmatprep.subr.bf16.mxu0 0
    %2116 = vmatpush1.bf16.msra.mxu0 0
    %2117 = vmatprep.subr.bf16.mxu0 0
    %2118 = vmatpush1.bf16.msra.mxu0 0
    %2119 = vmatprep.subr.bf16.mxu0 0
    %2120 = vmatpush1.bf16.msra.mxu0 0
    %2121 = vmatprep.subr.bf16.mxu0 0
    %2122 = vmatpush1.bf16.msra.mxu0 0
    %2123 = vmatprep.subr.bf16.mxu0 0
    %2124 = vmatpush1.bf16.msra.mxu0 0
    %2125 = vmatprep.subr.bf16.mxu0 0
    %2126 = vmatpush1.bf16.msra.mxu0 0
    %2127 = vmatprep.subr.bf16.mxu0 0
    %2128 = vmatpush1.bf16.msra.mxu0 0
    %2129 = vmatprep.subr.bf16.mxu0 0
    %2130 = vmatpush1.bf16.msra.mxu0 0
    %2131 = vmatprep.subr.bf16.mxu0 0
    %2132 = vmatpush1.bf16.msra.mxu0 0
    %2133 = vmatprep.subr.bf16.mxu0 0
    %2134 = vmatpush1.bf16.msra.mxu0 0
    %2135 = vmatprep.subr.bf16.mxu0 0
    %2136 = vmatpush1.bf16.msra.mxu0 0
    %2137 = vmatprep.mubr.bf16.mxu0 0
    %2138 = vmatmul.mubr.bf16.gmra.mrb[0].mxu0 %v2100
    %v2139 = vpop.f32.mrb[0].mxu0
    %v2140 = vadd.f32 0.0, %v2139
    %v2141 = vpop.f32.mrb[0].mxu0
    %v2142 = vpop.f32.mrb[0].mxu0
    %v2143 = vpop.f32.mrb[0].mxu0
    %2144 = vdwg.mxu0
    %s2145 = scalar_lea.vmem %s10, 24
    %v2146 = vld [vmem:[%s2145] sm:$0xf]
    %v2147 = vld [vmem:[%s2145 + $0x4] sm:$0xf]
    %v2148 = vpack.c.bf16 %v2140, %v2094
    %v2151 = vunpack.c.l.b16 %v2146
    %v2152 = vunpack.c.l.b16 %v2147
    %v2153 = vpack.c.b16 %v2152, %v2151
    %v2156 = vsel %vm341, %v2148, 0
    %2158 = vmatprep.subr.bf16.mxu0 0
    %2159 = vmatpush1.bf16.msra.mxu0 %v2153
    %2160 = vmatprep.subr.bf16.mxu0 0
    %2161 = vmatpush1.bf16.msra.mxu0 0
    %2162 = vmatprep.subr.bf16.mxu0 0
    %2163 = vmatpush1.bf16.msra.mxu0 0
    %2164 = vmatprep.subr.bf16.mxu0 0
    %2165 = vmatpush1.bf16.msra.mxu0 0
    %2166 = vmatprep.subr.bf16.mxu0 0
    %2167 = vmatpush1.bf16.msra.mxu0 0
    %2168 = vmatprep.subr.bf16.mxu0 0
    %2169 = vmatpush1.bf16.msra.mxu0 0
    %2170 = vmatprep.subr.bf16.mxu0 0
    %2171 = vmatpush1.bf16.msra.mxu0 0
    %2172 = vmatprep.subr.bf16.mxu0 0
    %2173 = vmatpush1.bf16.msra.mxu0 0
    %2174 = vmatprep.subr.bf16.mxu0 0
    %2175 = vmatpush1.bf16.msra.mxu0 0
    %2176 = vmatprep.subr.bf16.mxu0 0
    %2177 = vmatpush1.bf16.msra.mxu0 0
    %2178 = vmatprep.subr.bf16.mxu0 0
    %2179 = vmatpush1.bf16.msra.mxu0 0
    %2180 = vmatprep.subr.bf16.mxu0 0
    %2181 = vmatpush1.bf16.msra.mxu0 0
    %2182 = vmatprep.subr.bf16.mxu0 0
    %2183 = vmatpush1.bf16.msra.mxu0 0
    %2184 = vmatprep.subr.bf16.mxu0 0
    %2185 = vmatpush1.bf16.msra.mxu0 0
    %2186 = vmatprep.subr.bf16.mxu0 0
    %2187 = vmatpush1.bf16.msra.mxu0 0
    %2188 = vmatprep.subr.bf16.mxu0 0
    %2189 = vmatpush1.bf16.msra.mxu0 0
    %2190 = vmatprep.mubr.bf16.mxu0 0
    %2191 = vmatmul.mubr.bf16.gmra.mrb[0].mxu0 %v2156
    %v2192 = vpop.f32.mrb[0].mxu0
    %v2193 = vadd.f32 0.0, %v2192
    %v2194 = vpop.f32.mrb[0].mxu0
    %v2195 = vpop.f32.mrb[0].mxu0
    %v2196 = vadd.f32 0.0, %v2195
    %v2197 = vpop.f32.mrb[0].mxu0
    %2198 = vdwg.mxu0
    %v2201 = vunpack.c.l.b16 %v1738
    %v2202 = vunpack.c.l.b16 %v1739
    %v2203 = vpack.c.b16 %v2202, %v2201
    %v2206 = vsel %vm341, %v1740, 0
    %2208 = vmatprep.subr.bf16.mxu0 0
    %2209 = vmatpush1.bf16.msra.mxu0 %v2203
    %2210 = vmatprep.subr.bf16.mxu0 0
    %2211 = vmatpush1.bf16.msra.mxu0 0
    %2212 = vmatprep.subr.bf16.mxu0 0
    %2213 = vmatpush1.bf16.msra.mxu0 0
    %2214 = vmatprep.subr.bf16.mxu0 0
    %2215 = vmatpush1.bf16.msra.mxu0 0
    %2216 = vmatprep.subr.bf16.mxu0 0
    %2217 = vmatpush1.bf16.msra.mxu0 0
    %2218 = vmatprep.subr.bf16.mxu0 0
    %2219 = vmatpush1.bf16.msra.mxu0 0
    %2220 = vmatprep.subr.bf16.mxu0 0
    %2221 = vmatpush1.bf16.msra.mxu0 0
    %2222 = vmatprep.subr.bf16.mxu0 0
    %2223 = vmatpush1.bf16.msra.mxu0 0
    %2224 = vmatprep.subr.bf16.mxu0 0
    %2225 = vmatpush1.bf16.msra.mxu0 0
    %2226 = vmatprep.subr.bf16.mxu0 0
    %2227 = vmatpush1.bf16.msra.mxu0 0
    %2228 = vmatprep.subr.bf16.mxu0 0
    %2229 = vmatpush1.bf16.msra.mxu0 0
    %2230 = vmatprep.subr.bf16.mxu0 0
    %2231 = vmatpush1.bf16.msra.mxu0 0
    %2232 = vmatprep.subr.bf16.mxu0 0
    %2233 = vmatpush1.bf16.msra.mxu0 0
    %2234 = vmatprep.subr.bf16.mxu0 0
    %2235 = vmatpush1.bf16.msra.mxu0 0
    %2236 = vmatprep.subr.bf16.mxu0 0
    %2237 = vmatpush1.bf16.msra.mxu0 0
    %2238 = vmatprep.subr.bf16.mxu0 0
    %2239 = vmatpush1.bf16.msra.mxu0 0
    %2240 = vmatprep.mubr.bf16.mxu0 0
    %2241 = vmatmul.mubr.bf16.gmra.mrb[0].mxu0 %v2206
    %v2242 = vpop.f32.mrb[0].mxu0
    %v2243 = vadd.f32 %v2193, %v2242
    %v2244 = vpop.f32.mrb[0].mxu0
    %v2245 = vpop.f32.mrb[0].mxu0
    %v2246 = vadd.f32 %v2196, %v2245
    %v2247 = vpop.f32.mrb[0].mxu0
    %2248 = vdwg.mxu0
    %s2249 = scalar_lea.vmem %s11, 1
    %v2250 = vld [vmem:[%s2249] sm:$0x1]
    %v2252 = vlaneseq
    %v2253 = vshrl.u32 %v2252, 7
    %v2254 = vsub.s32 0, %v2253
    %v2255 = vrot.slane %v2250, %v2254
    %v2257 = vadd.f32 %v2243, %v2255
    %v2258 = vadd.f32 %v2246, %v2255
    %v2259 = vadd.f32 %v2257, %v1327
    %v2260 = vadd.f32 %v2258, %v1328
    %s2261 = scalar_lea.vmem %s12, 1
    %v2262 = vld [vmem:[%s2261] sm:$0x1]
    %s2263 = scalar_lea.vmem %s13, 1
    %v2264 = vld [vmem:[%s2263] sm:$0x1]
    %v2265 = vsel %vm83, %v2259, 0.0
    %2266 = vadd.xlane.f32.xlu0 %v2265
    %v2267 = vpop.xlane.xlu0 %2266
    %v2268 = vsel %vm83, %v2260, 0.0
    %2269 = vadd.xlane.f32.xlu0 %v2268
    %v2270 = vpop.xlane.xlu0 %2269
    %v2271 = vmul.f32 %v2267, %v90
    %v2272 = vmul.f32 %v2270, %v90
    %v2273 = vsub.f32 %v2259, %v2271
    %v2274 = vsub.f32 %v2260, %v2272
    %v2275 = vmul.f32 %v2273, %v2273
    %v2276 = vmul.f32 %v2274, %v2274
    %v2277 = vsel %vm83, %v2275, 0.0
    %2278 = vadd.xlane.f32.xlu0 %v2277
    %v2279 = vpop.xlane.xlu0 %2278
    %v2280 = vsel %vm83, %v2276, 0.0
    %2281 = vadd.xlane.f32.xlu0 %v2280
    %v2282 = vpop.xlane.xlu0 %2281
    %v2283 = vmul.f32 %v2279, %v90
    %v2284 = vmul.f32 %v2282, %v90
    %v2285 = vadd.f32 %v2283, 1e-12
    %v2286 = vadd.f32 %v2284, 1e-12
    %v2287 = vrsqrt.pop %v2285
    %v2288 = vrsqrt.pop %v2286
    %v2289 = vmul.f32 %v2273, %v2287
    %v2290 = vmul.f32 %v2274, %v2288
    %v2292 = vlaneseq
    %v2293 = vshrl.u32 %v2292, 7
    %v2294 = vsub.s32 0, %v2293
    %v2295 = vrot.slane %v2262, %v2294
    %v2297 = vmul.f32 %v2289, %v2295
    %v2298 = vmul.f32 %v2290, %v2295
    %v2300 = vlaneseq
    %v2301 = vshrl.u32 %v2300, 7
    %v2302 = vsub.s32 0, %v2301
    %v2303 = vrot.slane %v2264, %v2302
    %v2305 = vadd.f32 %v2297, %v2303
    %v2306 = vadd.f32 %v2298, %v2303
    %s2307 = scalar_lea.vmem %s14, 16
    %v2308 = vld [vmem:[%s2307] sm:$0xf]
    %v2309 = vld [vmem:[%s2307 + $0x4] sm:$0xf]
    %v2310 = vld [vmem:[%s2307 + $0x8] sm:$0xf]
    %v2311 = vld [vmem:[%s2307 + $0xc] sm:$0xf]
    %v2312 = vpack.c.bf16 %v2306, %v2305
    %s2313 = scalar_lea.vmem %s15, 1
    %v2314 = vld [vmem:[%s2313] sm:$0x1]
    %v2316 = vlaneseq
    %v2317 = vshrl.u32 %v2316, 7
    %v2318 = vsub.s32 0, %v2317
    %v2319 = vrot.slane %v2314, %v2318
    %v2325 = vunpack.c.l.b16 %v2308
    %v2326 = vunpack.c.l.b16 %v2309
    %v2327 = vunpack.c.l.b16 %v2310
    %v2328 = vunpack.c.l.b16 %v2311
    %v2329 = vpack.c.b16 %v2326, %v2325
    %v2330 = vpack.c.b16 %v2328, %v2327
    %v2334 = vsel %vm83, %v2312, 0
    %2336 = vmatprep.subr.bf16.mxu0 0
    %2337 = vmatpush1.bf16.msra.mxu0 %v2329
    %2338 = vmatprep.subr.bf16.mxu0 0
    %2339 = vmatpush1.bf16.msra.mxu0 %v2330
    %2340 = vmatprep.subr.bf16.mxu0 0
    %2341 = vmatpush1.bf16.msra.mxu0 0
    %2342 = vmatprep.subr.bf16.mxu0 0
    %2343 = vmatpush1.bf16.msra.mxu0 0
    %2344 = vmatprep.subr.bf16.mxu0 0
    %2345 = vmatpush1.bf16.msra.mxu0 0
    %2346 = vmatprep.subr.bf16.mxu0 0
    %2347 = vmatpush1.bf16.msra.mxu0 0
    %2348 = vmatprep.subr.bf16.mxu0 0
    %2349 = vmatpush1.bf16.msra.mxu0 0
    %2350 = vmatprep.subr.bf16.mxu0 0
    %2351 = vmatpush1.bf16.msra.mxu0 0
    %2352 = vmatprep.subr.bf16.mxu0 0
    %2353 = vmatpush1.bf16.msra.mxu0 0
    %2354 = vmatprep.subr.bf16.mxu0 0
    %2355 = vmatpush1.bf16.msra.mxu0 0
    %2356 = vmatprep.subr.bf16.mxu0 0
    %2357 = vmatpush1.bf16.msra.mxu0 0
    %2358 = vmatprep.subr.bf16.mxu0 0
    %2359 = vmatpush1.bf16.msra.mxu0 0
    %2360 = vmatprep.subr.bf16.mxu0 0
    %2361 = vmatpush1.bf16.msra.mxu0 0
    %2362 = vmatprep.subr.bf16.mxu0 0
    %2363 = vmatpush1.bf16.msra.mxu0 0
    %2364 = vmatprep.subr.bf16.mxu0 0
    %2365 = vmatpush1.bf16.msra.mxu0 0
    %2366 = vmatprep.subr.bf16.mxu0 0
    %2367 = vmatpush1.bf16.msra.mxu0 0
    %2368 = vmatprep.mubr.bf16.mxu0 0
    %2369 = vmatmul.mubr.bf16.gmra.mrb[0].mxu0 %v2334
    %v2370 = vpop.f32.mrb[0].mxu0
    %v2371 = vadd.f32 %v2319, %v2370
    %v2372 = vpop.f32.mrb[0].mxu0
    %v2373 = vpop.f32.mrb[0].mxu0
    %v2374 = vadd.f32 %v2319, %v2373
    %v2375 = vpop.f32.mrb[0].mxu0
    %2376 = vdwg.mxu0
    %v2377 = vmul.f32 %v2371, 0.5
    %v2378 = vmul.f32 %v2374, 0.5
    %v2379 = vmul.f32 %v2371, 0.044715
    %v2380 = vmul.f32 %v2374, 0.044715
    %v2381 = vmul.f32 %v2379, %v2371
    %v2382 = vmul.f32 %v2380, %v2374
    %v2383 = vmul.f32 %v2381, %v2371
    %v2384 = vmul.f32 %v2382, %v2374
    %v2385 = vadd.f32 %v2371, %v2383
    %v2386 = vadd.f32 %v2374, %v2384
    %v2387 = vmul.f32 %v2385, 0.7978845
    %v2388 = vmul.f32 %v2386, 0.7978845
    %v2389 = vtanh.pop %v2387
    %v2390 = vtanh.pop %v2388
    %v2391 = vadd.f32 %v2389, 1.0
    %v2392 = vadd.f32 %v2390, 1.0
    %v2393 = vmul.f32 %v2377, %v2391
    %v2394 = vmul.f32 %v2378, %v2392
    %s2395 = scalar_lea.vmem %s16, 32
    %v2396 = vld [vmem:[%s2395] sm:$0xf]
    %v2397 = vld [vmem:[%s2395 + $0x4] sm:$0xf]
    %v2398 = vld [vmem:[%s2395 + $0x8] sm:$0xf]
    %v2399 = vld [vmem:[%s2395 + $0xc] sm:$0xf]
    %v2400 = vld [vmem:[%s2395 + $0x10] sm:$0xf]
    %v2401 = vld [vmem:[%s2395 + $0x14] sm:$0xf]
    %v2402 = vld [vmem:[%s2395 + $0x18] sm:$0xf]
    %v2403 = vld [vmem:[%s2395 + $0x1c] sm:$0xf]
    %v2404 = vpack.c.bf16 %v2394, %v2393
    %s2405 = scalar_lea.vmem %s17, 1
    %v2406 = vld [vmem:[%s2405] sm:$0x1]
    %v2408 = vlaneseq
    %v2409 = vshrl.u32 %v2408, 7
    %v2410 = vsub.s32 0, %v2409
    %v2411 = vrot.slane %v2406, %v2410
    %v2421 = vunpack.c.l.b16 %v2396
    %v2422 = vunpack.c.l.b16 %v2397
    %v2423 = vunpack.c.l.b16 %v2398
    %v2424 = vunpack.c.l.b16 %v2399
    %v2425 = vunpack.c.l.b16 %v2400
    %v2426 = vunpack.c.l.b16 %v2401
    %v2427 = vunpack.c.l.b16 %v2402
    %v2428 = vunpack.c.l.b16 %v2403
    %v2429 = vpack.c.b16 %v2422, %v2421
    %v2430 = vpack.c.b16 %v2424, %v2423
    %v2431 = vpack.c.b16 %v2426, %v2425
    %v2432 = vpack.c.b16 %v2428, %v2427
    %v2438 = vsel %vm1238, %v2404, 0
    %2440 = vmatprep.subr.bf16.mxu0 0
    %2441 = vmatpush1.bf16.msra.mxu0 %v2429
    %2442 = vmatprep.subr.bf16.mxu0 0
    %2443 = vmatpush1.bf16.msra.mxu0 %v2430
    %2444 = vmatprep.subr.bf16.mxu0 0
    %2445 = vmatpush1.bf16.msra.mxu0 %v2431
    %2446 = vmatprep.subr.bf16.mxu0 0
    %2447 = vmatpush1.bf16.msra.mxu0 %v2432
    %2448 = vmatprep.subr.bf16.mxu0 0
    %2449 = vmatpush1.bf16.msra.mxu0 0
    %2450 = vmatprep.subr.bf16.mxu0 0
    %2451 = vmatpush1.bf16.msra.mxu0 0
    %2452 = vmatprep.subr.bf16.mxu0 0
    %2453 = vmatpush1.bf16.msra.mxu0 0
    %2454 = vmatprep.subr.bf16.mxu0 0
    %2455 = vmatpush1.bf16.msra.mxu0 0
    %2456 = vmatprep.subr.bf16.mxu0 0
    %2457 = vmatpush1.bf16.msra.mxu0 0
    %2458 = vmatprep.subr.bf16.mxu0 0
    %2459 = vmatpush1.bf16.msra.mxu0 0
    %2460 = vmatprep.subr.bf16.mxu0 0
    %2461 = vmatpush1.bf16.msra.mxu0 0
    %2462 = vmatprep.subr.bf16.mxu0 0
    %2463 = vmatpush1.bf16.msra.mxu0 0
    %2464 = vmatprep.subr.bf16.mxu0 0
    %2465 = vmatpush1.bf16.msra.mxu0 0
    %2466 = vmatprep.subr.bf16.mxu0 0
    %2467 = vmatpush1.bf16.msra.mxu0 0
    %2468 = vmatprep.subr.bf16.mxu0 0
    %2469 = vmatpush1.bf16.msra.mxu0 0
    %2470 = vmatprep.subr.bf16.mxu0 0
    %2471 = vmatpush1.bf16.msra.mxu0 0
    %2472 = vmatprep.mubr.bf16.mxu0 0
    %2473 = vmatmul.mubr.bf16.gmra.mrb[0].mxu0 %v2438
    %v2474 = vpop.f32.mrb[0].mxu0
    %v2475 = vadd.f32 %v2411, %v2474
    %v2476 = vpop.f32.mrb[0].mxu0
    %v2477 = vpop.f32.mrb[0].mxu0
    %v2478 = vadd.f32 %v2411, %v2477
    %v2479 = vpop.f32.mrb[0].mxu0
    %2480 = vdwg.mxu0
    %v2481 = vadd.f32 %v2475, %v2305
    %v2482 = vadd.f32 %v2478, %v2306
    %s2483 = scalar_lea.vmem %s18, 1
    %v2484 = vld [vmem:[%s2483] sm:$0x1]
    %s2485 = scalar_lea.vmem %s19, 1
    %v2486 = vld [vmem:[%s2485] sm:$0x1]
    %v2487 = vsel %vm83, %v2481, 0.0
    %2488 = vadd.xlane.f32.xlu0 %v2487
    %v2489 = vpop.xlane.xlu0 %2488
    %v2490 = vsel %vm83, %v2482, 0.0
    %2491 = vadd.xlane.f32.xlu0 %v2490
    %v2492 = vpop.xlane.xlu0 %2491
    %v2493 = vmul.f32 %v2489, %v90
    %v2494 = vmul.f32 %v2492, %v90
    %v2495 = vsub.f32 %v2481, %v2493
    %v2496 = vsub.f32 %v2482, %v2494
    %v2497 = vmul.f32 %v2495, %v2495
    %v2498 = vmul.f32 %v2496, %v2496
    %v2499 = vsel %vm83, %v2497, 0.0
    %2500 = vadd.xlane.f32.xlu0 %v2499
    %v2501 = vpop.xlane.xlu0 %2500
    %v2502 = vsel %vm83, %v2498, 0.0
    %2503 = vadd.xlane.f32.xlu0 %v2502
    %v2504 = vpop.xlane.xlu0 %2503
    %v2505 = vmul.f32 %v2501, %v90
    %v2506 = vmul.f32 %v2504, %v90
    %v2507 = vadd.f32 %v2505, 1e-12
    %v2508 = vadd.f32 %v2506, 1e-12
    %v2509 = vrsqrt.pop %v2507
    %v2510 = vrsqrt.pop %v2508
    %v2511 = vmul.f32 %v2495, %v2509
    %v2512 = vmul.f32 %v2496, %v2510
    %v2514 = vlaneseq
    %v2515 = vshrl.u32 %v2514, 7
    %v2516 = vsub.s32 0, %v2515
    %v2517 = vrot.slane %v2484, %v2516
    %v2519 = vmul.f32 %v2511, %v2517
    %v2520 = vmul.f32 %v2512, %v2517
    %v2522 = vlaneseq
    %v2523 = vshrl.u32 %v2522, 7
    %v2524 = vsub.s32 0, %v2523
    %v2525 = vrot.slane %v2486, %v2524
    %v2527 = vadd.f32 %v2519, %v2525
    %v2528 = vadd.f32 %v2520, %v2525
    %v2530 = vrot.slane %v2528, 7
    %vm2532 = vcmask 1040384
    %v2533 = vsel %vm2532, %v2527, %v2530
    %v2534 = vld [vmem:[%s20] sm:$0xf]
    %v2535 = vld [vmem:[%s20 + $0x4] sm:$0xf]
    %v2536 = vld [vmem:[%s20 + $0x8] sm:$0xf]
    %v2537 = vld [vmem:[%s20 + $0xc] sm:$0xf]
    %v2538 = vpack.c.bf16 %v2533, %v2533
    %v2539 = vld [vmem:[%s21] sm:$0x1]
    %v2541 = vlaneseq
    %v2542 = vshrl.u32 %v2541, 7
    %v2543 = vsub.s32 0, %v2542
    %v2544 = vrot.slane %v2539, %v2543
    %v2550 = vunpack.c.l.b16 %v2534
    %v2551 = vunpack.c.l.b16 %v2535
    %v2552 = vunpack.c.l.b16 %v2536
    %v2553 = vunpack.c.l.b16 %v2537
    %v2554 = vpack.c.b16 %v2551, %v2550
    %v2555 = vpack.c.b16 %v2553, %v2552
    %v2559 = vsel %vm83, %v2538, 0
    %2561 = vmatprep.subr.bf16.mxu0 0
    %2562 = vmatpush1.bf16.msra.mxu0 %v2554
    %2563 = vmatprep.subr.bf16.mxu0 0
    %2564 = vmatpush1.bf16.msra.mxu0 %v2555
    %2565 = vmatprep.subr.bf16.mxu0 0
    %2566 = vmatpush1.bf16.msra.mxu0 0
    %2567 = vmatprep.subr.bf16.mxu0 0
    %2568 = vmatpush1.bf16.msra.mxu0 0
    %2569 = vmatprep.subr.bf16.mxu0 0
    %2570 = vmatpush1.bf16.msra.mxu0 0
    %2571 = vmatprep.subr.bf16.mxu0 0
    %2572 = vmatpush1.bf16.msra.mxu0 0
    %2573 = vmatprep.subr.bf16.mxu0 0
    %2574 = vmatpush1.bf16.msra.mxu0 0
    %2575 = vmatprep.subr.bf16.mxu0 0
    %2576 = vmatpush1.bf16.msra.mxu0 0
    %2577 = vmatprep.subr.bf16.mxu0 0
    %2578 = vmatpush1.bf16.msra.mxu0 0
    %2579 = vmatprep.subr.bf16.mxu0 0
    %2580 = vmatpush1.bf16.msra.mxu0 0
    %2581 = vmatprep.subr.bf16.mxu0 0
    %2582 = vmatpush1.bf16.msra.mxu0 0
    %2583 = vmatprep.subr.bf16.mxu0 0
    %2584 = vmatpush1.bf16.msra.mxu0 0
    %2585 = vmatprep.subr.bf16.mxu0 0
    %2586 = vmatpush1.bf16.msra.mxu0 0
    %2587 = vmatprep.subr.bf16.mxu0 0
    %2588 = vmatpush1.bf16.msra.mxu0 0
    %2589 = vmatprep.subr.bf16.mxu0 0
    %2590 = vmatpush1.bf16.msra.mxu0 0
    %2591 = vmatprep.subr.bf16.mxu0 0
    %2592 = vmatpush1.bf16.msra.mxu0 0
    %2593 = vmatprep.mubr.bf16.mxu0 0
    %2594 = vmatmul.mubr.bf16.gmra.mrb[0].mxu0 %v2559
    %v2595 = vpop.f32.mrb[0].mxu0
    %v2596 = vadd.f32 %v2544, %v2595
    %v2597 = vpop.f32.mrb[0].mxu0
    %v2598 = vpop.f32.mrb[0].mxu0
    %v2599 = vpop.f32.mrb[0].mxu0
    %2600 = vdwg.mxu0
    %v2601 = vtanh.pop %v2596
    %v2602 = vld [vmem:[%s22] sm:$0xf]
    %v2603 = vld [vmem:[%s22 + $0x4] sm:$0xf]
    %v2604 = vld [vmem:[%s22 + $0x8] sm:$0xf]
    %v2605 = vld [vmem:[%s22 + $0xc] sm:$0xf]
    %v2606 = vpack.c.bf16 %v2601, %v2601
    %v2607 = vld [vmem:[%s23] sm:$0x1]
    %v2609 = vlaneseq
    %v2610 = vshrl.u32 %v2609, 7
    %v2611 = vsub.s32 0, %v2610
    %v2612 = vrot.slane %v2607, %v2611
    %v2618 = vunpack.c.l.b16 %v2602
    %v2619 = vunpack.c.l.b16 %v2603
    %v2620 = vunpack.c.l.b16 %v2604
    %v2621 = vunpack.c.l.b16 %v2605
    %v2622 = vpack.c.b16 %v2619, %v2618
    %v2623 = vpack.c.b16 %v2621, %v2620
    %v2627 = vsel %vm83, %v2606, 0
    %2629 = vmatprep.subr.bf16.mxu0 0
    %2630 = vmatpush1.bf16.msra.mxu0 %v2622
    %2631 = vmatprep.subr.bf16.mxu0 0
    %2632 = vmatpush1.bf16.msra.mxu0 %v2623
    %2633 = vmatprep.subr.bf16.mxu0 0
    %2634 = vmatpush1.bf16.msra.mxu0 0
    %2635 = vmatprep.subr.bf16.mxu0 0
    %2636 = vmatpush1.bf16.msra.mxu0 0
    %2637 = vmatprep.subr.bf16.mxu0 0
    %2638 = vmatpush1.bf16.msra.mxu0 0
    %2639 = vmatprep.subr.bf16.mxu0 0
    %2640 = vmatpush1.bf16.msra.mxu0 0
    %2641 = vmatprep.subr.bf16.mxu0 0
    %2642 = vmatpush1.bf16.msra.mxu0 0
    %2643 = vmatprep.subr.bf16.mxu0 0
    %2644 = vmatpush1.bf16.msra.mxu0 0
    %2645 = vmatprep.subr.bf16.mxu0 0
    %2646 = vmatpush1.bf16.msra.mxu0 0
    %2647 = vmatprep.subr.bf16.mxu0 0
    %2648 = vmatpush1.bf16.msra.mxu0 0
    %2649 = vmatprep.subr.bf16.mxu0 0
    %2650 = vmatpush1.bf16.msra.mxu0 0
    %2651 = vmatprep.subr.bf16.mxu0 0
    %2652 = vmatpush1.bf16.msra.mxu0 0
    %2653 = vmatprep.subr.bf16.mxu0 0
    %2654 = vmatpush1.bf16.msra.mxu0 0
    %2655 = vmatprep.subr.bf16.mxu0 0
    %2656 = vmatpush1.bf16.msra.mxu0 0
    %2657 = vmatprep.subr.bf16.mxu0 0
    %2658 = vmatpush1.bf16.msra.mxu0 0
    %2659 = vmatprep.subr.bf16.mxu0 0
    %2660 = vmatpush1.bf16.msra.mxu0 0
    %2661 = vmatprep.mubr.bf16.mxu0 0
    %2662 = vmatmul.mubr.bf16.gmra.mrb[0].mxu0 %v2627
    %v2663 = vpop.f32.mrb[0].mxu0
    %v2664 = vadd.f32 %v2612, %v2663
    %v2665 = vpop.f32.mrb[0].mxu0
    %v2666 = vpop.f32.mrb[0].mxu0
    %v2667 = vpop.f32.mrb[0].mxu0
    %2668 = vdwg.mxu0
    %2669 = vst [vmem:[#allocation2] sm:$0x3] %v2664
    // Predicated region
    $region98: #{bert_classifier_forward.1} parent=1 // pred_check
      _
    $region99: #{bert_classifier_forward.1} parent=1 // pred_check_branch
      %2671 = sbr.rel (0) target = $region101
    $region100: #{bert_classifier_forward.1} parent=1 // pred_region
      %s2673 = ssub.s32 32, 32
      %2674 = vsyncadd [#allocation3], %s2673
      %s2676 = sshll.u32 [#allocation2], 4
      %s2677 = int_to_ptr.vmem [resolvable:$true] %s2676
      %2679 = dma.vmem_to_hbm [thread:$0]  %s2677, 32, %s24, [#allocation3]
    $region101: #{bert_classifier_forward.1} parent=1 // pred_fallthru
      _
    // Predicated region
    $region102: #{bert_classifier_forward.1} parent=1 // pred_check
      _
    $region103: #{bert_classifier_forward.1} parent=1 // pred_check_branch
      %2681 = sbr.rel (0) target = $region105
    $region104: #{bert_classifier_forward.1} parent=1 // pred_region
      %2682 = dma.done [#allocation3], 32
    $region105: #{bert_classifier_forward.1} parent=1 // pred_fallthru
      _
    %2683 = vsyncpa [#allocation3], 1

</llo_original>
